<compile_context>
chip_gen: v6e
topology: v6e:2x2x1
jax: 0.10.0
libtpu: 0.0.40
codegen_flags: <defaults>
</compile_context>

<pallas_src>
import jax
import jax.numpy as jnp
from jax.experimental import pallas as pl
from jax.experimental.pallas import tpu as pltpu

# ----------------------------- model constants ------------------------------
D = 32                    # self.d
N_BARS = 2                # self.n_bars
GNN_N_LAYERS = 2          # self.gnn_n_layers
N_EDGE_TYPES = 3          # constants.N_EDGE_TYPES (num_relations)
NUM_DISTS = 32            # GCN default num_dists (edge-attr feature dim)
MAX_SIMU_TOKENS = 5       # constants.MAX_SIMU_TOKENS
N_PITCH_TOKENS = 16       # constants.N_PITCH_TOKENS
N_DUR_TOKENS = 8          # constants.N_DUR_TOKENS
D_TOKEN_PAIR = N_PITCH_TOKENS + N_DUR_TOKENS
N_TRACKS = 4              # constants.N_TRACKS
BN_EPS = 1e-5

CNN_C1, CNN_H, CNN_W_IN, CNN_UP = 16, 4, 8, 4   # unflatten (16,4,8), Upsample (1,4)
CNN_W = CNN_W_IN * CNN_UP                       # 32
CNN_C2 = 8                                      # conv1 out channels
HW = CNN_H * CNN_W                              # 128 (lane-dense conv output width)
LIN2_OUT = CNN_C1 * CNN_H * CNN_W_IN            # 512
CONV1_OUT = CNN_C2 * HW                         # 1024
T1 = MAX_SIMU_TOKENS - 1                        # 4
HEAD_PAD = 128                                  # lane-dense content output width
W_WIDE = CONV1_OUT                              # wide f32 bias slab width (1024)

# --- packed bf16 (·,32) weight slab: 32x32 blocks, indexed by block number ---
_W_WZ_S = 0
_W_WZ_C = 1
_W_WB_S = 2
_W_WB_C = _W_WB_S + N_BARS
_W_LIN1 = _W_WB_C + N_BARS
_W_EDGE = _W_LIN1 + 1
_W_ROOT = _W_EDGE + 1
_W_WREL = _W_ROOT + GNN_N_LAYERS

# --- packed f32 (·,32) bias/scale slab: row indices ---
_B_BZ_S, _B_SC_S, _B_SH_S = 0, 1, 2
_B_BZ_C, _B_SC_C, _B_SH_C = 3, 4, 5
_B_BB_S = 6
_B_BB_C = _B_BB_S + N_BARS
_B_LIN1 = _B_BB_C + N_BARS
_B_EDGE = _B_LIN1 + 1
_B_GBIAS = _B_EDGE + 1

# --- wide f32 bias slab rows (width W_WIDE) ---
_BW_LIN2, _BW_A1, _BW_A2, _BW_CHORD, _BW_HD, _BW_HN = 0, 1, 2, 3, 4, 5


# ------------------------------ fused Pallas kernel --------------------------
def _decoder_kernel(z_ref, w32_ref, b32_ref, lin2w_ref, a1_ref, a2_ref,
                    chordw_ref, heads_ref, bwide_ref,
                    gather_ref, eattr_ref, ssrc_ref, adjcat_ref, drum_ref,
                    s_out_ref, c_out_ref,
                    xs_ref, xc_ref, stk_ref):
    f32, bf16 = jnp.float32, jnp.bfloat16
    B = z_ref.shape[0]
    E = eattr_ref.shape[0]

    def wblk(i):                       # bf16 (D, D) weight block i of the packed slab
        return w32_ref[i * D:(i + 1) * D, :]

    b32 = b32_ref[...]                 # (14, D)      f32 small bias/scale slab
    bw = bwide_ref[...]                # (6, W_WIDE)  f32 wide bias slab

    def brow(i):
        return b32[i:i + 1, :]

    # ----- shared stem: lin_decoder + folded BatchNorm1d + ReLU (dropout = id) -----
    z_bf = z_ref[...].astype(bf16)
    z_s = jnp.maximum(
        (jnp.dot(z_bf, wblk(_W_WZ_S), preferred_element_type=f32) + brow(_B_BZ_S))
        * brow(_B_SC_S) + brow(_B_SH_S), 0.0)                              # (B, D)
    z_c = jnp.maximum(
        (jnp.dot(z_bf, wblk(_W_WZ_C), preferred_element_type=f32) + brow(_B_BZ_C))
        * brow(_B_SC_C) + brow(_B_SH_C), 0.0)                              # (B, D)

    # --------------------- structure decoder (bars batched) ------------------------
    z_s_bf = z_s.astype(bf16)
    for j in range(N_BARS):            # bar-major rows: row j*B + b
        xs_ref[j * B:(j + 1) * B, :] = (
            jnp.dot(z_s_bf, wblk(_W_WB_S + j), preferred_element_type=f32)
            + brow(_B_BB_S + j))
    h = xs_ref[...]                                                        # (N_BARS*B, D)
    # CNNDecoder.lin : Linear -> ReLU -> Linear -> ReLU (dropouts identity).
    h = jnp.maximum(jnp.dot(h.astype(bf16), wblk(_W_LIN1),
                            preferred_element_type=f32) + brow(_B_LIN1), 0.0)
    h = jnp.maximum(jnp.dot(h.astype(bf16), lin2w_ref[...],
                            preferred_element_type=f32)
                    + bw[_BW_LIN2:_BW_LIN2 + 1, :LIN2_OUT], 0.0)           # (·, 512)
    # Upsample(1,4) + Conv2d(16->8,3,p=1) + ReLU as ONE lane-dense matmul.
    h = jnp.maximum(jnp.dot(h.astype(bf16), a1_ref[...],
                            preferred_element_type=f32)
                    + bw[_BW_A1:_BW_A1 + 1, :], 0.0)                       # (·, 1024)
    # Conv2d(8->1,3,p=1) as ONE lane-dense matmul (output lanes = H*W = 128).
    s_out_ref[...] = (jnp.dot(h.astype(bf16), a2_ref[...],
                              preferred_element_type=f32)
                      + bw[_BW_A2:_BW_A2 + 1, :HW])                        # (N_BARS*B, 128)

    # ------------------------------ content decoder --------------------------------
    # bars_decoder at B rows (before the node gather), bar-major rows: row j*B + b.
    z_c_bf = z_c.astype(bf16)
    for j in range(N_BARS):
        xc_ref[j * B:(j + 1) * B, :] = (
            jnp.dot(z_c_bf, wblk(_W_WB_C + j), preferred_element_type=f32)
            + brow(_B_BB_C + j))
    # repeat_interleave(out, counts) == per-node one-hot gather of its (bar,batch) row.
    x = jnp.dot(gather_ref[...], xc_ref[...], preferred_element_type=f32)  # (N, D)

    # edge_nn is shared by all GCL layers -> edge weights computed once.
    ew = jnp.dot(eattr_ref[...].astype(bf16), wblk(_W_EDGE),
                 preferred_element_type=f32) + brow(_B_EDGE)               # (E, D)
    for l in range(GNN_N_LAYERS):
        # GCL.message: relu(x[src] * edge_nn(edge_attr))  (dropout = identity).
        x_src = jnp.dot(ssrc_ref[...], x, preferred_element_type=f32)      # (E, D)
        msg = jnp.maximum(x_src * ew, 0.0).astype(bf16)
        comb = jnp.dot(x.astype(bf16), wblk(_W_ROOT + l),
                       preferred_element_type=f32) + brow(_B_GBIAS + l)
        # sum_r mean_r(msg) @ W_r  ==  [adj_0 | adj_1 | adj_2] @ stack_r(msg @ W_r)
        for r in range(N_EDGE_TYPES):
            stk_ref[r * E:(r + 1) * E, :] = jnp.dot(
                msg, wblk(_W_WREL + l * N_EDGE_TYPES + r),
                preferred_element_type=f32)
        comb = comb + jnp.dot(adjcat_ref[...], stk_ref[...],
                              preferred_element_type=f32)                  # (N, D)
        x = x + jnp.maximum(comb, 0.0)                                     # ReLU + residual

    # chord_decoder + block-diagonal pitch/dur heads, drums/non-drums select.
    ch = (jnp.dot(x.astype(bf16), chordw_ref[...], preferred_element_type=f32)
          + bw[_BW_CHORD:_BW_CHORD + 1, :T1 * D]).astype(bf16)             # (N, T1*D)
    out_d = (jnp.dot(ch, heads_ref[:T1 * D, :], preferred_element_type=f32)
             + bw[_BW_HD:_BW_HD + 1, :HEAD_PAD])
    out_n = (jnp.dot(ch, heads_ref[T1 * D:, :], preferred_element_type=f32)
             + bw[_BW_HN:_BW_HN + 1, :HEAD_PAD])
    m = drum_ref[...]                                                      # (N, 1) in {0,1}
    c_out_ref[...] = m * out_d + (1.0 - m) * out_n                         # (N, 128) lane-dense


# ---------------------- host-side (one-time) operator builders ----------------
def _conv3x3_as_dense(w_oihw, h, w_out, upsample):
    """Dense operator for (nearest upsample along W by `upsample`) + 3x3 conv,
    padding=1, stride=1, NCHW layouts.
    Rows : cin * (h * w_in) + hy * w_in + wx      (pre-upsample feature layout)
    Cols : cout * (h * w_out) + hy * w_out + wx   (lane-dense conv output layout)
    """
    w_in = w_out // upsample
    hh = jnp.arange(h)[:, None]
    ww = jnp.arange(w_out)[None, :]
    p_out = (hh * w_out + ww).ravel()
    c_out, c_in = w_oihw.shape[0], w_oihw.shape[1]
    a = jnp.zeros((c_in * h * w_in, c_out * h * w_out), jnp.float32)
    for dy in (-1, 0, 1):
        for dx in (-1, 0, 1):
            h_src = hh + dy
            w_src = ww + dx
            valid = ((h_src >= 0) & (h_src < h) &
                     (w_src >= 0) & (w_src < w_out)).astype(jnp.float32).ravel()
            p_in = (jnp.clip(h_src, 0, h - 1) * w_in +
                    jnp.clip(w_src // upsample, 0, w_in - 1)).ravel()
            sh = jnp.zeros((h * w_in, h * w_out), jnp.float32)
            sh = sh.at[p_in, p_out].add(valid)
            a = a + jnp.kron(w_oihw[:, :, dy + 1, dx + 1].T, sh)
    return a


def _head_block_diag(pitch_w, pitch_b, dur_w, dur_b):
    """Block-diagonal (per simultaneous token) head: chord (N, T1*D) -> (N, T1*24)."""
    blk = jnp.zeros((D, D_TOKEN_PAIR), jnp.float32)
    blk = blk.at[:D // 2, :N_PITCH_TOKENS].set(pitch_w)
    blk = blk.at[D // 2:, N_PITCH_TOKENS:].set(dur_w)
    mat = jnp.kron(jnp.eye(T1, dtype=jnp.float32), blk)          # (T1*D, T1*D_TOKEN_PAIR)
    bias = jnp.tile(jnp.concatenate([pitch_b, dur_b]), T1)       # (T1*D_TOKEN_PAIR,)
    return mat, bias


def _split_bars(w, b):
    """(D, D*N_BARS) bars linear -> per-bar (N_BARS, D, D) weight, (N_BARS, D) bias."""
    wj = jnp.transpose(w.reshape(D, N_BARS, D), (1, 0, 2))
    bj = b.reshape(N_BARS, D)
    return wj, bj


def prepare_params(params):
    """One-time, parameter-only operator construction (hoisted out of forward)."""
    p = params
    scale = p["bn_gamma"] / jnp.sqrt(p["bn_var"] + BN_EPS)
    shift = p["bn_beta"] - p["bn_mean"] * scale
    wz_s, wz_c = p["lin_w"][:, :D], p["lin_w"][:, D:]
    bz_s, bz_c = p["lin_b"][:D], p["lin_b"][D:]
    sc_s, sc_c = scale[:D], scale[D:]
    sh_s, sh_c = shift[:D], shift[D:]

    sp, cp = p["s_decoder"], p["c_decoder"]
    gp = cp["gcn"]
    wb_s, bb_s = _split_bars(sp["bars_w"], sp["bars_b"])
    wb_c, bb_c = _split_bars(cp["bars_w"], cp["bars_b"])
    root = jnp.stack([lay["root"] for lay in gp["layers"]], axis=0)          # (L, D, D)
    gbias = jnp.stack([lay["bias"] for lay in gp["layers"]], axis=0)         # (L, D)
    wrel = jnp.concatenate([lay["weight"] for lay in gp["layers"]], axis=0)  # (L*R, D, D)

    # Packed bf16 (·,32) weight slab (16 blocks of 32 rows -> (512, 32)).
    w32 = jnp.concatenate([
        wz_s, wz_c,
        wb_s.reshape(N_BARS * D, D), wb_c.reshape(N_BARS * D, D),
        sp["lin1_w"], gp["edge_nn_w"],
        root.reshape(GNN_N_LAYERS * D, D),
        wrel.reshape(GNN_N_LAYERS * N_EDGE_TYPES * D, D),
    ], axis=0).astype(jnp.bfloat16)

    # Packed f32 (·,32) bias / scale slab -> (14, 32).
    b32 = jnp.concatenate([
        bz_s[None], sc_s[None], sh_s[None],
        bz_c[None], sc_c[None], sh_c[None],
        bb_s, bb_c,
        sp["lin1_b"][None], gp["edge_nn_b"][None],
        gbias,
    ], axis=0).astype(jnp.float32)

    # Conv-as-dense operators (bf16) + their biases.
    a1 = _conv3x3_as_dense(sp["conv1_w"], CNN_H, CNN_W, CNN_UP)              # (512, 1024)
    a1b = jnp.repeat(sp["conv1_b"], HW)                                      # (1024,)
    a2 = _conv3x3_as_dense(sp["conv2_w"], CNN_H, CNN_W, 1)                   # (1024, 128)
    a2b = jnp.repeat(sp["conv2_b"], HW)                                      # (128,)

    # Block-diagonal heads, padded to a lane-dense 128-wide output, stacked.
    hd, hdb = _head_block_diag(cp["drums_pitch_w"], cp["drums_pitch_b"],
                               cp["dur_w"], cp["dur_b"])
    hn, hnb = _head_block_diag(cp["non_drums_pitch_w"], cp["non_drums_pitch_b"],
                               cp["dur_w"], cp["dur_b"])
    hd = jnp.pad(hd, ((0, 0), (0, HEAD_PAD - hd.shape[1])))
    hn = jnp.pad(hn, ((0, 0), (0, HEAD_PAD - hn.shape[1])))
    heads = jnp.concatenate([hd, hn], axis=0).astype(jnp.bfloat16)           # (256, 128)

    def _row(v):
        return jnp.pad(v, (0, W_WIDE - v.shape[0]))[None, :]
    bwide = jnp.concatenate([
        _row(sp["lin2_b"]), _row(a1b), _row(a2b),
        _row(cp["chord_b"]), _row(hdb), _row(hnb),
    ], axis=0).astype(jnp.float32)                                           # (6, 1024)

    return {
        "w32": w32, "b32": b32, "bwide": bwide,
        "lin2_w": sp["lin2_w"].astype(jnp.bfloat16),                         # (32, 512)
        "a1": a1.astype(jnp.bfloat16),                                       # (512, 1024)
        "a2": a2.astype(jnp.bfloat16),                                       # (1024, 128)
        "chord_w": cp["chord_w"].astype(jnp.bfloat16),                       # (32, 128)
        "heads": heads,                                                      # (256, 128)
    }


# ------------------------------- forward pass ---------------------------------
def decoder_forward(z, s, prep):
    B = z.shape[0]
    num_nodes = s["batch"].shape[0]
    E = s["edge_index"].shape[1]

    # TODO(synk): when s is None the PyTorch model builds a PyG graph from the
    # sigmoid-thresholded s_logits (graph_from_tensor / Batch.from_data_list);
    # that host-side graph construction has no Pallas equivalent, so the
    # structure graph `s` must be supplied.

    # Graph-dependent glue (the only per-call host-side construction): dense
    # one-hot gather / degree-normalized scatter-mean operators.
    # TODO(synk): these dense operators are O(E*N); for production graph sizes
    # switch to PrefetchScalarGridSpec scalar-prefetched src/dst/type indices.
    edge_type = s["edge_attrs"][:, 0].astype(jnp.int32)
    edge_attr = s["edge_attrs"][:, 1:]
    src, dst = s["edge_index"][0], s["edge_index"][1]
    # bar-major (bar*B + batch) gather == repeat_interleave of bars_decoder rows.
    gather = jax.nn.one_hot(s["bars"] * B + s["batch"], N_BARS * B,
                            dtype=jnp.float32)                              # (N, N_BARS*B)
    ssrc = jax.nn.one_hot(src, num_nodes, dtype=jnp.float32)                 # (E, N)
    dst_oh = jax.nn.one_hot(dst, num_nodes, dtype=jnp.float32)               # (E, N)
    adj_parts = []
    for r in range(N_EDGE_TYPES):
        m = (edge_type == r).astype(jnp.float32)[:, None]                    # (E, 1)
        a = (dst_oh * m).T                                                   # (N, E)
        cnt = jnp.maximum(a.sum(axis=1, keepdims=True), 1.0)
        adj_parts.append(a / cnt)                                            # scatter-mean op
    adjcat = jnp.concatenate(adj_parts, axis=1)                              # (N, R*E)
    drum = s["is_drum"].astype(jnp.float32)[:, None]                         # (N, 1)

    s_out, c_out = pl.pallas_call(
        _decoder_kernel,
        out_shape=(jax.ShapeDtypeStruct((N_BARS * B, HW), jnp.float32),
                   jax.ShapeDtypeStruct((num_nodes, HEAD_PAD), jnp.float32)),
        scratch_shapes=[pltpu.VMEM((N_BARS * B, D), jnp.float32),     # structure bars stack
                        pltpu.VMEM((N_BARS * B, D), jnp.float32),     # content bars stack
                        pltpu.VMEM((N_EDGE_TYPES * E, D), jnp.float32)],  # msg @ W_r stack
    )(z, prep["w32"], prep["b32"], prep["lin2_w"], prep["a1"], prep["a2"],
      prep["chord_w"], prep["heads"], prep["bwide"],
      gather, edge_attr, ssrc, adjcat, drum)

    s_logits = (s_out.reshape(N_BARS, B, HW).transpose(1, 0, 2)
                .reshape(B, N_BARS, N_TRACKS, -1))
    c_logits = c_out[:, :T1 * D_TOKEN_PAIR].reshape(num_nodes, T1, D_TOKEN_PAIR)
    return s_logits, c_logits


# --------------------------- pure-JAX reference -------------------------------
def _reference_forward(z, s, params):
    p = params
    B = z.shape[0]
    scale = p["bn_gamma"] / jnp.sqrt(p["bn_var"] + BN_EPS)
    shift = p["bn_beta"] - p["bn_mean"] * scale
    zz = jnp.maximum((z @ p["lin_w"] + p["lin_b"]) * scale + shift, 0.0)
    z_s, z_c = zz[:, :D], zz[:, D:]

    sp = p["s_decoder"]
    x = (z_s @ sp["bars_w"] + sp["bars_b"]).reshape(-1, D)
    x = jnp.maximum(x @ sp["lin1_w"] + sp["lin1_b"], 0.0)
    x = jnp.maximum(x @ sp["lin2_w"] + sp["lin2_b"], 0.0)
    x = x.reshape(-1, CNN_C1, CNN_H, CNN_W_IN)
    x = jnp.repeat(x, CNN_UP, axis=3)
    x = jax.lax.conv_general_dilated(x, sp["conv1_w"], (1, 1), "SAME",
                                     dimension_numbers=("NCHW", "OIHW", "NCHW"))
    x = jnp.maximum(x + sp["conv1_b"][None, :, None, None], 0.0)
    x = jax.lax.conv_general_dilated(x, sp["conv2_w"], (1, 1), "SAME",
                                     dimension_numbers=("NCHW", "OIHW", "NCHW"))
    x = x + sp["conv2_b"][None, :, None, None]
    s_logits = x.reshape(B, N_BARS, N_TRACKS, -1)

    cp = p["c_decoder"]
    out = (z_c @ cp["bars_w"] + cp["bars_b"]).reshape(-1, D)
    distinct = s["bars"] + N_BARS * s["batch"]
    x = out[distinct]
    edge_type = s["edge_attrs"][:, 0].astype(jnp.int32)
    edge_attr = s["edge_attrs"][:, 1:]
    src, dst = s["edge_index"][0], s["edge_index"][1]
    n_nodes = x.shape[0]
    gp = cp["gcn"]
    ew = edge_attr @ gp["edge_nn_w"] + gp["edge_nn_b"]
    for layer in gp["layers"]:
        msg = jnp.maximum(x[src] * ew, 0.0)
        comb = x @ layer["root"] + layer["bias"]
        for r in range(N_EDGE_TYPES):
            m = (edge_type == r).astype(jnp.float32)
            summed = jax.ops.segment_sum(msg * m[:, None], dst, num_segments=n_nodes)
            cnt = jax.ops.segment_sum(m, dst, num_segments=n_nodes)
            comb = comb + (summed / jnp.maximum(cnt, 1.0)[:, None]) @ layer["weight"][r]
        x = x + jnp.maximum(comb, 0.0)
    ch = (x @ cp["chord_w"] + cp["chord_b"]).reshape(-1, T1, D)
    first, second = ch[..., :D // 2], ch[..., D // 2:]
    pitch_d = first @ cp["drums_pitch_w"] + cp["drums_pitch_b"]
    pitch_nd = first @ cp["non_drums_pitch_w"] + cp["non_drums_pitch_b"]
    dur = second @ cp["dur_w"] + cp["dur_b"]
    pitch = jnp.where(s["is_drum"][:, None, None], pitch_d, pitch_nd)
    c_logits = jnp.concatenate([pitch, dur], axis=-1)
    return s_logits, c_logits


# ------------------------------- parameter init -------------------------------
def init_params(key):
    keys = iter(jax.random.split(key, 64))

    def w(shape, scale=0.05):
        return scale * jax.random.normal(next(keys), shape, dtype=jnp.float32)

    return {
        "lin_w": w((D, 2 * D)), "lin_b": w((2 * D,)),
        "bn_gamma": 1.0 + 0.1 * jax.random.normal(next(keys), (2 * D,), jnp.float32),
        "bn_beta": 0.1 * jax.random.normal(next(keys), (2 * D,), jnp.float32),
        "bn_mean": 0.1 * jax.random.normal(next(keys), (2 * D,), jnp.float32),
        "bn_var": 1.0 + 0.1 * jnp.abs(jax.random.normal(next(keys), (2 * D,), jnp.float32)),
        "s_decoder": {
            "bars_w": w((D, D * N_BARS)), "bars_b": w((D * N_BARS,)),
            "lin1_w": w((D, D)), "lin1_b": w((D,)),
            "lin2_w": w((D, CNN_C1 * CNN_H * CNN_W_IN)),
            "lin2_b": w((CNN_C1 * CNN_H * CNN_W_IN,)),
            "conv1_w": w((CNN_C2, CNN_C1, 3, 3)), "conv1_b": w((CNN_C2,)),   # OIHW
            "conv2_w": w((1, CNN_C2, 3, 3)), "conv2_b": w((1,)),             # OIHW
        },
        "c_decoder": {
            "bars_w": w((D, D * N_BARS)), "bars_b": w((D * N_BARS,)),
            "gcn": {
                # single edge_nn Linear shared by all GCL layers (as in GCN)
                "edge_nn_w": w((NUM_DISTS, D)), "edge_nn_b": w((D,)),
                "layers": [
                    {"weight": w((N_EDGE_TYPES, D, D)),
                     "root": w((D, D)),
                     "bias": w((D,))}
                    for _ in range(GNN_N_LAYERS)
                ],
            },
            "chord_w": w((D, D * T1)), "chord_b": w((D * T1,)),
            "drums_pitch_w": w((D // 2, N_PITCH_TOKENS)),
            "drums_pitch_b": w((N_PITCH_TOKENS,)),
            "non_drums_pitch_w": w((D // 2, N_PITCH_TOKENS)),
            "non_drums_pitch_b": w((N_PITCH_TOKENS,)),
            "dur_w": w((D // 2, N_DUR_TOKENS)), "dur_b": w((N_DUR_TOKENS,)),
        },
    }


# ------------------------------------ main ------------------------------------
if __name__ == "__main__":
    key = jax.random.PRNGKey(0)
    k_param, k_z, k_edge, k_type, k_attr, k_drum = jax.random.split(key, 6)
    params = init_params(k_param)
    prep = prepare_params(params)      # one-time operator / slab construction

    B = 2
    z = jax.random.normal(k_z, (B, D), dtype=jnp.float32)

    # synthetic structure graph `s`: 3 nodes per (batch, bar), nodes sorted.
    nodes_per_bar = 3
    num_nodes = B * N_BARS * nodes_per_bar           # 12
    s_batch = jnp.repeat(jnp.arange(B, dtype=jnp.int32), N_BARS * nodes_per_bar)
    s_bars = jnp.tile(jnp.repeat(jnp.arange(N_BARS, dtype=jnp.int32),
                                 nodes_per_bar), B)
    E = 24
    edge_index = jax.random.randint(k_edge, (2, E), 0, num_nodes, dtype=jnp.int32)
    edge_type = jax.random.randint(k_type, (E,), 0, N_EDGE_TYPES).astype(jnp.float32)
    edge_feat = jax.random.normal(k_attr, (E, NUM_DISTS), dtype=jnp.float32)
    edge_attrs = jnp.concatenate([edge_type[:, None], edge_feat], axis=1)  # (E, 33)
    is_drum = jax.random.bernoulli(k_drum, 0.3, (num_nodes,))

    s = {"batch": s_batch, "bars": s_bars, "edge_index": edge_index,
         "edge_attrs": edge_attrs, "is_drum": is_drum}

    fwd = jax.jit(decoder_forward)
    s_logits, c_logits = fwd(z, s, prep)
    jax.block_until_ready((s_logits, c_logits))

    # shape / sanity / numerical check against a pure-JAX reference of the module
    assert s_logits.shape == (B, N_BARS, N_TRACKS, CNN_W), s_logits.shape
    assert c_logits.shape == (num_nodes, T1, D_TOKEN_PAIR), c_logits.shape
    assert jnp.all(jnp.isfinite(s_logits)) and jnp.all(jnp.isfinite(c_logits))
    s_ref, c_ref = _reference_forward(z, s, params)
    assert jnp.allclose(s_logits, s_ref, rtol=2e-2, atol=2e-2), \
        float(jnp.max(jnp.abs(s_logits - s_ref)))
    assert jnp.allclose(c_logits, c_ref, rtol=2e-2, atol=2e-2), \
        float(jnp.max(jnp.abs(c_logits - c_ref)))
    print("KERNEL_OK")
</pallas_src>

<mosaic_0001>
module attributes {stable_mosaic.version = 11 : i64} {
  func.func @_decoder_kernel(%arg0: memref<2x32xf32, #tpu.memory_space<vmem>>, %arg1: memref<512x32xbf16, #tpu.memory_space<vmem>>, %arg2: memref<14x32xf32, #tpu.memory_space<vmem>>, %arg3: memref<32x512xbf16, #tpu.memory_space<vmem>>, %arg4: memref<512x1024xbf16, #tpu.memory_space<vmem>>, %arg5: memref<1024x128xbf16, #tpu.memory_space<vmem>>, %arg6: memref<32x128xbf16, #tpu.memory_space<vmem>>, %arg7: memref<256x128xbf16, #tpu.memory_space<vmem>>, %arg8: memref<6x1024xf32, #tpu.memory_space<vmem>>, %arg9: memref<12x4xf32, #tpu.memory_space<vmem>>, %arg10: memref<24x32xf32, #tpu.memory_space<vmem>>, %arg11: memref<24x12xf32, #tpu.memory_space<vmem>>, %arg12: memref<12x72xf32, #tpu.memory_space<vmem>>, %arg13: memref<12x1xf32, #tpu.memory_space<vmem>>, %arg14: memref<4x128xf32, #tpu.memory_space<vmem>>, %arg15: memref<12x128xf32, #tpu.memory_space<vmem>>, %arg16: memref<4x32xf32, #tpu.memory_space<vmem>>, %arg17: memref<4x32xf32, #tpu.memory_space<vmem>>, %arg18: memref<72x32xf32, #tpu.memory_space<vmem>>) attributes {dimension_semantics = [], scalar_prefetch = 0 : i64, scratch_operands = 3 : i64, tpu.core_type = #tpu.core_type<tc>} {
    %c0 = arith.constant 0 : index
    %c0_0 = arith.constant 0 : index
    %0 = vector.load %arg2[%c0, %c0_0] : memref<14x32xf32, #tpu.memory_space<vmem>>, vector<14x32xf32>
    %c0_1 = arith.constant 0 : index
    %c0_2 = arith.constant 0 : index
    %1 = vector.load %arg8[%c0_1, %c0_2] : memref<6x1024xf32, #tpu.memory_space<vmem>>, vector<6x1024xf32>
    %c0_3 = arith.constant 0 : index
    %c0_4 = arith.constant 0 : index
    %2 = vector.load %arg0[%c0_3, %c0_4] : memref<2x32xf32, #tpu.memory_space<vmem>>, vector<2x32xf32>
    %3 = arith.truncf %2 : vector<2x32xf32> to vector<2x32xbf16>
    %c0_5 = arith.constant 0 : index
    %c0_6 = arith.constant 0 : index
    %4 = vector.load %arg1[%c0_5, %c0_6] : memref<512x32xbf16, #tpu.memory_space<vmem>>, vector<32x32xbf16>
    %cst = arith.constant dense<0.000000e+00> : vector<2x32xf32>
    %5 = tpu.matmul %3, %4, %cst {dimension_numbers = #tpu.dot_dimension_numbers<[1], [0], [0], [1], [0, 0, 1, 1], [], []>} : vector<2x32xbf16>, vector<32x32xbf16>, vector<2x32xf32> -> vector<2x32xf32>
    %6 = vector.extract_strided_slice %0 {offsets = [0, 0], sizes = [1, 32], strides = [1, 1]} : vector<14x32xf32> to vector<1x32xf32>
    %7 = vector.broadcast %6 : vector<1x32xf32> to vector<2x32xf32>
    %8 = arith.addf %5, %7 : vector<2x32xf32>
    %9 = vector.extract_strided_slice %0 {offsets = [1, 0], sizes = [1, 32], strides = [1, 1]} : vector<14x32xf32> to vector<1x32xf32>
    %10 = vector.broadcast %9 : vector<1x32xf32> to vector<2x32xf32>
    %11 = arith.mulf %8, %10 : vector<2x32xf32>
    %12 = vector.extract_strided_slice %0 {offsets = [2, 0], sizes = [1, 32], strides = [1, 1]} : vector<14x32xf32> to vector<1x32xf32>
    %13 = vector.broadcast %12 : vector<1x32xf32> to vector<2x32xf32>
    %14 = arith.addf %11, %13 : vector<2x32xf32>
    %cst_7 = arith.constant 0.000000e+00 : f32
    %15 = vector.broadcast %cst_7 : f32 to vector<2x32xf32>
    %16 = arith.maximumf %14, %15 : vector<2x32xf32>
    %c32 = arith.constant 32 : index
    %c0_8 = arith.constant 0 : index
    %17 = vector.load %arg1[%c32, %c0_8] : memref<512x32xbf16, #tpu.memory_space<vmem>>, vector<32x32xbf16>
    %cst_9 = arith.constant dense<0.000000e+00> : vector<2x32xf32>
    %18 = tpu.matmul %3, %17, %cst_9 {dimension_numbers = #tpu.dot_dimension_numbers<[1], [0], [0], [1], [0, 0, 1, 1], [], []>} : vector<2x32xbf16>, vector<32x32xbf16>, vector<2x32xf32> -> vector<2x32xf32>
    %19 = vector.extract_strided_slice %0 {offsets = [3, 0], sizes = [1, 32], strides = [1, 1]} : vector<14x32xf32> to vector<1x32xf32>
    %20 = vector.broadcast %19 : vector<1x32xf32> to vector<2x32xf32>
    %21 = arith.addf %18, %20 : vector<2x32xf32>
    %22 = vector.extract_strided_slice %0 {offsets = [4, 0], sizes = [1, 32], strides = [1, 1]} : vector<14x32xf32> to vector<1x32xf32>
    %23 = vector.broadcast %22 : vector<1x32xf32> to vector<2x32xf32>
    %24 = arith.mulf %21, %23 : vector<2x32xf32>
    %25 = vector.extract_strided_slice %0 {offsets = [5, 0], sizes = [1, 32], strides = [1, 1]} : vector<14x32xf32> to vector<1x32xf32>
    %26 = vector.broadcast %25 : vector<1x32xf32> to vector<2x32xf32>
    %27 = arith.addf %24, %26 : vector<2x32xf32>
    %cst_10 = arith.constant 0.000000e+00 : f32
    %28 = vector.broadcast %cst_10 : f32 to vector<2x32xf32>
    %29 = arith.maximumf %27, %28 : vector<2x32xf32>
    %30 = arith.truncf %16 : vector<2x32xf32> to vector<2x32xbf16>
    %c64 = arith.constant 64 : index
    %c0_11 = arith.constant 0 : index
    %31 = vector.load %arg1[%c64, %c0_11] : memref<512x32xbf16, #tpu.memory_space<vmem>>, vector<32x32xbf16>
    %cst_12 = arith.constant dense<0.000000e+00> : vector<2x32xf32>
    %32 = tpu.matmul %30, %31, %cst_12 {dimension_numbers = #tpu.dot_dimension_numbers<[1], [0], [0], [1], [0, 0, 1, 1], [], []>} : vector<2x32xbf16>, vector<32x32xbf16>, vector<2x32xf32> -> vector<2x32xf32>
    %33 = vector.extract_strided_slice %0 {offsets = [6, 0], sizes = [1, 32], strides = [1, 1]} : vector<14x32xf32> to vector<1x32xf32>
    %34 = vector.broadcast %33 : vector<1x32xf32> to vector<2x32xf32>
    %35 = arith.addf %32, %34 : vector<2x32xf32>
    %c0_13 = arith.constant 0 : index
    %c0_14 = arith.constant 0 : index
    %36 = vector.load %arg16[%c0_13, %c0_14] : memref<4x32xf32, #tpu.memory_space<vmem>>, vector<2x32xf32>
    tpu.vector_store %arg16[%c0_13, %c0_14], %35 {strides = array<i32>} : memref<4x32xf32, #tpu.memory_space<vmem>>, vector<2x32xf32>,
    %c96 = arith.constant 96 : index
    %c0_15 = arith.constant 0 : index
    %37 = vector.load %arg1[%c96, %c0_15] : memref<512x32xbf16, #tpu.memory_space<vmem>>, vector<32x32xbf16>
    %cst_16 = arith.constant dense<0.000000e+00> : vector<2x32xf32>
    %38 = tpu.matmul %30, %37, %cst_16 {dimension_numbers = #tpu.dot_dimension_numbers<[1], [0], [0], [1], [0, 0, 1, 1], [], []>} : vector<2x32xbf16>, vector<32x32xbf16>, vector<2x32xf32> -> vector<2x32xf32>
    %39 = vector.extract_strided_slice %0 {offsets = [7, 0], sizes = [1, 32], strides = [1, 1]} : vector<14x32xf32> to vector<1x32xf32>
    %40 = vector.broadcast %39 : vector<1x32xf32> to vector<2x32xf32>
    %41 = arith.addf %38, %40 : vector<2x32xf32>
    %c2 = arith.constant 2 : index
    %c0_17 = arith.constant 0 : index
    %42 = vector.load %arg16[%c2, %c0_17] : memref<4x32xf32, #tpu.memory_space<vmem>>, vector<2x32xf32>
    tpu.vector_store %arg16[%c2, %c0_17], %41 {strides = array<i32>} : memref<4x32xf32, #tpu.memory_space<vmem>>, vector<2x32xf32>,
    %c0_18 = arith.constant 0 : index
    %c0_19 = arith.constant 0 : index
    %43 = vector.load %arg16[%c0_18, %c0_19] : memref<4x32xf32, #tpu.memory_space<vmem>>, vector<4x32xf32>
    %44 = arith.truncf %43 : vector<4x32xf32> to vector<4x32xbf16>
    %c192 = arith.constant 192 : index
    %c0_20 = arith.constant 0 : index
    %45 = vector.load %arg1[%c192, %c0_20] : memref<512x32xbf16, #tpu.memory_space<vmem>>, vector<32x32xbf16>
    %cst_21 = arith.constant dense<0.000000e+00> : vector<4x32xf32>
    %46 = tpu.matmul %44, %45, %cst_21 {dimension_numbers = #tpu.dot_dimension_numbers<[1], [0], [0], [1], [0, 0, 1, 1], [], []>} : vector<4x32xbf16>, vector<32x32xbf16>, vector<4x32xf32> -> vector<4x32xf32>
    %47 = vector.extract_strided_slice %0 {offsets = [10, 0], sizes = [1, 32], strides = [1, 1]} : vector<14x32xf32> to vector<1x32xf32>
    %48 = vector.broadcast %47 : vector<1x32xf32> to vector<4x32xf32>
    %49 = arith.addf %46, %48 : vector<4x32xf32>
    %cst_22 = arith.constant 0.000000e+00 : f32
    %50 = vector.broadcast %cst_22 : f32 to vector<4x32xf32>
    %51 = arith.maximumf %49, %50 : vector<4x32xf32>
    %52 = arith.truncf %51 : vector<4x32xf32> to vector<4x32xbf16>
    %c0_23 = arith.constant 0 : index
    %c0_24 = arith.constant 0 : index
    %53 = vector.load %arg3[%c0_23, %c0_24] : memref<32x512xbf16, #tpu.memory_space<vmem>>, vector<32x512xbf16>
    %cst_25 = arith.constant dense<0.000000e+00> : vector<4x512xf32>
    %54 = tpu.matmul %52, %53, %cst_25 {dimension_numbers = #tpu.dot_dimension_numbers<[1], [0], [0], [1], [0, 0, 1, 1], [], []>} : vector<4x32xbf16>, vector<32x512xbf16>, vector<4x512xf32> -> vector<4x512xf32>
    %55 = vector.extract_strided_slice %1 {offsets = [0, 0], sizes = [1, 512], strides = [1, 1]} : vector<6x1024xf32> to vector<1x512xf32>
    %56 = vector.broadcast %55 : vector<1x512xf32> to vector<4x512xf32>
    %57 = arith.addf %54, %56 : vector<4x512xf32>
    %cst_26 = arith.constant 0.000000e+00 : f32
    %58 = vector.broadcast %cst_26 : f32 to vector<4x512xf32>
    %59 = arith.maximumf %57, %58 : vector<4x512xf32>
    %60 = arith.truncf %59 : vector<4x512xf32> to vector<4x512xbf16>
    %c0_27 = arith.constant 0 : index
    %c0_28 = arith.constant 0 : index
    %61 = vector.load %arg4[%c0_27, %c0_28] : memref<512x1024xbf16, #tpu.memory_space<vmem>>, vector<512x1024xbf16>
    %cst_29 = arith.constant dense<0.000000e+00> : vector<4x1024xf32>
    %62 = tpu.matmul %60, %61, %cst_29 {dimension_numbers = #tpu.dot_dimension_numbers<[1], [0], [0], [1], [0, 0, 1, 1], [], []>} : vector<4x512xbf16>, vector<512x1024xbf16>, vector<4x1024xf32> -> vector<4x1024xf32>
    %63 = vector.extract_strided_slice %1 {offsets = [1, 0], sizes = [1, 1024], strides = [1, 1]} : vector<6x1024xf32> to vector<1x1024xf32>
    %64 = vector.broadcast %63 : vector<1x1024xf32> to vector<4x1024xf32>
    %65 = arith.addf %62, %64 : vector<4x1024xf32>
    %cst_30 = arith.constant 0.000000e+00 : f32
    %66 = vector.broadcast %cst_30 : f32 to vector<4x1024xf32>
    %67 = arith.maximumf %65, %66 : vector<4x1024xf32>
    %68 = arith.truncf %67 : vector<4x1024xf32> to vector<4x1024xbf16>
    %c0_31 = arith.constant 0 : index
    %c0_32 = arith.constant 0 : index
    %69 = vector.load %arg5[%c0_31, %c0_32] : memref<1024x128xbf16, #tpu.memory_space<vmem>>, vector<1024x128xbf16>
    %cst_33 = arith.constant dense<0.000000e+00> : vector<4x128xf32>
    %70 = tpu.matmul %68, %69, %cst_33 {dimension_numbers = #tpu.dot_dimension_numbers<[1], [0], [0], [1], [0, 0, 1, 1], [], []>} : vector<4x1024xbf16>, vector<1024x128xbf16>, vector<4x128xf32> -> vector<4x128xf32>
    %71 = vector.extract_strided_slice %1 {offsets = [2, 0], sizes = [1, 128], strides = [1, 1]} : vector<6x1024xf32> to vector<1x128xf32>
    %72 = vector.broadcast %71 : vector<1x128xf32> to vector<4x128xf32>
    %73 = arith.addf %70, %72 : vector<4x128xf32>
    %c0_34 = arith.constant 0 : index
    %c0_35 = arith.constant 0 : index
    %74 = vector.load %arg14[%c0_34, %c0_35] : memref<4x128xf32, #tpu.memory_space<vmem>>, vector<4x128xf32>
    tpu.vector_store %arg14[%c0_34, %c0_35], %73 {strides = array<i32>} : memref<4x128xf32, #tpu.memory_space<vmem>>, vector<4x128xf32>,
    %75 = arith.truncf %29 : vector<2x32xf32> to vector<2x32xbf16>
    %c128 = arith.constant 128 : index
    %c0_36 = arith.constant 0 : index
    %76 = vector.load %arg1[%c128, %c0_36] : memref<512x32xbf16, #tpu.memory_space<vmem>>, vector<32x32xbf16>
    %cst_37 = arith.constant dense<0.000000e+00> : vector<2x32xf32>
    %77 = tpu.matmul %75, %76, %cst_37 {dimension_numbers = #tpu.dot_dimension_numbers<[1], [0], [0], [1], [0, 0, 1, 1], [], []>} : vector<2x32xbf16>, vector<32x32xbf16>, vector<2x32xf32> -> vector<2x32xf32>
    %78 = vector.extract_strided_slice %0 {offsets = [8, 0], sizes = [1, 32], strides = [1, 1]} : vector<14x32xf32> to vector<1x32xf32>
    %79 = vector.broadcast %78 : vector<1x32xf32> to vector<2x32xf32>
    %80 = arith.addf %77, %79 : vector<2x32xf32>
    %c0_38 = arith.constant 0 : index
    %c0_39 = arith.constant 0 : index
    %81 = vector.load %arg17[%c0_38, %c0_39] : memref<4x32xf32, #tpu.memory_space<vmem>>, vector<2x32xf32>
    tpu.vector_store %arg17[%c0_38, %c0_39], %80 {strides = array<i32>} : memref<4x32xf32, #tpu.memory_space<vmem>>, vector<2x32xf32>,
    %c160 = arith.constant 160 : index
    %c0_40 = arith.constant 0 : index
    %82 = vector.load %arg1[%c160, %c0_40] : memref<512x32xbf16, #tpu.memory_space<vmem>>, vector<32x32xbf16>
    %cst_41 = arith.constant dense<0.000000e+00> : vector<2x32xf32>
    %83 = tpu.matmul %75, %82, %cst_41 {dimension_numbers = #tpu.dot_dimension_numbers<[1], [0], [0], [1], [0, 0, 1, 1], [], []>} : vector<2x32xbf16>, vector<32x32xbf16>, vector<2x32xf32> -> vector<2x32xf32>
    %84 = vector.extract_strided_slice %0 {offsets = [9, 0], sizes = [1, 32], strides = [1, 1]} : vector<14x32xf32> to vector<1x32xf32>
    %85 = vector.broadcast %84 : vector<1x32xf32> to vector<2x32xf32>
    %86 = arith.addf %83, %85 : vector<2x32xf32>
    %c2_42 = arith.constant 2 : index
    %c0_43 = arith.constant 0 : index
    %87 = vector.load %arg17[%c2_42, %c0_43] : memref<4x32xf32, #tpu.memory_space<vmem>>, vector<2x32xf32>
    tpu.vector_store %arg17[%c2_42, %c0_43], %86 {strides = array<i32>} : memref<4x32xf32, #tpu.memory_space<vmem>>, vector<2x32xf32>,
    %c0_44 = arith.constant 0 : index
    %c0_45 = arith.constant 0 : index
    %88 = vector.load %arg9[%c0_44, %c0_45] : memref<12x4xf32, #tpu.memory_space<vmem>>, vector<12x4xf32>
    %c0_46 = arith.constant 0 : index
    %c0_47 = arith.constant 0 : index
    %89 = vector.load %arg17[%c0_46, %c0_47] : memref<4x32xf32, #tpu.memory_space<vmem>>, vector<4x32xf32>
    %cst_48 = arith.constant dense<0.000000e+00> : vector<12x32xf32>
    %90 = tpu.matmul %88, %89, %cst_48 {dimension_numbers = #tpu.dot_dimension_numbers<[1], [0], [0], [1], [0, 0, 1, 1], [], []>} : vector<12x4xf32>, vector<4x32xf32>, vector<12x32xf32> -> vector<12x32xf32>
    %c0_49 = arith.constant 0 : index
    %c0_50 = arith.constant 0 : index
    %91 = vector.load %arg10[%c0_49, %c0_50] : memref<24x32xf32, #tpu.memory_space<vmem>>, vector<24x32xf32>
    %92 = arith.truncf %91 : vector<24x32xf32> to vector<24x32xbf16>
    %c224 = arith.constant 224 : index
    %c0_51 = arith.constant 0 : index
    %93 = vector.load %arg1[%c224, %c0_51] : memref<512x32xbf16, #tpu.memory_space<vmem>>, vector<32x32xbf16>
    %cst_52 = arith.constant dense<0.000000e+00> : vector<24x32xf32>
    %94 = tpu.matmul %92, %93, %cst_52 {dimension_numbers = #tpu.dot_dimension_numbers<[1], [0], [0], [1], [0, 0, 1, 1], [], []>} : vector<24x32xbf16>, vector<32x32xbf16>, vector<24x32xf32> -> vector<24x32xf32>
    %95 = vector.extract_strided_slice %0 {offsets = [11, 0], sizes = [1, 32], strides = [1, 1]} : vector<14x32xf32> to vector<1x32xf32>
    %96 = vector.broadcast %95 : vector<1x32xf32> to vector<24x32xf32>
    %97 = arith.addf %94, %96 : vector<24x32xf32>
    %c0_53 = arith.constant 0 : index
    %c0_54 = arith.constant 0 : index
    %98 = vector.load %arg11[%c0_53, %c0_54] : memref<24x12xf32, #tpu.memory_space<vmem>>, vector<24x12xf32>
    %cst_55 = arith.constant dense<0.000000e+00> : vector<24x32xf32>
    %99 = tpu.matmul %98, %90, %cst_55 {dimension_numbers = #tpu.dot_dimension_numbers<[1], [0], [0], [1], [0, 0, 1, 1], [], []>} : vector<24x12xf32>, vector<12x32xf32>, vector<24x32xf32> -> vector<24x32xf32>
    %100 = arith.mulf %99, %97 : vector<24x32xf32>
    %cst_56 = arith.constant 0.000000e+00 : f32
    %101 = vector.broadcast %cst_56 : f32 to vector<24x32xf32>
    %102 = arith.maximumf %100, %101 : vector<24x32xf32>
    %103 = arith.truncf %102 : vector<24x32xf32> to vector<24x32xbf16>
    %104 = arith.truncf %90 : vector<12x32xf32> to vector<12x32xbf16>
    %c256 = arith.constant 256 : index
    %c0_57 = arith.constant 0 : index
    %105 = vector.load %arg1[%c256, %c0_57] : memref<512x32xbf16, #tpu.memory_space<vmem>>, vector<32x32xbf16>
    %cst_58 = arith.constant dense<0.000000e+00> : vector<12x32xf32>
    %106 = tpu.matmul %104, %105, %cst_58 {dimension_numbers = #tpu.dot_dimension_numbers<[1], [0], [0], [1], [0, 0, 1, 1], [], []>} : vector<12x32xbf16>, vector<32x32xbf16>, vector<12x32xf32> -> vector<12x32xf32>
    %107 = vector.extract_strided_slice %0 {offsets = [12, 0], sizes = [1, 32], strides = [1, 1]} : vector<14x32xf32> to vector<1x32xf32>
    %108 = vector.broadcast %107 : vector<1x32xf32> to vector<12x32xf32>
    %109 = arith.addf %106, %108 : vector<12x32xf32>
    %c320 = arith.constant 320 : index
    %c0_59 = arith.constant 0 : index
    %110 = vector.load %arg1[%c320, %c0_59] : memref<512x32xbf16, #tpu.memory_space<vmem>>, vector<32x32xbf16>
    %cst_60 = arith.constant dense<0.000000e+00> : vector<24x32xf32>
    %111 = tpu.matmul %103, %110, %cst_60 {dimension_numbers = #tpu.dot_dimension_numbers<[1], [0], [0], [1], [0, 0, 1, 1], [], []>} : vector<24x32xbf16>, vector<32x32xbf16>, vector<24x32xf32> -> vector<24x32xf32>
    %c0_61 = arith.constant 0 : index
    %c0_62 = arith.constant 0 : index
    %112 = vector.load %arg18[%c0_61, %c0_62] : memref<72x32xf32, #tpu.memory_space<vmem>>, vector<24x32xf32>
    tpu.vector_store %arg18[%c0_61, %c0_62], %111 {strides = array<i32>} : memref<72x32xf32, #tpu.memory_space<vmem>>, vector<24x32xf32>,
    %c352 = arith.constant 352 : index
    %c0_63 = arith.constant 0 : index
    %113 = vector.load %arg1[%c352, %c0_63] : memref<512x32xbf16, #tpu.memory_space<vmem>>, vector<32x32xbf16>
    %cst_64 = arith.constant dense<0.000000e+00> : vector<24x32xf32>
    %114 = tpu.matmul %103, %113, %cst_64 {dimension_numbers = #tpu.dot_dimension_numbers<[1], [0], [0], [1], [0, 0, 1, 1], [], []>} : vector<24x32xbf16>, vector<32x32xbf16>, vector<24x32xf32> -> vector<24x32xf32>
    %c24 = arith.constant 24 : index
    %c0_65 = arith.constant 0 : index
    %115 = vector.load %arg18[%c24, %c0_65] : memref<72x32xf32, #tpu.memory_space<vmem>>, vector<24x32xf32>
    tpu.vector_store %arg18[%c24, %c0_65], %114 {strides = array<i32>} : memref<72x32xf32, #tpu.memory_space<vmem>>, vector<24x32xf32>,
    %c384 = arith.constant 384 : index
    %c0_66 = arith.constant 0 : index
    %116 = vector.load %arg1[%c384, %c0_66] : memref<512x32xbf16, #tpu.memory_space<vmem>>, vector<32x32xbf16>
    %cst_67 = arith.constant dense<0.000000e+00> : vector<24x32xf32>
    %117 = tpu.matmul %103, %116, %cst_67 {dimension_numbers = #tpu.dot_dimension_numbers<[1], [0], [0], [1], [0, 0, 1, 1], [], []>} : vector<24x32xbf16>, vector<32x32xbf16>, vector<24x32xf32> -> vector<24x32xf32>
    %c48 = arith.constant 48 : index
    %c0_68 = arith.constant 0 : index
    %118 = vector.load %arg18[%c48, %c0_68] : memref<72x32xf32, #tpu.memory_space<vmem>>, vector<24x32xf32>
    tpu.vector_store %arg18[%c48, %c0_68], %117 {strides = array<i32>} : memref<72x32xf32, #tpu.memory_space<vmem>>, vector<24x32xf32>,
    %c0_69 = arith.constant 0 : index
    %c0_70 = arith.constant 0 : index
    %119 = vector.load %arg12[%c0_69, %c0_70] : memref<12x72xf32, #tpu.memory_space<vmem>>, vector<12x72xf32>
    %c0_71 = arith.constant 0 : index
    %c0_72 = arith.constant 0 : index
    %120 = vector.load %arg18[%c0_71, %c0_72] : memref<72x32xf32, #tpu.memory_space<vmem>>, vector<72x32xf32>
    %cst_73 = arith.constant dense<0.000000e+00> : vector<12x32xf32>
    %121 = tpu.matmul %119, %120, %cst_73 {dimension_numbers = #tpu.dot_dimension_numbers<[1], [0], [0], [1], [0, 0, 1, 1], [], []>} : vector<12x72xf32>, vector<72x32xf32>, vector<12x32xf32> -> vector<12x32xf32>
    %122 = arith.addf %109, %121 : vector<12x32xf32>
    %cst_74 = arith.constant 0.000000e+00 : f32
    %123 = vector.broadcast %cst_74 : f32 to vector<12x32xf32>
    %124 = arith.maximumf %122, %123 : vector<12x32xf32>
    %125 = arith.addf %90, %124 : vector<12x32xf32>
    %c0_75 = arith.constant 0 : index
    %c0_76 = arith.constant 0 : index
    %126 = vector.load %arg11[%c0_75, %c0_76] : memref<24x12xf32, #tpu.memory_space<vmem>>, vector<24x12xf32>
    %cst_77 = arith.constant dense<0.000000e+00> : vector<24x32xf32>
    %127 = tpu.matmul %126, %125, %cst_77 {dimension_numbers = #tpu.dot_dimension_numbers<[1], [0], [0], [1], [0, 0, 1, 1], [], []>} : vector<24x12xf32>, vector<12x32xf32>, vector<24x32xf32> -> vector<24x32xf32>
    %128 = arith.mulf %127, %97 : vector<24x32xf32>
    %cst_78 = arith.constant 0.000000e+00 : f32
    %129 = vector.broadcast %cst_78 : f32 to vector<24x32xf32>
    %130 = arith.maximumf %128, %129 : vector<24x32xf32>
    %131 = arith.truncf %130 : vector<24x32xf32> to vector<24x32xbf16>
    %132 = arith.truncf %125 : vector<12x32xf32> to vector<12x32xbf16>
    %c288 = arith.constant 288 : index
    %c0_79 = arith.constant 0 : index
    %133 = vector.load %arg1[%c288, %c0_79] : memref<512x32xbf16, #tpu.memory_space<vmem>>, vector<32x32xbf16>
    %cst_80 = arith.constant dense<0.000000e+00> : vector<12x32xf32>
    %134 = tpu.matmul %132, %133, %cst_80 {dimension_numbers = #tpu.dot_dimension_numbers<[1], [0], [0], [1], [0, 0, 1, 1], [], []>} : vector<12x32xbf16>, vector<32x32xbf16>, vector<12x32xf32> -> vector<12x32xf32>
    %135 = vector.extract_strided_slice %0 {offsets = [13, 0], sizes = [1, 32], strides = [1, 1]} : vector<14x32xf32> to vector<1x32xf32>
    %136 = vector.broadcast %135 : vector<1x32xf32> to vector<12x32xf32>
    %137 = arith.addf %134, %136 : vector<12x32xf32>
    %c416 = arith.constant 416 : index
    %c0_81 = arith.constant 0 : index
    %138 = vector.load %arg1[%c416, %c0_81] : memref<512x32xbf16, #tpu.memory_space<vmem>>, vector<32x32xbf16>
    %cst_82 = arith.constant dense<0.000000e+00> : vector<24x32xf32>
    %139 = tpu.matmul %131, %138, %cst_82 {dimension_numbers = #tpu.dot_dimension_numbers<[1], [0], [0], [1], [0, 0, 1, 1], [], []>} : vector<24x32xbf16>, vector<32x32xbf16>, vector<24x32xf32> -> vector<24x32xf32>
    %c0_83 = arith.constant 0 : index
    %c0_84 = arith.constant 0 : index
    %140 = vector.load %arg18[%c0_83, %c0_84] : memref<72x32xf32, #tpu.memory_space<vmem>>, vector<24x32xf32>
    tpu.vector_store %arg18[%c0_83, %c0_84], %139 {strides = array<i32>} : memref<72x32xf32, #tpu.memory_space<vmem>>, vector<24x32xf32>,
    %c448 = arith.constant 448 : index
    %c0_85 = arith.constant 0 : index
    %141 = vector.load %arg1[%c448, %c0_85] : memref<512x32xbf16, #tpu.memory_space<vmem>>, vector<32x32xbf16>
    %cst_86 = arith.constant dense<0.000000e+00> : vector<24x32xf32>
    %142 = tpu.matmul %131, %141, %cst_86 {dimension_numbers = #tpu.dot_dimension_numbers<[1], [0], [0], [1], [0, 0, 1, 1], [], []>} : vector<24x32xbf16>, vector<32x32xbf16>, vector<24x32xf32> -> vector<24x32xf32>
    %c24_87 = arith.constant 24 : index
    %c0_88 = arith.constant 0 : index
    %143 = vector.load %arg18[%c24_87, %c0_88] : memref<72x32xf32, #tpu.memory_space<vmem>>, vector<24x32xf32>
    tpu.vector_store %arg18[%c24_87, %c0_88], %142 {strides = array<i32>} : memref<72x32xf32, #tpu.memory_space<vmem>>, vector<24x32xf32>,
    %c480 = arith.constant 480 : index
    %c0_89 = arith.constant 0 : index
    %144 = vector.load %arg1[%c480, %c0_89] : memref<512x32xbf16, #tpu.memory_space<vmem>>, vector<32x32xbf16>
    %cst_90 = arith.constant dense<0.000000e+00> : vector<24x32xf32>
    %145 = tpu.matmul %131, %144, %cst_90 {dimension_numbers = #tpu.dot_dimension_numbers<[1], [0], [0], [1], [0, 0, 1, 1], [], []>} : vector<24x32xbf16>, vector<32x32xbf16>, vector<24x32xf32> -> vector<24x32xf32>
    %c48_91 = arith.constant 48 : index
    %c0_92 = arith.constant 0 : index
    %146 = vector.load %arg18[%c48_91, %c0_92] : memref<72x32xf32, #tpu.memory_space<vmem>>, vector<24x32xf32>
    tpu.vector_store %arg18[%c48_91, %c0_92], %145 {strides = array<i32>} : memref<72x32xf32, #tpu.memory_space<vmem>>, vector<24x32xf32>,
    %c0_93 = arith.constant 0 : index
    %c0_94 = arith.constant 0 : index
    %147 = vector.load %arg12[%c0_93, %c0_94] : memref<12x72xf32, #tpu.memory_space<vmem>>, vector<12x72xf32>
    %c0_95 = arith.constant 0 : index
    %c0_96 = arith.constant 0 : index
    %148 = vector.load %arg18[%c0_95, %c0_96] : memref<72x32xf32, #tpu.memory_space<vmem>>, vector<72x32xf32>
    %cst_97 = arith.constant dense<0.000000e+00> : vector<12x32xf32>
    %149 = tpu.matmul %147, %148, %cst_97 {dimension_numbers = #tpu.dot_dimension_numbers<[1], [0], [0], [1], [0, 0, 1, 1], [], []>} : vector<12x72xf32>, vector<72x32xf32>, vector<12x32xf32> -> vector<12x32xf32>
    %150 = arith.addf %137, %149 : vector<12x32xf32>
    %cst_98 = arith.constant 0.000000e+00 : f32
    %151 = vector.broadcast %cst_98 : f32 to vector<12x32xf32>
    %152 = arith.maximumf %150, %151 : vector<12x32xf32>
    %153 = arith.addf %125, %152 : vector<12x32xf32>
    %154 = arith.truncf %153 : vector<12x32xf32> to vector<12x32xbf16>
    %c0_99 = arith.constant 0 : index
    %c0_100 = arith.constant 0 : index
    %155 = vector.load %arg6[%c0_99, %c0_100] : memref<32x128xbf16, #tpu.memory_space<vmem>>, vector<32x128xbf16>
    %cst_101 = arith.constant dense<0.000000e+00> : vector<12x128xf32>
    %156 = tpu.matmul %154, %155, %cst_101 {dimension_numbers = #tpu.dot_dimension_numbers<[1], [0], [0], [1], [0, 0, 1, 1], [], []>} : vector<12x32xbf16>, vector<32x128xbf16>, vector<12x128xf32> -> vector<12x128xf32>
    %157 = vector.extract_strided_slice %1 {offsets = [3, 0], sizes = [1, 128], strides = [1, 1]} : vector<6x1024xf32> to vector<1x128xf32>
    %158 = vector.broadcast %157 : vector<1x128xf32> to vector<12x128xf32>
    %159 = arith.addf %156, %158 : vector<12x128xf32>
    %160 = arith.truncf %159 : vector<12x128xf32> to vector<12x128xbf16>
    %c0_102 = arith.constant 0 : index
    %c0_103 = arith.constant 0 : index
    %161 = vector.load %arg7[%c0_102, %c0_103] : memref<256x128xbf16, #tpu.memory_space<vmem>>, vector<128x128xbf16>
    %cst_104 = arith.constant dense<0.000000e+00> : vector<12x128xf32>
    %162 = tpu.matmul %160, %161, %cst_104 {dimension_numbers = #tpu.dot_dimension_numbers<[1], [0], [0], [1], [0, 0, 1, 1], [], []>} : vector<12x128xbf16>, vector<128x128xbf16>, vector<12x128xf32> -> vector<12x128xf32>
    %163 = vector.extract_strided_slice %1 {offsets = [4, 0], sizes = [1, 128], strides = [1, 1]} : vector<6x1024xf32> to vector<1x128xf32>
    %164 = vector.broadcast %163 : vector<1x128xf32> to vector<12x128xf32>
    %165 = arith.addf %162, %164 : vector<12x128xf32>
    %c128_105 = arith.constant 128 : index
    %c0_106 = arith.constant 0 : index
    %166 = vector.load %arg7[%c128_105, %c0_106] : memref<256x128xbf16, #tpu.memory_space<vmem>>, vector<128x128xbf16>
    %cst_107 = arith.constant dense<0.000000e+00> : vector<12x128xf32>
    %167 = tpu.matmul %160, %166, %cst_107 {dimension_numbers = #tpu.dot_dimension_numbers<[1], [0], [0], [1], [0, 0, 1, 1], [], []>} : vector<12x128xbf16>, vector<128x128xbf16>, vector<12x128xf32> -> vector<12x128xf32>
    %168 = vector.extract_strided_slice %1 {offsets = [5, 0], sizes = [1, 128], strides = [1, 1]} : vector<6x1024xf32> to vector<1x128xf32>
    %169 = vector.broadcast %168 : vector<1x128xf32> to vector<12x128xf32>
    %170 = arith.addf %167, %169 : vector<12x128xf32>
    %c0_108 = arith.constant 0 : index
    %c0_109 = arith.constant 0 : index
    %171 = vector.load %arg13[%c0_108, %c0_109] : memref<12x1xf32, #tpu.memory_space<vmem>>, vector<12x1xf32>
    %172 = vector.broadcast %171 : vector<12x1xf32> to vector<12x128xf32>
    %173 = arith.mulf %172, %165 : vector<12x128xf32>
    %cst_110 = arith.constant 1.000000e+00 : f32
    %174 = vector.broadcast %cst_110 : f32 to vector<12x1xf32>
    %175 = arith.subf %174, %171 : vector<12x1xf32>
    %176 = vector.broadcast %175 : vector<12x1xf32> to vector<12x128xf32>
    %177 = arith.mulf %176, %170 : vector<12x128xf32>
    %178 = arith.addf %173, %177 : vector<12x128xf32>
    %c0_111 = arith.constant 0 : index
    %c0_112 = arith.constant 0 : index
    %179 = vector.load %arg15[%c0_111, %c0_112] : memref<12x128xf32, #tpu.memory_space<vmem>>, vector<12x128xf32>
    tpu.vector_store %arg15[%c0_111, %c0_112], %178 {strides = array<i32>} : memref<12x128xf32, #tpu.memory_space<vmem>>, vector<12x128xf32>,
    return
  }
}

</mosaic_0001>

<llo_original>
// kernel: decoder_forward.1
$region0: #{decoder_forward.1}
  #allocation0 [shape = 'u32[]', space=smem, size = 0x4, offset = 0x4, fixed_abs, tag = 'smem constant byte address 0x4 - core index']
  #allocation1 [shape = 'u32[144,128]{1,0:T(1,128)}', space=vmem, size = 0x12000, scoped, tag = 'internal scratch']
  #allocation2 [shape = 'f32[4,32]{1,0:T(4,128)}', space=vmem, size = 0x800, scoped, tag = 'scratch operand']
  #allocation3 [shape = 'f32[4,32]{1,0:T(4,128)}', space=vmem, size = 0x800, scoped, tag = 'scratch operand']
  #allocation4 [shape = 'f32[72,32]{1,0:T(8,128)}', space=vmem, size = 0x9000, scoped, tag = 'scratch operand']
  %s0 = inlined_call_operand.vmem [shape: f32[2,32], index: 0, kind: input, shape index: {}]
  %s1 = inlined_call_operand.vmem [shape: bf16[512,32], index: 1, kind: input, shape index: {}]
  %s2 = inlined_call_operand.vmem [shape: f32[14,32], index: 2, kind: input, shape index: {}]
  %s3 = inlined_call_operand.hbm [shape: bf16[32,512], index: 3, kind: input, shape index: {}]
  %s4 = inlined_call_operand.hbm [shape: bf16[512,1024], index: 4, kind: input, shape index: {}]
  %s5 = inlined_call_operand.vmem [shape: bf16[1024,128], index: 5, kind: input, shape index: {}]
  %s6 = inlined_call_operand.vmem [shape: bf16[32,128], index: 6, kind: input, shape index: {}]
  %s7 = inlined_call_operand.hbm [shape: bf16[256,128], index: 7, kind: input, shape index: {}]
  %s8 = inlined_call_operand.hbm [shape: f32[6,1024], index: 8, kind: input, shape index: {}]
  %s9 = inlined_call_operand.vmem [shape: f32[12,4], index: 9, kind: input, shape index: {}]
  %s10 = inlined_call_operand.vmem [shape: f32[24,32], index: 10, kind: input, shape index: {}]
  %s11 = inlined_call_operand.vmem [shape: f32[24,12], index: 11, kind: input, shape index: {}]
  %s12 = inlined_call_operand.vmem [shape: f32[12,72], index: 12, kind: input, shape index: {}]
  %s13 = inlined_call_operand.vmem [shape: f32[12,1], index: 13, kind: input, shape index: {}]
  %s14 = inlined_call_operand.vmem [shape: f32[4,128], index: 14, kind: output, shape index: {0}]
  %s15 = inlined_call_operand.vmem [shape: f32[12,128], index: 15, kind: output, shape index: {1}]
  %16 = xla_tuple %s14, %s15
  %s17 = sld [smem:[#allocation0]]
  $region90: #{decoder_forward.1} parent=0
    _
  %s19 = ssub.s32 1, %s17
  %s20 = scalar_select 0, %s19, %s17
  $region1: #{decoder_forward.1} parent=0
    #allocation5 [shape = 'u8[32768]{0}', space=vmem, size = 0x8000, scoped, tag = 'input window, operand 3, single buffered']
    #allocation6 [shape = 's32[1]{0}', space=sflag, size = 0x4, scoped, tag = 'scoped memory for decoder_forward.1']
    #allocation7 [shape = 'u8[1048576]{0}', space=vmem, size = 0x100000, scoped, tag = 'input window, operand 4, single buffered']
    #allocation8 [shape = 's32[1]{0}', space=sflag, size = 0x4, scoped, tag = 'scoped memory for decoder_forward.1']
    #allocation9 [shape = 'u8[65536]{0}', space=vmem, size = 0x10000, scoped, tag = 'input window, operand 7, single buffered']
    #allocation10 [shape = 'u8[32768]{0}', space=vmem, size = 0x8000, scoped, tag = 'input window, operand 8, single buffered']
    #allocation11 [shape = 's32[1]{0}', space=sflag, size = 0x4, scoped, tag = 'scoped memory for decoder_forward.1']
    %21 = vsyncpa [#allocation6], 0
    %22 = vsyncpa [#allocation8], 0
    %23 = vsyncpa [#allocation11], 0
    // Predicated region
    $region2: #{decoder_forward.1} parent=1 // pred_check
      _
    $region3: #{decoder_forward.1} parent=1 // pred_check_branch
      %25 = sbr.rel (0) target = $region5
    $region4: #{decoder_forward.1} parent=1 // pred_region
      _
    $region5: #{decoder_forward.1} parent=1 // pred_fallthru
      _
    // Predicated region
    $region6: #{decoder_forward.1} parent=1 // pred_check
      _
    $region7: #{decoder_forward.1} parent=1 // pred_check_branch
      %27 = sbr.rel (0) target = $region9
    $region8: #{decoder_forward.1} parent=1 // pred_region
      _
    $region9: #{decoder_forward.1} parent=1 // pred_fallthru
      _
    // Predicated region
    $region10: #{decoder_forward.1} parent=1 // pred_check
      _
    $region11: #{decoder_forward.1} parent=1 // pred_check_branch
      %29 = sbr.rel (0) target = $region13
    $region12: #{decoder_forward.1} parent=1 // pred_region
      _
    $region13: #{decoder_forward.1} parent=1 // pred_fallthru
      _
    // Predicated region
    $region14: #{decoder_forward.1} parent=1 // pred_check
      _
    $region15: #{decoder_forward.1} parent=1 // pred_check_branch
      %31 = sbr.rel (0) target = $region17
    $region16: #{decoder_forward.1} parent=1 // pred_region
      %s33 = ssub.s32 1024, 1024
      %34 = vsyncadd [#allocation6], %s33
      %s35 = sshll.u32 [#allocation5], 4
      %s36 = int_to_ptr.vmem [resolvable:$true] %s35
      %41 = dma.hbm_to_vmem [thread:$0]  %s3, 1024, %s36, [#allocation6], 256, 256, 16
    $region17: #{decoder_forward.1} parent=1 // pred_fallthru
      _
    // Predicated region
    $region18: #{decoder_forward.1} parent=1 // pred_check
      _
    $region19: #{decoder_forward.1} parent=1 // pred_check_branch
      %43 = sbr.rel (0) target = $region21
    $region20: #{decoder_forward.1} parent=1 // pred_region
      %s45 = ssub.s32 32768, 32768
      %46 = vsyncadd [#allocation8], %s45
      %s47 = sshll.u32 [#allocation7], 4
      %s48 = int_to_ptr.vmem [resolvable:$true] %s47
      %53 = dma.hbm_to_vmem [thread:$0]  %s4, 32768, %s48, [#allocation8], 512, 512, 32
    $region21: #{decoder_forward.1} parent=1 // pred_fallthru
      _
    // Predicated region
    $region22: #{decoder_forward.1} parent=1 // pred_check
      _
    $region23: #{decoder_forward.1} parent=1 // pred_check_branch
      %55 = sbr.rel (0) target = $region25
    $region24: #{decoder_forward.1} parent=1 // pred_region
      _
    $region25: #{decoder_forward.1} parent=1 // pred_fallthru
      _
    // Predicated region
    $region26: #{decoder_forward.1} parent=1 // pred_check
      _
    $region27: #{decoder_forward.1} parent=1 // pred_check_branch
      %57 = sbr.rel (0) target = $region29
    $region28: #{decoder_forward.1} parent=1 // pred_region
      _
    $region29: #{decoder_forward.1} parent=1 // pred_fallthru
      _
    // Predicated region
    $region30: #{decoder_forward.1} parent=1 // pred_check
      _
    $region31: #{decoder_forward.1} parent=1 // pred_check_branch
      %59 = sbr.rel (0) target = $region33
    $region32: #{decoder_forward.1} parent=1 // pred_region
      %s61 = ssub.s32 2048, 2048
      %62 = vsyncadd [#allocation8], %s61
      %s63 = sshll.u32 [#allocation9], 4
      %s64 = int_to_ptr.vmem [resolvable:$true] %s63
      %69 = dma.hbm_to_vmem [thread:$0]  %s7, 2048, %s64, [#allocation8], 64, 64, 4
    $region33: #{decoder_forward.1} parent=1 // pred_fallthru
      _
    // Predicated region
    $region34: #{decoder_forward.1} parent=1 // pred_check
      _
    $region35: #{decoder_forward.1} parent=1 // pred_check_branch
      %71 = sbr.rel (0) target = $region37
    $region36: #{decoder_forward.1} parent=1 // pred_region
      %s73 = ssub.s32 1024, 1024
      %74 = vsyncadd [#allocation11], %s73
      %s76 = sshll.u32 [#allocation10], 4
      %s77 = int_to_ptr.vmem [resolvable:$true] %s76
      %79 = dma.hbm_to_vmem [thread:$0]  %s8, 1024, %s77, [#allocation11]
    $region37: #{decoder_forward.1} parent=1 // pred_fallthru
      _
    // Predicated region
    $region38: #{decoder_forward.1} parent=1 // pred_check
      _
    $region39: #{decoder_forward.1} parent=1 // pred_check_branch
      %81 = sbr.rel (0) target = $region41
    $region40: #{decoder_forward.1} parent=1 // pred_region
      _
    $region41: #{decoder_forward.1} parent=1 // pred_fallthru
      _
    // Predicated region
    $region42: #{decoder_forward.1} parent=1 // pred_check
      _
    $region43: #{decoder_forward.1} parent=1 // pred_check_branch
      %83 = sbr.rel (0) target = $region45
    $region44: #{decoder_forward.1} parent=1 // pred_region
      _
    $region45: #{decoder_forward.1} parent=1 // pred_fallthru
      _
    // Predicated region
    $region46: #{decoder_forward.1} parent=1 // pred_check
      _
    $region47: #{decoder_forward.1} parent=1 // pred_check_branch
      %85 = sbr.rel (0) target = $region49
    $region48: #{decoder_forward.1} parent=1 // pred_region
      _
    $region49: #{decoder_forward.1} parent=1 // pred_fallthru
      _
    // Predicated region
    $region50: #{decoder_forward.1} parent=1 // pred_check
      _
    $region51: #{decoder_forward.1} parent=1 // pred_check_branch
      %87 = sbr.rel (0) target = $region53
    $region52: #{decoder_forward.1} parent=1 // pred_region
      _
    $region53: #{decoder_forward.1} parent=1 // pred_fallthru
      _
    // Predicated region
    $region54: #{decoder_forward.1} parent=1 // pred_check
      _
    $region55: #{decoder_forward.1} parent=1 // pred_check_branch
      %89 = sbr.rel (0) target = $region57
    $region56: #{decoder_forward.1} parent=1 // pred_region
      _
    $region57: #{decoder_forward.1} parent=1 // pred_fallthru
      _
    // Predicated region
    $region58: #{decoder_forward.1} parent=1 // pred_check
      _
    $region59: #{decoder_forward.1} parent=1 // pred_check_branch
      %91 = sbr.rel (0) target = $region61
    $region60: #{decoder_forward.1} parent=1 // pred_region
      %92 = dma.done [#allocation6], 1024
    $region61: #{decoder_forward.1} parent=1 // pred_fallthru
      _
    // Predicated region
    $region62: #{decoder_forward.1} parent=1 // pred_check
      _
    $region63: #{decoder_forward.1} parent=1 // pred_check_branch
      %94 = sbr.rel (0) target = $region65
    $region64: #{decoder_forward.1} parent=1 // pred_region
      %95 = dma.done [#allocation8], 32768
    $region65: #{decoder_forward.1} parent=1 // pred_fallthru
      _
    // Predicated region
    $region66: #{decoder_forward.1} parent=1 // pred_check
      _
    $region67: #{decoder_forward.1} parent=1 // pred_check_branch
      %97 = sbr.rel (0) target = $region69
    $region68: #{decoder_forward.1} parent=1 // pred_region
      %98 = dma.done [#allocation8], 2048
    $region69: #{decoder_forward.1} parent=1 // pred_fallthru
      _
    // Predicated region
    $region70: #{decoder_forward.1} parent=1 // pred_check
      _
    $region71: #{decoder_forward.1} parent=1 // pred_check_branch
      %100 = sbr.rel (0) target = $region73
    $region72: #{decoder_forward.1} parent=1 // pred_region
      %101 = dma.done [#allocation11], 1024
    $region73: #{decoder_forward.1} parent=1 // pred_fallthru
      _
    %v103 = vld [vmem:[%s2] sm:$0xff]
    %v104 = vld [vmem:[%s2 + $0x8] sm:$0x3f]
    %v105 = vld [vmem:[#allocation10] sm:$0x3f]
    %v106 = vld [vmem:[#allocation10 + $0x8] sm:$0x3f]
    %v107 = vld [vmem:[#allocation10 + $0x10] sm:$0x3f]
    %v108 = vld [vmem:[#allocation10 + $0x18] sm:$0x3f]
    %v109 = vld [vmem:[#allocation10 + $0x20] sm:$0x3f]
    %v110 = vld [vmem:[#allocation10 + $0x28] sm:$0x3f]
    %v111 = vld [vmem:[#allocation10 + $0x30] sm:$0x3f]
    %v112 = vld [vmem:[#allocation10 + $0x38] sm:$0x3f]
    %v113 = vld [vmem:[%s0] sm:$0x3]
    %v114 = vpack.c.bf16 %v113, %v113
    %v115 = vld [vmem:[%s1] sm:$0xf]
    %v116 = vld [vmem:[%s1 + $0x4] sm:$0xf]
    %v117 = vld [vmem:[%s1 + $0x8] sm:$0xf]
    %v118 = vld [vmem:[%s1 + $0xc] sm:$0xf]
    %v119 = vlaneseq
    %v120 = vshrl.u32 %v119, 7
    %v121 = vsub.s32 0, %v120
    %v122 = vrot.slane %v103, %v121
    %v127 = vunpack.c.l.b16 %v115
    %v128 = vunpack.c.l.b16 %v116
    %v129 = vunpack.c.l.b16 %v117
    %v130 = vunpack.c.l.b16 %v118
    %v131 = vpack.c.b16 %v128, %v127
    %v132 = vpack.c.b16 %v130, %v129
    %vm135 = vcmask 261120
    %v137 = vsel %vm135, %v114, 0
    %139 = vmatprep.subr.bf16.mxu0 0
    %140 = vmatpush1.bf16.msra.mxu0 0
    %141 = vmatprep.subr.bf16.mxu0 0
    %142 = vmatpush1.bf16.msra.mxu0 0
    %143 = vmatprep.subr.bf16.mxu0 0
    %144 = vmatpush1.bf16.msra.mxu0 0
    %145 = vmatprep.subr.bf16.mxu0 0
    %146 = vmatpush1.bf16.msra.mxu0 0
    %147 = vmatprep.subr.bf16.mxu0 0
    %148 = vmatpush1.bf16.msra.mxu0 0
    %149 = vmatprep.subr.bf16.mxu0 0
    %150 = vmatpush1.bf16.msra.mxu0 0
    %151 = vmatprep.subr.bf16.mxu0 0
    %152 = vmatpush1.bf16.msra.mxu0 %v132
    %153 = vmatprep.subr.bf16.mxu0 0
    %154 = vmatpush1.bf16.msra.mxu0 %v131
    %155 = vmatprep.subr.bf16.mxu0 0
    %156 = vmatpush2.bf16.msra.mxu0 0
    %157 = vmatprep.subr.bf16.mxu0 0
    %158 = vmatpush2.bf16.msra.mxu0 0
    %159 = vmatprep.subr.bf16.mxu0 0
    %160 = vmatpush2.bf16.msra.mxu0 0
    %161 = vmatprep.subr.bf16.mxu0 0
    %162 = vmatpush2.bf16.msra.mxu0 0
    %163 = vmatprep.subr.bf16.mxu0 0
    %164 = vmatpush2.bf16.msra.mxu0 0
    %165 = vmatprep.subr.bf16.mxu0 0
    %166 = vmatpush2.bf16.msra.mxu0 0
    %167 = vmatprep.subr.bf16.mxu0 0
    %168 = vmatpush2.bf16.msra.mxu0 0
    %169 = vmatprep.subr.bf16.mxu0 0
    %170 = vmatpush2.bf16.msra.mxu0 0
    %171 = vmatprep.mubr.bf16.mxu0 0
    %172 = vmatmul.mubr.bf16.gmra.mxu0 %v137
    %v173 = vpop.f32.mrf.mxu0
    %v174 = vadd.f32 %v122, %v173
    %v175 = vpop.f32.mrf.mxu0
    %v176 = vpop.f32.mrf.mxu0
    %v177 = vpop.f32.mrf.mxu0
    %178 = vdwg.mxu0
    %v179 = vlaneseq
    %v180 = vshrl.u32 %v179, 7
    %v181 = vsub.s32 1, %v180
    %v182 = vrot.slane %v103, %v181
    %v183 = vmul.f32 %v174, %v182
    %v184 = vlaneseq
    %v185 = vshrl.u32 %v184, 7
    %v186 = vsub.s32 2, %v185
    %v187 = vrot.slane %v103, %v186
    %v188 = vadd.f32 %v183, %v187
    %v189 = vmax.f32 %v188, 0.0
    %v190 = vld [vmem:[%s1 + $0x10] sm:$0xf]
    %v191 = vld [vmem:[%s1 + $0x14] sm:$0xf]
    %v192 = vld [vmem:[%s1 + $0x18] sm:$0xf]
    %v193 = vld [vmem:[%s1 + $0x1c] sm:$0xf]
    %v194 = vlaneseq
    %v195 = vshrl.u32 %v194, 7
    %v196 = vsub.s32 3, %v195
    %v197 = vrot.slane %v103, %v196
    %v202 = vunpack.c.l.b16 %v190
    %v203 = vunpack.c.l.b16 %v191
    %v204 = vunpack.c.l.b16 %v192
    %v205 = vunpack.c.l.b16 %v193
    %v206 = vpack.c.b16 %v203, %v202
    %v207 = vpack.c.b16 %v205, %v204
    %210 = vmatprep.subr.bf16.mxu0 0
    %211 = vmatpush1.bf16.msra.mxu0 0
    %212 = vmatprep.subr.bf16.mxu0 0
    %213 = vmatpush1.bf16.msra.mxu0 0
    %214 = vmatprep.subr.bf16.mxu0 0
    %215 = vmatpush1.bf16.msra.mxu0 0
    %216 = vmatprep.subr.bf16.mxu0 0
    %217 = vmatpush1.bf16.msra.mxu0 0
    %218 = vmatprep.subr.bf16.mxu0 0
    %219 = vmatpush1.bf16.msra.mxu0 0
    %220 = vmatprep.subr.bf16.mxu0 0
    %221 = vmatpush1.bf16.msra.mxu0 0
    %222 = vmatprep.subr.bf16.mxu0 0
    %223 = vmatpush1.bf16.msra.mxu0 %v207
    %224 = vmatprep.subr.bf16.mxu0 0
    %225 = vmatpush1.bf16.msra.mxu0 %v206
    %226 = vmatprep.subr.bf16.mxu0 0
    %227 = vmatpush2.bf16.msra.mxu0 0
    %228 = vmatprep.subr.bf16.mxu0 0
    %229 = vmatpush2.bf16.msra.mxu0 0
    %230 = vmatprep.subr.bf16.mxu0 0
    %231 = vmatpush2.bf16.msra.mxu0 0
    %232 = vmatprep.subr.bf16.mxu0 0
    %233 = vmatpush2.bf16.msra.mxu0 0
    %234 = vmatprep.subr.bf16.mxu0 0
    %235 = vmatpush2.bf16.msra.mxu0 0
    %236 = vmatprep.subr.bf16.mxu0 0
    %237 = vmatpush2.bf16.msra.mxu0 0
    %238 = vmatprep.subr.bf16.mxu0 0
    %239 = vmatpush2.bf16.msra.mxu0 0
    %240 = vmatprep.subr.bf16.mxu0 0
    %241 = vmatpush2.bf16.msra.mxu0 0
    %242 = vmatprep.mubr.bf16.mxu0 0
    %243 = vmatmul.mubr.bf16.gmra.mxu0 %v137
    %v244 = vpop.f32.mrf.mxu0
    %v245 = vadd.f32 %v197, %v244
    %v246 = vpop.f32.mrf.mxu0
    %v247 = vpop.f32.mrf.mxu0
    %v248 = vpop.f32.mrf.mxu0
    %249 = vdwg.mxu0
    %v250 = vlaneseq
    %v251 = vshrl.u32 %v250, 7
    %v252 = vsub.s32 4, %v251
    %v253 = vrot.slane %v103, %v252
    %v254 = vmul.f32 %v245, %v253
    %v255 = vlaneseq
    %v256 = vshrl.u32 %v255, 7
    %v257 = vsub.s32 5, %v256
    %v258 = vrot.slane %v103, %v257
    %v259 = vadd.f32 %v254, %v258
    %v260 = vmax.f32 %v259, 0.0
    %v261 = vpack.c.bf16 %v189, %v189
    %v262 = vld [vmem:[%s1 + $0x20] sm:$0xf]
    %v263 = vld [vmem:[%s1 + $0x24] sm:$0xf]
    %v264 = vld [vmem:[%s1 + $0x28] sm:$0xf]
    %v265 = vld [vmem:[%s1 + $0x2c] sm:$0xf]
    %v266 = vlaneseq
    %v267 = vshrl.u32 %v266, 7
    %v268 = vsub.s32 6, %v267
    %v269 = vrot.slane %v103, %v268
    %v274 = vunpack.c.l.b16 %v262
    %v275 = vunpack.c.l.b16 %v263
    %v276 = vunpack.c.l.b16 %v264
    %v277 = vunpack.c.l.b16 %v265
    %v278 = vpack.c.b16 %v275, %v274
    %v279 = vpack.c.b16 %v277, %v276
    %v283 = vsel %vm135, %v261, 0
    %285 = vmatprep.subr.bf16.mxu0 0
    %286 = vmatpush1.bf16.msra.mxu0 0
    %287 = vmatprep.subr.bf16.mxu0 0
    %288 = vmatpush1.bf16.msra.mxu0 0
    %289 = vmatprep.subr.bf16.mxu0 0
    %290 = vmatpush1.bf16.msra.mxu0 0
    %291 = vmatprep.subr.bf16.mxu0 0
    %292 = vmatpush1.bf16.msra.mxu0 0
    %293 = vmatprep.subr.bf16.mxu0 0
    %294 = vmatpush1.bf16.msra.mxu0 0
    %295 = vmatprep.subr.bf16.mxu0 0
    %296 = vmatpush1.bf16.msra.mxu0 0
    %297 = vmatprep.subr.bf16.mxu0 0
    %298 = vmatpush1.bf16.msra.mxu0 %v279
    %299 = vmatprep.subr.bf16.mxu0 0
    %300 = vmatpush1.bf16.msra.mxu0 %v278
    %301 = vmatprep.subr.bf16.mxu0 0
    %302 = vmatpush2.bf16.msra.mxu0 0
    %303 = vmatprep.subr.bf16.mxu0 0
    %304 = vmatpush2.bf16.msra.mxu0 0
    %305 = vmatprep.subr.bf16.mxu0 0
    %306 = vmatpush2.bf16.msra.mxu0 0
    %307 = vmatprep.subr.bf16.mxu0 0
    %308 = vmatpush2.bf16.msra.mxu0 0
    %309 = vmatprep.subr.bf16.mxu0 0
    %310 = vmatpush2.bf16.msra.mxu0 0
    %311 = vmatprep.subr.bf16.mxu0 0
    %312 = vmatpush2.bf16.msra.mxu0 0
    %313 = vmatprep.subr.bf16.mxu0 0
    %314 = vmatpush2.bf16.msra.mxu0 0
    %315 = vmatprep.subr.bf16.mxu0 0
    %316 = vmatpush2.bf16.msra.mxu0 0
    %317 = vmatprep.mubr.bf16.mxu0 0
    %318 = vmatmul.mubr.bf16.gmra.mxu0 %v283
    %v319 = vpop.f32.mrf.mxu0
    %v320 = vadd.f32 %v269, %v319
    %v321 = vpop.f32.mrf.mxu0
    %v322 = vpop.f32.mrf.mxu0
    %v323 = vpop.f32.mrf.mxu0
    %324 = vdwg.mxu0
    %vm325 = vcmask 254976
    %326 = vst.msk [vmem:[#allocation2] sm:$0x3] %vm325, %v320
    %v327 = vld [vmem:[%s1 + $0x30] sm:$0xf]
    %v328 = vld [vmem:[%s1 + $0x34] sm:$0xf]
    %v329 = vld [vmem:[%s1 + $0x38] sm:$0xf]
    %v330 = vld [vmem:[%s1 + $0x3c] sm:$0xf]
    %v331 = vlaneseq
    %v332 = vshrl.u32 %v331, 7
    %v333 = vsub.s32 7, %v332
    %v334 = vrot.slane %v103, %v333
    %v339 = vunpack.c.l.b16 %v327
    %v340 = vunpack.c.l.b16 %v328
    %v341 = vunpack.c.l.b16 %v329
    %v342 = vunpack.c.l.b16 %v330
    %v343 = vpack.c.b16 %v340, %v339
    %v344 = vpack.c.b16 %v342, %v341
    %347 = vmatprep.subr.bf16.mxu0 0
    %348 = vmatpush1.bf16.msra.mxu0 0
    %349 = vmatprep.subr.bf16.mxu0 0
    %350 = vmatpush1.bf16.msra.mxu0 0
    %351 = vmatprep.subr.bf16.mxu0 0
    %352 = vmatpush1.bf16.msra.mxu0 0
    %353 = vmatprep.subr.bf16.mxu0 0
    %354 = vmatpush1.bf16.msra.mxu0 0
    %355 = vmatprep.subr.bf16.mxu0 0
    %356 = vmatpush1.bf16.msra.mxu0 0
    %357 = vmatprep.subr.bf16.mxu0 0
    %358 = vmatpush1.bf16.msra.mxu0 0
    %359 = vmatprep.subr.bf16.mxu0 0
    %360 = vmatpush1.bf16.msra.mxu0 %v344
    %361 = vmatprep.subr.bf16.mxu0 0
    %362 = vmatpush1.bf16.msra.mxu0 %v343
    %363 = vmatprep.subr.bf16.mxu0 0
    %364 = vmatpush2.bf16.msra.mxu0 0
    %365 = vmatprep.subr.bf16.mxu0 0
    %366 = vmatpush2.bf16.msra.mxu0 0
    %367 = vmatprep.subr.bf16.mxu0 0
    %368 = vmatpush2.bf16.msra.mxu0 0
    %369 = vmatprep.subr.bf16.mxu0 0
    %370 = vmatpush2.bf16.msra.mxu0 0
    %371 = vmatprep.subr.bf16.mxu0 0
    %372 = vmatpush2.bf16.msra.mxu0 0
    %373 = vmatprep.subr.bf16.mxu0 0
    %374 = vmatpush2.bf16.msra.mxu0 0
    %375 = vmatprep.subr.bf16.mxu0 0
    %376 = vmatpush2.bf16.msra.mxu0 0
    %377 = vmatprep.subr.bf16.mxu0 0
    %378 = vmatpush2.bf16.msra.mxu0 0
    %379 = vmatprep.mubr.bf16.mxu0 0
    %380 = vmatmul.mubr.bf16.gmra.mxu0 %v283
    %v381 = vpop.f32.mrf.mxu0
    %v382 = vadd.f32 %v334, %v381
    %v383 = vpop.f32.mrf.mxu0
    %v384 = vpop.f32.mrf.mxu0
    %v385 = vpop.f32.mrf.mxu0
    %386 = vdwg.mxu0
    %387 = vst.msk [vmem:[#allocation2 + $0x2] sm:$0x3] %vm325, %v382
    %v388 = vld [vmem:[#allocation2] sm:$0xf]
    %v389 = vpack.c.bf16 %v388, %v388
    %v390 = vld [vmem:[%s1 + $0x60] sm:$0xf]
    %v391 = vld [vmem:[%s1 + $0x64] sm:$0xf]
    %v392 = vld [vmem:[%s1 + $0x68] sm:$0xf]
    %v393 = vld [vmem:[%s1 + $0x6c] sm:$0xf]
    %v394 = vlaneseq
    %v395 = vshrl.u32 %v394, 7
    %v396 = vsub.s32 2, %v395
    %v397 = vrot.slane %v104, %v396
    %v402 = vunpack.c.l.b16 %v390
    %v403 = vunpack.c.l.b16 %v391
    %v404 = vunpack.c.l.b16 %v392
    %v405 = vunpack.c.l.b16 %v393
    %v406 = vpack.c.b16 %v403, %v402
    %v407 = vpack.c.b16 %v405, %v404
    %v411 = vsel %vm135, %v389, 0
    %413 = vmatprep.subr.bf16.mxu0 0
    %414 = vmatpush1.bf16.msra.mxu0 0
    %415 = vmatprep.subr.bf16.mxu0 0
    %416 = vmatpush1.bf16.msra.mxu0 0
    %417 = vmatprep.subr.bf16.mxu0 0
    %418 = vmatpush1.bf16.msra.mxu0 0
    %419 = vmatprep.subr.bf16.mxu0 0
    %420 = vmatpush1.bf16.msra.mxu0 0
    %421 = vmatprep.subr.bf16.mxu0 0
    %422 = vmatpush1.bf16.msra.mxu0 0
    %423 = vmatprep.subr.bf16.mxu0 0
    %424 = vmatpush1.bf16.msra.mxu0 0
    %425 = vmatprep.subr.bf16.mxu0 0
    %426 = vmatpush1.bf16.msra.mxu0 %v407
    %427 = vmatprep.subr.bf16.mxu0 0
    %428 = vmatpush1.bf16.msra.mxu0 %v406
    %429 = vmatprep.subr.bf16.mxu0 0
    %430 = vmatpush2.bf16.msra.mxu0 0
    %431 = vmatprep.subr.bf16.mxu0 0
    %432 = vmatpush2.bf16.msra.mxu0 0
    %433 = vmatprep.subr.bf16.mxu0 0
    %434 = vmatpush2.bf16.msra.mxu0 0
    %435 = vmatprep.subr.bf16.mxu0 0
    %436 = vmatpush2.bf16.msra.mxu0 0
    %437 = vmatprep.subr.bf16.mxu0 0
    %438 = vmatpush2.bf16.msra.mxu0 0
    %439 = vmatprep.subr.bf16.mxu0 0
    %440 = vmatpush2.bf16.msra.mxu0 0
    %441 = vmatprep.subr.bf16.mxu0 0
    %442 = vmatpush2.bf16.msra.mxu0 0
    %443 = vmatprep.subr.bf16.mxu0 0
    %444 = vmatpush2.bf16.msra.mxu0 0
    %445 = vmatprep.mubr.bf16.mxu0 0
    %446 = vmatmul.mubr.bf16.gmra.mxu0 %v411
    %v447 = vpop.f32.mrf.mxu0
    %v448 = vadd.f32 %v397, %v447
    %v449 = vpop.f32.mrf.mxu0
    %v450 = vpop.f32.mrf.mxu0
    %v451 = vpop.f32.mrf.mxu0
    %452 = vdwg.mxu0
    %v453 = vmax.f32 %v448, 0.0
    %v454 = vpack.c.bf16 %v453, %v453
    %v455 = vld [vmem:[#allocation5] sm:$0xff]
    %v456 = vld [vmem:[#allocation5 + $0x8] sm:$0xff]
    %v457 = vld [vmem:[#allocation5 + $0x10] sm:$0xff]
    %v458 = vld [vmem:[#allocation5 + $0x18] sm:$0xff]
    %v459 = vld [vmem:[#allocation5 + $0x20] sm:$0xff]
    %v460 = vld [vmem:[#allocation5 + $0x28] sm:$0xff]
    %v461 = vld [vmem:[#allocation5 + $0x30] sm:$0xff]
    %v462 = vld [vmem:[#allocation5 + $0x38] sm:$0xff]
    %v463 = vlaneseq
    %v464 = vshrl.u32 %v463, 7
    %v465 = vsub.s32 0, %v464
    %v466 = vrot.slane %v105, %v465
    %v467 = vlaneseq
    %v468 = vshrl.u32 %v467, 7
    %v469 = vsub.s32 0, %v468
    %v470 = vrot.slane %v106, %v469
    %v471 = vlaneseq
    %v472 = vshrl.u32 %v471, 7
    %v473 = vsub.s32 0, %v472
    %v474 = vrot.slane %v107, %v473
    %v475 = vlaneseq
    %v476 = vshrl.u32 %v475, 7
    %v477 = vsub.s32 0, %v476
    %v478 = vrot.slane %v108, %v477
    %v487 = vunpack.c.l.b16 %v455
    %v488 = vunpack.c.h.b16 %v455
    %v489 = vunpack.c.l.b16 %v456
    %v490 = vunpack.c.h.b16 %v456
    %v491 = vunpack.c.l.b16 %v457
    %v492 = vunpack.c.h.b16 %v457
    %v493 = vunpack.c.l.b16 %v458
    %v494 = vunpack.c.h.b16 %v458
    %v495 = vunpack.c.l.b16 %v459
    %v496 = vunpack.c.h.b16 %v459
    %v497 = vunpack.c.l.b16 %v460
    %v498 = vunpack.c.h.b16 %v460
    %v499 = vunpack.c.l.b16 %v461
    %v500 = vunpack.c.h.b16 %v461
    %v501 = vunpack.c.l.b16 %v462
    %v502 = vunpack.c.h.b16 %v462
    %v503 = vpack.c.b16 %v491, %v487
    %v504 = vpack.c.b16 %v492, %v488
    %v505 = vpack.c.b16 %v493, %v489
    %v506 = vpack.c.b16 %v494, %v490
    %v507 = vpack.c.b16 %v499, %v495
    %v508 = vpack.c.b16 %v500, %v496
    %v509 = vpack.c.b16 %v501, %v497
    %v510 = vpack.c.b16 %v502, %v498
    %v520 = vsel %vm135, %v454, 0
    %522 = vmatprep.subr.bf16.mxu0 0
    %523 = vmatpush1.bf16.msra.mxu0 0
    %524 = vmatprep.subr.bf16.mxu0 0
    %525 = vmatpush1.bf16.msra.mxu0 0
    %526 = vmatprep.subr.bf16.mxu0 0
    %527 = vmatpush1.bf16.msra.mxu0 0
    %528 = vmatprep.subr.bf16.mxu0 0
    %529 = vmatpush1.bf16.msra.mxu0 0
    %530 = vmatprep.subr.bf16.mxu0 0
    %531 = vmatpush1.bf16.msra.mxu0 0
    %532 = vmatprep.subr.bf16.mxu0 0
    %533 = vmatpush1.bf16.msra.mxu0 0
    %534 = vmatprep.subr.bf16.mxu0 %v508
    %535 = vmatpush1.bf16.msra.mxu0 %v507
    %536 = vmatprep.subr.bf16.mxu0 %v504
    %537 = vmatpush1.bf16.msra.mxu0 %v503
    %538 = vmatprep.subr.bf16.mxu0 0
    %539 = vmatpush2.bf16.msra.mxu0 0
    %540 = vmatprep.subr.bf16.mxu0 0
    %541 = vmatpush2.bf16.msra.mxu0 0
    %542 = vmatprep.subr.bf16.mxu0 0
    %543 = vmatpush2.bf16.msra.mxu0 0
    %544 = vmatprep.subr.bf16.mxu0 0
    %545 = vmatpush2.bf16.msra.mxu0 0
    %546 = vmatprep.subr.bf16.mxu0 0
    %547 = vmatpush2.bf16.msra.mxu0 0
    %548 = vmatprep.subr.bf16.mxu0 0
    %549 = vmatpush2.bf16.msra.mxu0 0
    %550 = vmatprep.subr.bf16.mxu0 0
    %551 = vmatpush2.bf16.msra.mxu0 0
    %552 = vmatprep.subr.bf16.mxu0 0
    %553 = vmatpush2.bf16.msra.mxu0 0
    %554 = vmatprep.mubr.bf16.mxu0 0
    %555 = vmatmul.mubr.bf16.gmra.mxu0 %v520
    %v556 = vpop.f32.mrf.mxu0
    %v557 = vadd.f32 %v466, %v556
    %v558 = vpop.f32.mrf.mxu0
    %v559 = vadd.f32 %v470, %v558
    %v560 = vpop.f32.mrf.mxu0
    %v561 = vpop.f32.mrf.mxu0
    %562 = vdwg.mxu0
    %563 = vmatprep.subr.bf16.mxu0 0
    %564 = vmatpush1.bf16.msra.mxu0 0
    %565 = vmatprep.subr.bf16.mxu0 0
    %566 = vmatpush1.bf16.msra.mxu0 0
    %567 = vmatprep.subr.bf16.mxu0 0
    %568 = vmatpush1.bf16.msra.mxu0 0
    %569 = vmatprep.subr.bf16.mxu0 0
    %570 = vmatpush1.bf16.msra.mxu0 0
    %571 = vmatprep.subr.bf16.mxu0 0
    %572 = vmatpush1.bf16.msra.mxu0 0
    %573 = vmatprep.subr.bf16.mxu0 0
    %574 = vmatpush1.bf16.msra.mxu0 0
    %575 = vmatprep.subr.bf16.mxu0 %v510
    %576 = vmatpush1.bf16.msra.mxu0 %v509
    %577 = vmatprep.subr.bf16.mxu0 %v506
    %578 = vmatpush1.bf16.msra.mxu0 %v505
    %579 = vmatprep.subr.bf16.mxu0 0
    %580 = vmatpush2.bf16.msra.mxu0 0
    %581 = vmatprep.subr.bf16.mxu0 0
    %582 = vmatpush2.bf16.msra.mxu0 0
    %583 = vmatprep.subr.bf16.mxu0 0
    %584 = vmatpush2.bf16.msra.mxu0 0
    %585 = vmatprep.subr.bf16.mxu0 0
    %586 = vmatpush2.bf16.msra.mxu0 0
    %587 = vmatprep.subr.bf16.mxu0 0
    %588 = vmatpush2.bf16.msra.mxu0 0
    %589 = vmatprep.subr.bf16.mxu0 0
    %590 = vmatpush2.bf16.msra.mxu0 0
    %591 = vmatprep.subr.bf16.mxu0 0
    %592 = vmatpush2.bf16.msra.mxu0 0
    %593 = vmatprep.subr.bf16.mxu0 0
    %594 = vmatpush2.bf16.msra.mxu0 0
    %595 = vmatprep.mubr.bf16.mxu0 0
    %596 = vmatmul.mubr.bf16.gmra.mxu0 %v520
    %v597 = vpop.f32.mrf.mxu0
    %v598 = vadd.f32 %v474, %v597
    %v599 = vpop.f32.mrf.mxu0
    %v600 = vadd.f32 %v478, %v599
    %v601 = vpop.f32.mrf.mxu0
    %v602 = vpop.f32.mrf.mxu0
    %603 = vdwg.mxu0
    %v604 = vmax.f32 %v557, 0.0
    %v605 = vmax.f32 %v559, 0.0
    %v606 = vmax.f32 %v598, 0.0
    %v607 = vmax.f32 %v600, 0.0
    %v608 = vpack.c.bf16 %v604, %v604
    %v609 = vpack.c.bf16 %v605, %v605
    %v610 = vpack.c.bf16 %v606, %v606
    %v611 = vpack.c.bf16 %v607, %v607
    %v612 = vld [vmem:[#allocation7] sm:$0xff]
    %v613 = vld [vmem:[#allocation7 + $0x8] sm:$0xff]
    %v614 = vld [vmem:[#allocation7 + $0x10] sm:$0xff]
    %v615 = vld [vmem:[#allocation7 + $0x18] sm:$0xff]
    %v616 = vld [vmem:[#allocation7 + $0x20] sm:$0xff]
    %v617 = vld [vmem:[#allocation7 + $0x28] sm:$0xff]
    %v618 = vld [vmem:[#allocation7 + $0x30] sm:$0xff]
    %v619 = vld [vmem:[#allocation7 + $0x38] sm:$0xff]
    %v620 = vld [vmem:[#allocation7 + $0x40] sm:$0xff]
    %v621 = vld [vmem:[#allocation7 + $0x48] sm:$0xff]
    %v622 = vld [vmem:[#allocation7 + $0x50] sm:$0xff]
    %v623 = vld [vmem:[#allocation7 + $0x58] sm:$0xff]
    %v624 = vld [vmem:[#allocation7 + $0x60] sm:$0xff]
    %v625 = vld [vmem:[#allocation7 + $0x68] sm:$0xff]
    %v626 = vld [vmem:[#allocation7 + $0x70] sm:$0xff]
    %v627 = vld [vmem:[#allocation7 + $0x78] sm:$0xff]
    %v628 = vld [vmem:[#allocation7 + $0x80] sm:$0xff]
    %v629 = vld [vmem:[#allocation7 + $0x88] sm:$0xff]
    %v630 = vld [vmem:[#allocation7 + $0x90] sm:$0xff]
    %v631 = vld [vmem:[#allocation7 + $0x98] sm:$0xff]
    %v632 = vld [vmem:[#allocation7 + $0xa0] sm:$0xff]
    %v633 = vld [vmem:[#allocation7 + $0xa8] sm:$0xff]
    %v634 = vld [vmem:[#allocation7 + $0xb0] sm:$0xff]
    %v635 = vld [vmem:[#allocation7 + $0xb8] sm:$0xff]
    %v636 = vld [vmem:[#allocation7 + $0xc0] sm:$0xff]
    %v637 = vld [vmem:[#allocation7 + $0xc8] sm:$0xff]
    %v638 = vld [vmem:[#allocation7 + $0xd0] sm:$0xff]
    %v639 = vld [vmem:[#allocation7 + $0xd8] sm:$0xff]
    %v640 = vld [vmem:[#allocation7 + $0xe0] sm:$0xff]
    %v641 = vld [vmem:[#allocation7 + $0xe8] sm:$0xff]
    %v642 = vld [vmem:[#allocation7 + $0xf0] sm:$0xff]
    %v643 = vld [vmem:[#allocation7 + $0xf8] sm:$0xff]
    %v644 = vld [vmem:[#allocation7 + $0x100] sm:$0xff]
    %v645 = vld [vmem:[#allocation7 + $0x108] sm:$0xff]
    %v646 = vld [vmem:[#allocation7 + $0x110] sm:$0xff]
    %v647 = vld [vmem:[#allocation7 + $0x118] sm:$0xff]
    %v648 = vld [vmem:[#allocation7 + $0x120] sm:$0xff]
    %v649 = vld [vmem:[#allocation7 + $0x128] sm:$0xff]
    %v650 = vld [vmem:[#allocation7 + $0x130] sm:$0xff]
    %v651 = vld [vmem:[#allocation7 + $0x138] sm:$0xff]
    %v652 = vld [vmem:[#allocation7 + $0x140] sm:$0xff]
    %v653 = vld [vmem:[#allocation7 + $0x148] sm:$0xff]
    %v654 = vld [vmem:[#allocation7 + $0x150] sm:$0xff]
    %v655 = vld [vmem:[#allocation7 + $0x158] sm:$0xff]
    %v656 = vld [vmem:[#allocation7 + $0x160] sm:$0xff]
    %v657 = vld [vmem:[#allocation7 + $0x168] sm:$0xff]
    %v658 = vld [vmem:[#allocation7 + $0x170] sm:$0xff]
    %v659 = vld [vmem:[#allocation7 + $0x178] sm:$0xff]
    %v660 = vld [vmem:[#allocation7 + $0x180] sm:$0xff]
    %v661 = vld [vmem:[#allocation7 + $0x188] sm:$0xff]
    %v662 = vld [vmem:[#allocation7 + $0x190] sm:$0xff]
    %v663 = vld [vmem:[#allocation7 + $0x198] sm:$0xff]
    %v664 = vld [vmem:[#allocation7 + $0x1a0] sm:$0xff]
    %v665 = vld [vmem:[#allocation7 + $0x1a8] sm:$0xff]
    %v666 = vld [vmem:[#allocation7 + $0x1b0] sm:$0xff]
    %v667 = vld [vmem:[#allocation7 + $0x1b8] sm:$0xff]
    %v668 = vld [vmem:[#allocation7 + $0x1c0] sm:$0xff]
    %v669 = vld [vmem:[#allocation7 + $0x1c8] sm:$0xff]
    %v670 = vld [vmem:[#allocation7 + $0x1d0] sm:$0xff]
    %v671 = vld [vmem:[#allocation7 + $0x1d8] sm:$0xff]
    %v672 = vld [vmem:[#allocation7 + $0x1e0] sm:$0xff]
    %v673 = vld [vmem:[#allocation7 + $0x1e8] sm:$0xff]
    %v674 = vld [vmem:[#allocation7 + $0x1f0] sm:$0xff]
    %v675 = vld [vmem:[#allocation7 + $0x1f8] sm:$0xff]
    %v676 = vld [vmem:[#allocation7 + $0x200] sm:$0xff]
    %v677 = vld [vmem:[#allocation7 + $0x208] sm:$0xff]
    %v678 = vld [vmem:[#allocation7 + $0x210] sm:$0xff]
    %v679 = vld [vmem:[#allocation7 + $0x218] sm:$0xff]
    %v680 = vld [vmem:[#allocation7 + $0x220] sm:$0xff]
    %v681 = vld [vmem:[#allocation7 + $0x228] sm:$0xff]
    %v682 = vld [vmem:[#allocation7 + $0x230] sm:$0xff]
    %v683 = vld [vmem:[#allocation7 + $0x238] sm:$0xff]
    %v684 = vld [vmem:[#allocation7 + $0x240] sm:$0xff]
    %v685 = vld [vmem:[#allocation7 + $0x248] sm:$0xff]
    %v686 = vld [vmem:[#allocation7 + $0x250] sm:$0xff]
    %v687 = vld [vmem:[#allocation7 + $0x258] sm:$0xff]
    %v688 = vld [vmem:[#allocation7 + $0x260] sm:$0xff]
    %v689 = vld [vmem:[#allocation7 + $0x268] sm:$0xff]
    %v690 = vld [vmem:[#allocation7 + $0x270] sm:$0xff]
    %v691 = vld [vmem:[#allocation7 + $0x278] sm:$0xff]
    %v692 = vld [vmem:[#allocation7 + $0x280] sm:$0xff]
    %v693 = vld [vmem:[#allocation7 + $0x288] sm:$0xff]
    %v694 = vld [vmem:[#allocation7 + $0x290] sm:$0xff]
    %v695 = vld [vmem:[#allocation7 + $0x298] sm:$0xff]
    %v696 = vld [vmem:[#allocation7 + $0x2a0] sm:$0xff]
    %v697 = vld [vmem:[#allocation7 + $0x2a8] sm:$0xff]
    %v698 = vld [vmem:[#allocation7 + $0x2b0] sm:$0xff]
    %v699 = vld [vmem:[#allocation7 + $0x2b8] sm:$0xff]
    %v700 = vld [vmem:[#allocation7 + $0x2c0] sm:$0xff]
    %v701 = vld [vmem:[#allocation7 + $0x2c8] sm:$0xff]
    %v702 = vld [vmem:[#allocation7 + $0x2d0] sm:$0xff]
    %v703 = vld [vmem:[#allocation7 + $0x2d8] sm:$0xff]
    %v704 = vld [vmem:[#allocation7 + $0x2e0] sm:$0xff]
    %v705 = vld [vmem:[#allocation7 + $0x2e8] sm:$0xff]
    %v706 = vld [vmem:[#allocation7 + $0x2f0] sm:$0xff]
    %v707 = vld [vmem:[#allocation7 + $0x2f8] sm:$0xff]
    %v708 = vld [vmem:[#allocation7 + $0x300] sm:$0xff]
    %v709 = vld [vmem:[#allocation7 + $0x308] sm:$0xff]
    %v710 = vld [vmem:[#allocation7 + $0x310] sm:$0xff]
    %v711 = vld [vmem:[#allocation7 + $0x318] sm:$0xff]
    %v712 = vld [vmem:[#allocation7 + $0x320] sm:$0xff]
    %v713 = vld [vmem:[#allocation7 + $0x328] sm:$0xff]
    %v714 = vld [vmem:[#allocation7 + $0x330] sm:$0xff]
    %v715 = vld [vmem:[#allocation7 + $0x338] sm:$0xff]
    %v716 = vld [vmem:[#allocation7 + $0x340] sm:$0xff]
    %v717 = vld [vmem:[#allocation7 + $0x348] sm:$0xff]
    %v718 = vld [vmem:[#allocation7 + $0x350] sm:$0xff]
    %v719 = vld [vmem:[#allocation7 + $0x358] sm:$0xff]
    %v720 = vld [vmem:[#allocation7 + $0x360] sm:$0xff]
    %v721 = vld [vmem:[#allocation7 + $0x368] sm:$0xff]
    %v722 = vld [vmem:[#allocation7 + $0x370] sm:$0xff]
    %v723 = vld [vmem:[#allocation7 + $0x378] sm:$0xff]
    %v724 = vld [vmem:[#allocation7 + $0x380] sm:$0xff]
    %v725 = vld [vmem:[#allocation7 + $0x388] sm:$0xff]
    %v726 = vld [vmem:[#allocation7 + $0x390] sm:$0xff]
    %v727 = vld [vmem:[#allocation7 + $0x398] sm:$0xff]
    %v728 = vld [vmem:[#allocation7 + $0x3a0] sm:$0xff]
    %v729 = vld [vmem:[#allocation7 + $0x3a8] sm:$0xff]
    %v730 = vld [vmem:[#allocation7 + $0x3b0] sm:$0xff]
    %v731 = vld [vmem:[#allocation7 + $0x3b8] sm:$0xff]
    %v732 = vld [vmem:[#allocation7 + $0x3c0] sm:$0xff]
    %v733 = vld [vmem:[#allocation7 + $0x3c8] sm:$0xff]
    %v734 = vld [vmem:[#allocation7 + $0x3d0] sm:$0xff]
    %v735 = vld [vmem:[#allocation7 + $0x3d8] sm:$0xff]
    %v736 = vld [vmem:[#allocation7 + $0x3e0] sm:$0xff]
    %v737 = vld [vmem:[#allocation7 + $0x3e8] sm:$0xff]
    %v738 = vld [vmem:[#allocation7 + $0x3f0] sm:$0xff]
    %v739 = vld [vmem:[#allocation7 + $0x3f8] sm:$0xff]
    %v740 = vld [vmem:[#allocation7 + $0x400] sm:$0xff]
    %v741 = vld [vmem:[#allocation7 + $0x408] sm:$0xff]
    %v742 = vld [vmem:[#allocation7 + $0x410] sm:$0xff]
    %v743 = vld [vmem:[#allocation7 + $0x418] sm:$0xff]
    %v744 = vld [vmem:[#allocation7 + $0x420] sm:$0xff]
    %v745 = vld [vmem:[#allocation7 + $0x428] sm:$0xff]
    %v746 = vld [vmem:[#allocation7 + $0x430] sm:$0xff]
    %v747 = vld [vmem:[#allocation7 + $0x438] sm:$0xff]
    %v748 = vld [vmem:[#allocation7 + $0x440] sm:$0xff]
    %v749 = vld [vmem:[#allocation7 + $0x448] sm:$0xff]
    %v750 = vld [vmem:[#allocation7 + $0x450] sm:$0xff]
    %v751 = vld [vmem:[#allocation7 + $0x458] sm:$0xff]
    %v752 = vld [vmem:[#allocation7 + $0x460] sm:$0xff]
    %v753 = vld [vmem:[#allocation7 + $0x468] sm:$0xff]
    %v754 = vld [vmem:[#allocation7 + $0x470] sm:$0xff]
    %v755 = vld [vmem:[#allocation7 + $0x478] sm:$0xff]
    %v756 = vld [vmem:[#allocation7 + $0x480] sm:$0xff]
    %v757 = vld [vmem:[#allocation7 + $0x488] sm:$0xff]
    %v758 = vld [vmem:[#allocation7 + $0x490] sm:$0xff]
    %v759 = vld [vmem:[#allocation7 + $0x498] sm:$0xff]
    %v760 = vld [vmem:[#allocation7 + $0x4a0] sm:$0xff]
    %v761 = vld [vmem:[#allocation7 + $0x4a8] sm:$0xff]
    %v762 = vld [vmem:[#allocation7 + $0x4b0] sm:$0xff]
    %v763 = vld [vmem:[#allocation7 + $0x4b8] sm:$0xff]
    %v764 = vld [vmem:[#allocation7 + $0x4c0] sm:$0xff]
    %v765 = vld [vmem:[#allocation7 + $0x4c8] sm:$0xff]
    %v766 = vld [vmem:[#allocation7 + $0x4d0] sm:$0xff]
    %v767 = vld [vmem:[#allocation7 + $0x4d8] sm:$0xff]
    %v768 = vld [vmem:[#allocation7 + $0x4e0] sm:$0xff]
    %v769 = vld [vmem:[#allocation7 + $0x4e8] sm:$0xff]
    %v770 = vld [vmem:[#allocation7 + $0x4f0] sm:$0xff]
    %v771 = vld [vmem:[#allocation7 + $0x4f8] sm:$0xff]
    %v772 = vld [vmem:[#allocation7 + $0x500] sm:$0xff]
    %v773 = vld [vmem:[#allocation7 + $0x508] sm:$0xff]
    %v774 = vld [vmem:[#allocation7 + $0x510] sm:$0xff]
    %v775 = vld [vmem:[#allocation7 + $0x518] sm:$0xff]
    %v776 = vld [vmem:[#allocation7 + $0x520] sm:$0xff]
    %v777 = vld [vmem:[#allocation7 + $0x528] sm:$0xff]
    %v778 = vld [vmem:[#allocation7 + $0x530] sm:$0xff]
    %v779 = vld [vmem:[#allocation7 + $0x538] sm:$0xff]
    %v780 = vld [vmem:[#allocation7 + $0x540] sm:$0xff]
    %v781 = vld [vmem:[#allocation7 + $0x548] sm:$0xff]
    %v782 = vld [vmem:[#allocation7 + $0x550] sm:$0xff]
    %v783 = vld [vmem:[#allocation7 + $0x558] sm:$0xff]
    %v784 = vld [vmem:[#allocation7 + $0x560] sm:$0xff]
    %v785 = vld [vmem:[#allocation7 + $0x568] sm:$0xff]
    %v786 = vld [vmem:[#allocation7 + $0x570] sm:$0xff]
    %v787 = vld [vmem:[#allocation7 + $0x578] sm:$0xff]
    %v788 = vld [vmem:[#allocation7 + $0x580] sm:$0xff]
    %v789 = vld [vmem:[#allocation7 + $0x588] sm:$0xff]
    %v790 = vld [vmem:[#allocation7 + $0x590] sm:$0xff]
    %v791 = vld [vmem:[#allocation7 + $0x598] sm:$0xff]
    %v792 = vld [vmem:[#allocation7 + $0x5a0] sm:$0xff]
    %v793 = vld [vmem:[#allocation7 + $0x5a8] sm:$0xff]
    %v794 = vld [vmem:[#allocation7 + $0x5b0] sm:$0xff]
    %v795 = vld [vmem:[#allocation7 + $0x5b8] sm:$0xff]
    %v796 = vld [vmem:[#allocation7 + $0x5c0] sm:$0xff]
    %v797 = vld [vmem:[#allocation7 + $0x5c8] sm:$0xff]
    %v798 = vld [vmem:[#allocation7 + $0x5d0] sm:$0xff]
    %v799 = vld [vmem:[#allocation7 + $0x5d8] sm:$0xff]
    %v800 = vld [vmem:[#allocation7 + $0x5e0] sm:$0xff]
    %v801 = vld [vmem:[#allocation7 + $0x5e8] sm:$0xff]
    %v802 = vld [vmem:[#allocation7 + $0x5f0] sm:$0xff]
    %v803 = vld [vmem:[#allocation7 + $0x5f8] sm:$0xff]
    %v804 = vld [vmem:[#allocation7 + $0x600] sm:$0xff]
    %v805 = vld [vmem:[#allocation7 + $0x608] sm:$0xff]
    %v806 = vld [vmem:[#allocation7 + $0x610] sm:$0xff]
    %v807 = vld [vmem:[#allocation7 + $0x618] sm:$0xff]
    %v808 = vld [vmem:[#allocation7 + $0x620] sm:$0xff]
    %v809 = vld [vmem:[#allocation7 + $0x628] sm:$0xff]
    %v810 = vld [vmem:[#allocation7 + $0x630] sm:$0xff]
    %v811 = vld [vmem:[#allocation7 + $0x638] sm:$0xff]
    %v812 = vld [vmem:[#allocation7 + $0x640] sm:$0xff]
    %v813 = vld [vmem:[#allocation7 + $0x648] sm:$0xff]
    %v814 = vld [vmem:[#allocation7 + $0x650] sm:$0xff]
    %v815 = vld [vmem:[#allocation7 + $0x658] sm:$0xff]
    %v816 = vld [vmem:[#allocation7 + $0x660] sm:$0xff]
    %v817 = vld [vmem:[#allocation7 + $0x668] sm:$0xff]
    %v818 = vld [vmem:[#allocation7 + $0x670] sm:$0xff]
    %v819 = vld [vmem:[#allocation7 + $0x678] sm:$0xff]
    %v820 = vld [vmem:[#allocation7 + $0x680] sm:$0xff]
    %v821 = vld [vmem:[#allocation7 + $0x688] sm:$0xff]
    %v822 = vld [vmem:[#allocation7 + $0x690] sm:$0xff]
    %v823 = vld [vmem:[#allocation7 + $0x698] sm:$0xff]
    %v824 = vld [vmem:[#allocation7 + $0x6a0] sm:$0xff]
    %v825 = vld [vmem:[#allocation7 + $0x6a8] sm:$0xff]
    %v826 = vld [vmem:[#allocation7 + $0x6b0] sm:$0xff]
    %v827 = vld [vmem:[#allocation7 + $0x6b8] sm:$0xff]
    %v828 = vld [vmem:[#allocation7 + $0x6c0] sm:$0xff]
    %v829 = vld [vmem:[#allocation7 + $0x6c8] sm:$0xff]
    %v830 = vld [vmem:[#allocation7 + $0x6d0] sm:$0xff]
    %v831 = vld [vmem:[#allocation7 + $0x6d8] sm:$0xff]
    %v832 = vld [vmem:[#allocation7 + $0x6e0] sm:$0xff]
    %v833 = vld [vmem:[#allocation7 + $0x6e8] sm:$0xff]
    %v834 = vld [vmem:[#allocation7 + $0x6f0] sm:$0xff]
    %v835 = vld [vmem:[#allocation7 + $0x6f8] sm:$0xff]
    %v836 = vld [vmem:[#allocation7 + $0x700] sm:$0xff]
    %v837 = vld [vmem:[#allocation7 + $0x708] sm:$0xff]
    %v838 = vld [vmem:[#allocation7 + $0x710] sm:$0xff]
    %v839 = vld [vmem:[#allocation7 + $0x718] sm:$0xff]
    %v840 = vld [vmem:[#allocation7 + $0x720] sm:$0xff]
    %v841 = vld [vmem:[#allocation7 + $0x728] sm:$0xff]
    %v842 = vld [vmem:[#allocation7 + $0x730] sm:$0xff]
    %v843 = vld [vmem:[#allocation7 + $0x738] sm:$0xff]
    %v844 = vld [vmem:[#allocation7 + $0x740] sm:$0xff]
    %v845 = vld [vmem:[#allocation7 + $0x748] sm:$0xff]
    %v846 = vld [vmem:[#allocation7 + $0x750] sm:$0xff]
    %v847 = vld [vmem:[#allocation7 + $0x758] sm:$0xff]
    %v848 = vld [vmem:[#allocation7 + $0x760] sm:$0xff]
    %v849 = vld [vmem:[#allocation7 + $0x768] sm:$0xff]
    %v850 = vld [vmem:[#allocation7 + $0x770] sm:$0xff]
    %v851 = vld [vmem:[#allocation7 + $0x778] sm:$0xff]
    %v852 = vld [vmem:[#allocation7 + $0x780] sm:$0xff]
    %v853 = vld [vmem:[#allocation7 + $0x788] sm:$0xff]
    %v854 = vld [vmem:[#allocation7 + $0x790] sm:$0xff]
    %v855 = vld [vmem:[#allocation7 + $0x798] sm:$0xff]
    %v856 = vld [vmem:[#allocation7 + $0x7a0] sm:$0xff]
    %v857 = vld [vmem:[#allocation7 + $0x7a8] sm:$0xff]
    %v858 = vld [vmem:[#allocation7 + $0x7b0] sm:$0xff]
    %v859 = vld [vmem:[#allocation7 + $0x7b8] sm:$0xff]
    %v860 = vld [vmem:[#allocation7 + $0x7c0] sm:$0xff]
    %v861 = vld [vmem:[#allocation7 + $0x7c8] sm:$0xff]
    %v862 = vld [vmem:[#allocation7 + $0x7d0] sm:$0xff]
    %v863 = vld [vmem:[#allocation7 + $0x7d8] sm:$0xff]
    %v864 = vld [vmem:[#allocation7 + $0x7e0] sm:$0xff]
    %v865 = vld [vmem:[#allocation7 + $0x7e8] sm:$0xff]
    %v866 = vld [vmem:[#allocation7 + $0x7f0] sm:$0xff]
    %v867 = vld [vmem:[#allocation7 + $0x7f8] sm:$0xff]
    %v868 = vlaneseq
    %v869 = vshrl.u32 %v868, 7
    %v870 = vsub.s32 1, %v869
    %v871 = vrot.slane %v105, %v870
    %v872 = vlaneseq
    %v873 = vshrl.u32 %v872, 7
    %v874 = vsub.s32 1, %v873
    %v875 = vrot.slane %v106, %v874
    %v876 = vlaneseq
    %v877 = vshrl.u32 %v876, 7
    %v878 = vsub.s32 1, %v877
    %v879 = vrot.slane %v107, %v878
    %v880 = vlaneseq
    %v881 = vshrl.u32 %v880, 7
    %v882 = vsub.s32 1, %v881
    %v883 = vrot.slane %v108, %v882
    %v884 = vlaneseq
    %v885 = vshrl.u32 %v884, 7
    %v886 = vsub.s32 1, %v885
    %v887 = vrot.slane %v109, %v886
    %v888 = vlaneseq
    %v889 = vshrl.u32 %v888, 7
    %v890 = vsub.s32 1, %v889
    %v891 = vrot.slane %v110, %v890
    %v892 = vlaneseq
    %v893 = vshrl.u32 %v892, 7
    %v894 = vsub.s32 1, %v893
    %v895 = vrot.slane %v111, %v894
    %v896 = vlaneseq
    %v897 = vshrl.u32 %v896, 7
    %v898 = vsub.s32 1, %v897
    %v899 = vrot.slane %v112, %v898
    %v1156 = vunpack.c.l.b16 %v612
    %v1157 = vunpack.c.h.b16 %v612
    %v1158 = vunpack.c.l.b16 %v613
    %v1159 = vunpack.c.h.b16 %v613
    %v1160 = vunpack.c.l.b16 %v614
    %v1161 = vunpack.c.h.b16 %v614
    %v1162 = vunpack.c.l.b16 %v615
    %v1163 = vunpack.c.h.b16 %v615
    %v1164 = vunpack.c.l.b16 %v616
    %v1165 = vunpack.c.h.b16 %v616
    %v1166 = vunpack.c.l.b16 %v617
    %v1167 = vunpack.c.h.b16 %v617
    %v1168 = vunpack.c.l.b16 %v618
    %v1169 = vunpack.c.h.b16 %v618
    %v1170 = vunpack.c.l.b16 %v619
    %v1171 = vunpack.c.h.b16 %v619
    %v1172 = vunpack.c.l.b16 %v620
    %v1173 = vunpack.c.h.b16 %v620
    %v1174 = vunpack.c.l.b16 %v621
    %v1175 = vunpack.c.h.b16 %v621
    %v1176 = vunpack.c.l.b16 %v622
    %v1177 = vunpack.c.h.b16 %v622
    %v1178 = vunpack.c.l.b16 %v623
    %v1179 = vunpack.c.h.b16 %v623
    %v1180 = vunpack.c.l.b16 %v624
    %v1181 = vunpack.c.h.b16 %v624
    %v1182 = vunpack.c.l.b16 %v625
    %v1183 = vunpack.c.h.b16 %v625
    %v1184 = vunpack.c.l.b16 %v626
    %v1185 = vunpack.c.h.b16 %v626
    %v1186 = vunpack.c.l.b16 %v627
    %v1187 = vunpack.c.h.b16 %v627
    %v1188 = vunpack.c.l.b16 %v628
    %v1189 = vunpack.c.h.b16 %v628
    %v1190 = vunpack.c.l.b16 %v629
    %v1191 = vunpack.c.h.b16 %v629
    %v1192 = vunpack.c.l.b16 %v630
    %v1193 = vunpack.c.h.b16 %v630
    %v1194 = vunpack.c.l.b16 %v631
    %v1195 = vunpack.c.h.b16 %v631
    %v1196 = vunpack.c.l.b16 %v632
    %v1197 = vunpack.c.h.b16 %v632
    %v1198 = vunpack.c.l.b16 %v633
    %v1199 = vunpack.c.h.b16 %v633
    %v1200 = vunpack.c.l.b16 %v634
    %v1201 = vunpack.c.h.b16 %v634
    %v1202 = vunpack.c.l.b16 %v635
    %v1203 = vunpack.c.h.b16 %v635
    %v1204 = vunpack.c.l.b16 %v636
    %v1205 = vunpack.c.h.b16 %v636
    %v1206 = vunpack.c.l.b16 %v637
    %v1207 = vunpack.c.h.b16 %v637
    %v1208 = vunpack.c.l.b16 %v638
    %v1209 = vunpack.c.h.b16 %v638
    %v1210 = vunpack.c.l.b16 %v639
    %v1211 = vunpack.c.h.b16 %v639
    %v1212 = vunpack.c.l.b16 %v640
    %v1213 = vunpack.c.h.b16 %v640
    %v1214 = vunpack.c.l.b16 %v641
    %v1215 = vunpack.c.h.b16 %v641
    %v1216 = vunpack.c.l.b16 %v642
    %v1217 = vunpack.c.h.b16 %v642
    %v1218 = vunpack.c.l.b16 %v643
    %v1219 = vunpack.c.h.b16 %v643
    %v1220 = vunpack.c.l.b16 %v644
    %v1221 = vunpack.c.h.b16 %v644
    %v1222 = vunpack.c.l.b16 %v645
    %v1223 = vunpack.c.h.b16 %v645
    %v1224 = vunpack.c.l.b16 %v646
    %v1225 = vunpack.c.h.b16 %v646
    %v1226 = vunpack.c.l.b16 %v647
    %v1227 = vunpack.c.h.b16 %v647
    %v1228 = vunpack.c.l.b16 %v648
    %v1229 = vunpack.c.h.b16 %v648
    %v1230 = vunpack.c.l.b16 %v649
    %v1231 = vunpack.c.h.b16 %v649
    %v1232 = vunpack.c.l.b16 %v650
    %v1233 = vunpack.c.h.b16 %v650
    %v1234 = vunpack.c.l.b16 %v651
    %v1235 = vunpack.c.h.b16 %v651
    %v1236 = vunpack.c.l.b16 %v652
    %v1237 = vunpack.c.h.b16 %v652
    %v1238 = vunpack.c.l.b16 %v653
    %v1239 = vunpack.c.h.b16 %v653
    %v1240 = vunpack.c.l.b16 %v654
    %v1241 = vunpack.c.h.b16 %v654
    %v1242 = vunpack.c.l.b16 %v655
    %v1243 = vunpack.c.h.b16 %v655
    %v1244 = vunpack.c.l.b16 %v656
    %v1245 = vunpack.c.h.b16 %v656
    %v1246 = vunpack.c.l.b16 %v657
    %v1247 = vunpack.c.h.b16 %v657
    %v1248 = vunpack.c.l.b16 %v658
    %v1249 = vunpack.c.h.b16 %v658
    %v1250 = vunpack.c.l.b16 %v659
    %v1251 = vunpack.c.h.b16 %v659
    %v1252 = vunpack.c.l.b16 %v660
    %v1253 = vunpack.c.h.b16 %v660
    %v1254 = vunpack.c.l.b16 %v661
    %v1255 = vunpack.c.h.b16 %v661
    %v1256 = vunpack.c.l.b16 %v662
    %v1257 = vunpack.c.h.b16 %v662
    %v1258 = vunpack.c.l.b16 %v663
    %v1259 = vunpack.c.h.b16 %v663
    %v1260 = vunpack.c.l.b16 %v664
    %v1261 = vunpack.c.h.b16 %v664
    %v1262 = vunpack.c.l.b16 %v665
    %v1263 = vunpack.c.h.b16 %v665
    %v1264 = vunpack.c.l.b16 %v666
    %v1265 = vunpack.c.h.b16 %v666
    %v1266 = vunpack.c.l.b16 %v667
    %v1267 = vunpack.c.h.b16 %v667
    %v1268 = vunpack.c.l.b16 %v668
    %v1269 = vunpack.c.h.b16 %v668
    %v1270 = vunpack.c.l.b16 %v669
    %v1271 = vunpack.c.h.b16 %v669
    %v1272 = vunpack.c.l.b16 %v670
    %v1273 = vunpack.c.h.b16 %v670
    %v1274 = vunpack.c.l.b16 %v671
    %v1275 = vunpack.c.h.b16 %v671
    %v1276 = vunpack.c.l.b16 %v672
    %v1277 = vunpack.c.h.b16 %v672
    %v1278 = vunpack.c.l.b16 %v673
    %v1279 = vunpack.c.h.b16 %v673
    %v1280 = vunpack.c.l.b16 %v674
    %v1281 = vunpack.c.h.b16 %v674
    %v1282 = vunpack.c.l.b16 %v675
    %v1283 = vunpack.c.h.b16 %v675
    %v1284 = vunpack.c.l.b16 %v676
    %v1285 = vunpack.c.h.b16 %v676
    %v1286 = vunpack.c.l.b16 %v677
    %v1287 = vunpack.c.h.b16 %v677
    %v1288 = vunpack.c.l.b16 %v678
    %v1289 = vunpack.c.h.b16 %v678
    %v1290 = vunpack.c.l.b16 %v679
    %v1291 = vunpack.c.h.b16 %v679
    %v1292 = vunpack.c.l.b16 %v680
    %v1293 = vunpack.c.h.b16 %v680
    %v1294 = vunpack.c.l.b16 %v681
    %v1295 = vunpack.c.h.b16 %v681
    %v1296 = vunpack.c.l.b16 %v682
    %v1297 = vunpack.c.h.b16 %v682
    %v1298 = vunpack.c.l.b16 %v683
    %v1299 = vunpack.c.h.b16 %v683
    %v1300 = vunpack.c.l.b16 %v684
    %v1301 = vunpack.c.h.b16 %v684
    %v1302 = vunpack.c.l.b16 %v685
    %v1303 = vunpack.c.h.b16 %v685
    %v1304 = vunpack.c.l.b16 %v686
    %v1305 = vunpack.c.h.b16 %v686
    %v1306 = vunpack.c.l.b16 %v687
    %v1307 = vunpack.c.h.b16 %v687
    %v1308 = vunpack.c.l.b16 %v688
    %v1309 = vunpack.c.h.b16 %v688
    %v1310 = vunpack.c.l.b16 %v689
    %v1311 = vunpack.c.h.b16 %v689
    %v1312 = vunpack.c.l.b16 %v690
    %v1313 = vunpack.c.h.b16 %v690
    %v1314 = vunpack.c.l.b16 %v691
    %v1315 = vunpack.c.h.b16 %v691
    %v1316 = vunpack.c.l.b16 %v692
    %v1317 = vunpack.c.h.b16 %v692
    %v1318 = vunpack.c.l.b16 %v693
    %v1319 = vunpack.c.h.b16 %v693
    %v1320 = vunpack.c.l.b16 %v694
    %v1321 = vunpack.c.h.b16 %v694
    %v1322 = vunpack.c.l.b16 %v695
    %v1323 = vunpack.c.h.b16 %v695
    %v1324 = vunpack.c.l.b16 %v696
    %v1325 = vunpack.c.h.b16 %v696
    %v1326 = vunpack.c.l.b16 %v697
    %v1327 = vunpack.c.h.b16 %v697
    %v1328 = vunpack.c.l.b16 %v698
    %v1329 = vunpack.c.h.b16 %v698
    %v1330 = vunpack.c.l.b16 %v699
    %v1331 = vunpack.c.h.b16 %v699
    %v1332 = vunpack.c.l.b16 %v700
    %v1333 = vunpack.c.h.b16 %v700
    %v1334 = vunpack.c.l.b16 %v701
    %v1335 = vunpack.c.h.b16 %v701
    %v1336 = vunpack.c.l.b16 %v702
    %v1337 = vunpack.c.h.b16 %v702
    %v1338 = vunpack.c.l.b16 %v703
    %v1339 = vunpack.c.h.b16 %v703
    %v1340 = vunpack.c.l.b16 %v704
    %v1341 = vunpack.c.h.b16 %v704
    %v1342 = vunpack.c.l.b16 %v705
    %v1343 = vunpack.c.h.b16 %v705
    %v1344 = vunpack.c.l.b16 %v706
    %v1345 = vunpack.c.h.b16 %v706
    %v1346 = vunpack.c.l.b16 %v707
    %v1347 = vunpack.c.h.b16 %v707
    %v1348 = vunpack.c.l.b16 %v708
    %v1349 = vunpack.c.h.b16 %v708
    %v1350 = vunpack.c.l.b16 %v709
    %v1351 = vunpack.c.h.b16 %v709
    %v1352 = vunpack.c.l.b16 %v710
    %v1353 = vunpack.c.h.b16 %v710
    %v1354 = vunpack.c.l.b16 %v711
    %v1355 = vunpack.c.h.b16 %v711
    %v1356 = vunpack.c.l.b16 %v712
    %v1357 = vunpack.c.h.b16 %v712
    %v1358 = vunpack.c.l.b16 %v713
    %v1359 = vunpack.c.h.b16 %v713
    %v1360 = vunpack.c.l.b16 %v714
    %v1361 = vunpack.c.h.b16 %v714
    %v1362 = vunpack.c.l.b16 %v715
    %v1363 = vunpack.c.h.b16 %v715
    %v1364 = vunpack.c.l.b16 %v716
    %v1365 = vunpack.c.h.b16 %v716
    %v1366 = vunpack.c.l.b16 %v717
    %v1367 = vunpack.c.h.b16 %v717
    %v1368 = vunpack.c.l.b16 %v718
    %v1369 = vunpack.c.h.b16 %v718
    %v1370 = vunpack.c.l.b16 %v719
    %v1371 = vunpack.c.h.b16 %v719
    %v1372 = vunpack.c.l.b16 %v720
    %v1373 = vunpack.c.h.b16 %v720
    %v1374 = vunpack.c.l.b16 %v721
    %v1375 = vunpack.c.h.b16 %v721
    %v1376 = vunpack.c.l.b16 %v722
    %v1377 = vunpack.c.h.b16 %v722
    %v1378 = vunpack.c.l.b16 %v723
    %v1379 = vunpack.c.h.b16 %v723
    %v1380 = vunpack.c.l.b16 %v724
    %v1381 = vunpack.c.h.b16 %v724
    %v1382 = vunpack.c.l.b16 %v725
    %v1383 = vunpack.c.h.b16 %v725
    %v1384 = vunpack.c.l.b16 %v726
    %v1385 = vunpack.c.h.b16 %v726
    %v1386 = vunpack.c.l.b16 %v727
    %v1387 = vunpack.c.h.b16 %v727
    %v1388 = vunpack.c.l.b16 %v728
    %v1389 = vunpack.c.h.b16 %v728
    %v1390 = vunpack.c.l.b16 %v729
    %v1391 = vunpack.c.h.b16 %v729
    %v1392 = vunpack.c.l.b16 %v730
    %v1393 = vunpack.c.h.b16 %v730
    %v1394 = vunpack.c.l.b16 %v731
    %v1395 = vunpack.c.h.b16 %v731
    %v1396 = vunpack.c.l.b16 %v732
    %v1397 = vunpack.c.h.b16 %v732
    %v1398 = vunpack.c.l.b16 %v733
    %v1399 = vunpack.c.h.b16 %v733
    %v1400 = vunpack.c.l.b16 %v734
    %v1401 = vunpack.c.h.b16 %v734
    %v1402 = vunpack.c.l.b16 %v735
    %v1403 = vunpack.c.h.b16 %v735
    %v1404 = vunpack.c.l.b16 %v736
    %v1405 = vunpack.c.h.b16 %v736
    %v1406 = vunpack.c.l.b16 %v737
    %v1407 = vunpack.c.h.b16 %v737
    %v1408 = vunpack.c.l.b16 %v738
    %v1409 = vunpack.c.h.b16 %v738
    %v1410 = vunpack.c.l.b16 %v739
    %v1411 = vunpack.c.h.b16 %v739
    %v1412 = vunpack.c.l.b16 %v740
    %v1413 = vunpack.c.h.b16 %v740
    %v1414 = vunpack.c.l.b16 %v741
    %v1415 = vunpack.c.h.b16 %v741
    %v1416 = vunpack.c.l.b16 %v742
    %v1417 = vunpack.c.h.b16 %v742
    %v1418 = vunpack.c.l.b16 %v743
    %v1419 = vunpack.c.h.b16 %v743
    %v1420 = vunpack.c.l.b16 %v744
    %v1421 = vunpack.c.h.b16 %v744
    %v1422 = vunpack.c.l.b16 %v745
    %v1423 = vunpack.c.h.b16 %v745
    %v1424 = vunpack.c.l.b16 %v746
    %v1425 = vunpack.c.h.b16 %v746
    %v1426 = vunpack.c.l.b16 %v747
    %v1427 = vunpack.c.h.b16 %v747
    %v1428 = vunpack.c.l.b16 %v748
    %v1429 = vunpack.c.h.b16 %v748
    %v1430 = vunpack.c.l.b16 %v749
    %v1431 = vunpack.c.h.b16 %v749
    %v1432 = vunpack.c.l.b16 %v750
    %v1433 = vunpack.c.h.b16 %v750
    %v1434 = vunpack.c.l.b16 %v751
    %v1435 = vunpack.c.h.b16 %v751
    %v1436 = vunpack.c.l.b16 %v752
    %v1437 = vunpack.c.h.b16 %v752
    %v1438 = vunpack.c.l.b16 %v753
    %v1439 = vunpack.c.h.b16 %v753
    %v1440 = vunpack.c.l.b16 %v754
    %v1441 = vunpack.c.h.b16 %v754
    %v1442 = vunpack.c.l.b16 %v755
    %v1443 = vunpack.c.h.b16 %v755
    %v1444 = vunpack.c.l.b16 %v756
    %v1445 = vunpack.c.h.b16 %v756
    %v1446 = vunpack.c.l.b16 %v757
    %v1447 = vunpack.c.h.b16 %v757
    %v1448 = vunpack.c.l.b16 %v758
    %v1449 = vunpack.c.h.b16 %v758
    %v1450 = vunpack.c.l.b16 %v759
    %v1451 = vunpack.c.h.b16 %v759
    %v1452 = vunpack.c.l.b16 %v760
    %v1453 = vunpack.c.h.b16 %v760
    %v1454 = vunpack.c.l.b16 %v761
    %v1455 = vunpack.c.h.b16 %v761
    %v1456 = vunpack.c.l.b16 %v762
    %v1457 = vunpack.c.h.b16 %v762
    %v1458 = vunpack.c.l.b16 %v763
    %v1459 = vunpack.c.h.b16 %v763
    %v1460 = vunpack.c.l.b16 %v764
    %v1461 = vunpack.c.h.b16 %v764
    %v1462 = vunpack.c.l.b16 %v765
    %v1463 = vunpack.c.h.b16 %v765
    %v1464 = vunpack.c.l.b16 %v766
    %v1465 = vunpack.c.h.b16 %v766
    %v1466 = vunpack.c.l.b16 %v767
    %v1467 = vunpack.c.h.b16 %v767
    %v1468 = vunpack.c.l.b16 %v768
    %v1469 = vunpack.c.h.b16 %v768
    %v1470 = vunpack.c.l.b16 %v769
    %v1471 = vunpack.c.h.b16 %v769
    %v1472 = vunpack.c.l.b16 %v770
    %v1473 = vunpack.c.h.b16 %v770
    %v1474 = vunpack.c.l.b16 %v771
    %v1475 = vunpack.c.h.b16 %v771
    %v1476 = vunpack.c.l.b16 %v772
    %v1477 = vunpack.c.h.b16 %v772
    %v1478 = vunpack.c.l.b16 %v773
    %v1479 = vunpack.c.h.b16 %v773
    %v1480 = vunpack.c.l.b16 %v774
    %v1481 = vunpack.c.h.b16 %v774
    %v1482 = vunpack.c.l.b16 %v775
    %v1483 = vunpack.c.h.b16 %v775
    %v1484 = vunpack.c.l.b16 %v776
    %v1485 = vunpack.c.h.b16 %v776
    %v1486 = vunpack.c.l.b16 %v777
    %v1487 = vunpack.c.h.b16 %v777
    %v1488 = vunpack.c.l.b16 %v778
    %v1489 = vunpack.c.h.b16 %v778
    %v1490 = vunpack.c.l.b16 %v779
    %v1491 = vunpack.c.h.b16 %v779
    %v1492 = vunpack.c.l.b16 %v780
    %v1493 = vunpack.c.h.b16 %v780
    %v1494 = vunpack.c.l.b16 %v781
    %v1495 = vunpack.c.h.b16 %v781
    %v1496 = vunpack.c.l.b16 %v782
    %v1497 = vunpack.c.h.b16 %v782
    %v1498 = vunpack.c.l.b16 %v783
    %v1499 = vunpack.c.h.b16 %v783
    %v1500 = vunpack.c.l.b16 %v784
    %v1501 = vunpack.c.h.b16 %v784
    %v1502 = vunpack.c.l.b16 %v785
    %v1503 = vunpack.c.h.b16 %v785
    %v1504 = vunpack.c.l.b16 %v786
    %v1505 = vunpack.c.h.b16 %v786
    %v1506 = vunpack.c.l.b16 %v787
    %v1507 = vunpack.c.h.b16 %v787
    %v1508 = vunpack.c.l.b16 %v788
    %v1509 = vunpack.c.h.b16 %v788
    %v1510 = vunpack.c.l.b16 %v789
    %v1511 = vunpack.c.h.b16 %v789
    %v1512 = vunpack.c.l.b16 %v790
    %v1513 = vunpack.c.h.b16 %v790
    %v1514 = vunpack.c.l.b16 %v791
    %v1515 = vunpack.c.h.b16 %v791
    %v1516 = vunpack.c.l.b16 %v792
    %v1517 = vunpack.c.h.b16 %v792
    %v1518 = vunpack.c.l.b16 %v793
    %v1519 = vunpack.c.h.b16 %v793
    %v1520 = vunpack.c.l.b16 %v794
    %v1521 = vunpack.c.h.b16 %v794
    %v1522 = vunpack.c.l.b16 %v795
    %v1523 = vunpack.c.h.b16 %v795
    %v1524 = vunpack.c.l.b16 %v796
    %v1525 = vunpack.c.h.b16 %v796
    %v1526 = vunpack.c.l.b16 %v797
    %v1527 = vunpack.c.h.b16 %v797
    %v1528 = vunpack.c.l.b16 %v798
    %v1529 = vunpack.c.h.b16 %v798
    %v1530 = vunpack.c.l.b16 %v799
    %v1531 = vunpack.c.h.b16 %v799
    %v1532 = vunpack.c.l.b16 %v800
    %v1533 = vunpack.c.h.b16 %v800
    %v1534 = vunpack.c.l.b16 %v801
    %v1535 = vunpack.c.h.b16 %v801
    %v1536 = vunpack.c.l.b16 %v802
    %v1537 = vunpack.c.h.b16 %v802
    %v1538 = vunpack.c.l.b16 %v803
    %v1539 = vunpack.c.h.b16 %v803
    %v1540 = vunpack.c.l.b16 %v804
    %v1541 = vunpack.c.h.b16 %v804
    %v1542 = vunpack.c.l.b16 %v805
    %v1543 = vunpack.c.h.b16 %v805
    %v1544 = vunpack.c.l.b16 %v806
    %v1545 = vunpack.c.h.b16 %v806
    %v1546 = vunpack.c.l.b16 %v807
    %v1547 = vunpack.c.h.b16 %v807
    %v1548 = vunpack.c.l.b16 %v808
    %v1549 = vunpack.c.h.b16 %v808
    %v1550 = vunpack.c.l.b16 %v809
    %v1551 = vunpack.c.h.b16 %v809
    %v1552 = vunpack.c.l.b16 %v810
    %v1553 = vunpack.c.h.b16 %v810
    %v1554 = vunpack.c.l.b16 %v811
    %v1555 = vunpack.c.h.b16 %v811
    %v1556 = vunpack.c.l.b16 %v812
    %v1557 = vunpack.c.h.b16 %v812
    %v1558 = vunpack.c.l.b16 %v813
    %v1559 = vunpack.c.h.b16 %v813
    %v1560 = vunpack.c.l.b16 %v814
    %v1561 = vunpack.c.h.b16 %v814
    %v1562 = vunpack.c.l.b16 %v815
    %v1563 = vunpack.c.h.b16 %v815
    %v1564 = vunpack.c.l.b16 %v816
    %v1565 = vunpack.c.h.b16 %v816
    %v1566 = vunpack.c.l.b16 %v817
    %v1567 = vunpack.c.h.b16 %v817
    %v1568 = vunpack.c.l.b16 %v818
    %v1569 = vunpack.c.h.b16 %v818
    %v1570 = vunpack.c.l.b16 %v819
    %v1571 = vunpack.c.h.b16 %v819
    %v1572 = vunpack.c.l.b16 %v820
    %v1573 = vunpack.c.h.b16 %v820
    %v1574 = vunpack.c.l.b16 %v821
    %v1575 = vunpack.c.h.b16 %v821
    %v1576 = vunpack.c.l.b16 %v822
    %v1577 = vunpack.c.h.b16 %v822
    %v1578 = vunpack.c.l.b16 %v823
    %v1579 = vunpack.c.h.b16 %v823
    %v1580 = vunpack.c.l.b16 %v824
    %v1581 = vunpack.c.h.b16 %v824
    %v1582 = vunpack.c.l.b16 %v825
    %v1583 = vunpack.c.h.b16 %v825
    %v1584 = vunpack.c.l.b16 %v826
    %v1585 = vunpack.c.h.b16 %v826
    %v1586 = vunpack.c.l.b16 %v827
    %v1587 = vunpack.c.h.b16 %v827
    %v1588 = vunpack.c.l.b16 %v828
    %v1589 = vunpack.c.h.b16 %v828
    %v1590 = vunpack.c.l.b16 %v829
    %v1591 = vunpack.c.h.b16 %v829
    %v1592 = vunpack.c.l.b16 %v830
    %v1593 = vunpack.c.h.b16 %v830
    %v1594 = vunpack.c.l.b16 %v831
    %v1595 = vunpack.c.h.b16 %v831
    %v1596 = vunpack.c.l.b16 %v832
    %v1597 = vunpack.c.h.b16 %v832
    %v1598 = vunpack.c.l.b16 %v833
    %v1599 = vunpack.c.h.b16 %v833
    %v1600 = vunpack.c.l.b16 %v834
    %v1601 = vunpack.c.h.b16 %v834
    %v1602 = vunpack.c.l.b16 %v835
    %v1603 = vunpack.c.h.b16 %v835
    %v1604 = vunpack.c.l.b16 %v836
    %v1605 = vunpack.c.h.b16 %v836
    %v1606 = vunpack.c.l.b16 %v837
    %v1607 = vunpack.c.h.b16 %v837
    %v1608 = vunpack.c.l.b16 %v838
    %v1609 = vunpack.c.h.b16 %v838
    %v1610 = vunpack.c.l.b16 %v839
    %v1611 = vunpack.c.h.b16 %v839
    %v1612 = vunpack.c.l.b16 %v840
    %v1613 = vunpack.c.h.b16 %v840
    %v1614 = vunpack.c.l.b16 %v841
    %v1615 = vunpack.c.h.b16 %v841
    %v1616 = vunpack.c.l.b16 %v842
    %v1617 = vunpack.c.h.b16 %v842
    %v1618 = vunpack.c.l.b16 %v843
    %v1619 = vunpack.c.h.b16 %v843
    %v1620 = vunpack.c.l.b16 %v844
    %v1621 = vunpack.c.h.b16 %v844
    %v1622 = vunpack.c.l.b16 %v845
    %v1623 = vunpack.c.h.b16 %v845
    %v1624 = vunpack.c.l.b16 %v846
    %v1625 = vunpack.c.h.b16 %v846
    %v1626 = vunpack.c.l.b16 %v847
    %v1627 = vunpack.c.h.b16 %v847
    %v1628 = vunpack.c.l.b16 %v848
    %v1629 = vunpack.c.h.b16 %v848
    %v1630 = vunpack.c.l.b16 %v849
    %v1631 = vunpack.c.h.b16 %v849
    %v1632 = vunpack.c.l.b16 %v850
    %v1633 = vunpack.c.h.b16 %v850
    %v1634 = vunpack.c.l.b16 %v851
    %v1635 = vunpack.c.h.b16 %v851
    %v1636 = vunpack.c.l.b16 %v852
    %v1637 = vunpack.c.h.b16 %v852
    %v1638 = vunpack.c.l.b16 %v853
    %v1639 = vunpack.c.h.b16 %v853
    %v1640 = vunpack.c.l.b16 %v854
    %v1641 = vunpack.c.h.b16 %v854
    %v1642 = vunpack.c.l.b16 %v855
    %v1643 = vunpack.c.h.b16 %v855
    %v1644 = vunpack.c.l.b16 %v856
    %v1645 = vunpack.c.h.b16 %v856
    %v1646 = vunpack.c.l.b16 %v857
    %v1647 = vunpack.c.h.b16 %v857
    %v1648 = vunpack.c.l.b16 %v858
    %v1649 = vunpack.c.h.b16 %v858
    %v1650 = vunpack.c.l.b16 %v859
    %v1651 = vunpack.c.h.b16 %v859
    %v1652 = vunpack.c.l.b16 %v860
    %v1653 = vunpack.c.h.b16 %v860
    %v1654 = vunpack.c.l.b16 %v861
    %v1655 = vunpack.c.h.b16 %v861
    %v1656 = vunpack.c.l.b16 %v862
    %v1657 = vunpack.c.h.b16 %v862
    %v1658 = vunpack.c.l.b16 %v863
    %v1659 = vunpack.c.h.b16 %v863
    %v1660 = vunpack.c.l.b16 %v864
    %v1661 = vunpack.c.h.b16 %v864
    %v1662 = vunpack.c.l.b16 %v865
    %v1663 = vunpack.c.h.b16 %v865
    %v1664 = vunpack.c.l.b16 %v866
    %v1665 = vunpack.c.h.b16 %v866
    %v1666 = vunpack.c.l.b16 %v867
    %v1667 = vunpack.c.h.b16 %v867
    %v1668 = vpack.c.b16 %v1164, %v1156
    %v1669 = vpack.c.b16 %v1165, %v1157
    %v1670 = vpack.c.b16 %v1166, %v1158
    %v1671 = vpack.c.b16 %v1167, %v1159
    %v1672 = vpack.c.b16 %v1168, %v1160
    %v1673 = vpack.c.b16 %v1169, %v1161
    %v1674 = vpack.c.b16 %v1170, %v1162
    %v1675 = vpack.c.b16 %v1171, %v1163
    %v1676 = vpack.c.b16 %v1180, %v1172
    %v1677 = vpack.c.b16 %v1181, %v1173
    %v1678 = vpack.c.b16 %v1182, %v1174
    %v1679 = vpack.c.b16 %v1183, %v1175
    %v1680 = vpack.c.b16 %v1184, %v1176
    %v1681 = vpack.c.b16 %v1185, %v1177
    %v1682 = vpack.c.b16 %v1186, %v1178
    %v1683 = vpack.c.b16 %v1187, %v1179
    %v1684 = vpack.c.b16 %v1196, %v1188
    %v1685 = vpack.c.b16 %v1197, %v1189
    %v1686 = vpack.c.b16 %v1198, %v1190
    %v1687 = vpack.c.b16 %v1199, %v1191
    %v1688 = vpack.c.b16 %v1200, %v1192
    %v1689 = vpack.c.b16 %v1201, %v1193
    %v1690 = vpack.c.b16 %v1202, %v1194
    %v1691 = vpack.c.b16 %v1203, %v1195
    %v1692 = vpack.c.b16 %v1212, %v1204
    %v1693 = vpack.c.b16 %v1213, %v1205
    %v1694 = vpack.c.b16 %v1214, %v1206
    %v1695 = vpack.c.b16 %v1215, %v1207
    %v1696 = vpack.c.b16 %v1216, %v1208
    %v1697 = vpack.c.b16 %v1217, %v1209
    %v1698 = vpack.c.b16 %v1218, %v1210
    %v1699 = vpack.c.b16 %v1219, %v1211
    %v1700 = vpack.c.b16 %v1228, %v1220
    %v1701 = vpack.c.b16 %v1229, %v1221
    %v1702 = vpack.c.b16 %v1230, %v1222
    %v1703 = vpack.c.b16 %v1231, %v1223
    %v1704 = vpack.c.b16 %v1232, %v1224
    %v1705 = vpack.c.b16 %v1233, %v1225
    %v1706 = vpack.c.b16 %v1234, %v1226
    %v1707 = vpack.c.b16 %v1235, %v1227
    %v1708 = vpack.c.b16 %v1244, %v1236
    %v1709 = vpack.c.b16 %v1245, %v1237
    %v1710 = vpack.c.b16 %v1246, %v1238
    %v1711 = vpack.c.b16 %v1247, %v1239
    %v1712 = vpack.c.b16 %v1248, %v1240
    %v1713 = vpack.c.b16 %v1249, %v1241
    %v1714 = vpack.c.b16 %v1250, %v1242
    %v1715 = vpack.c.b16 %v1251, %v1243
    %v1716 = vpack.c.b16 %v1260, %v1252
    %v1717 = vpack.c.b16 %v1261, %v1253
    %v1718 = vpack.c.b16 %v1262, %v1254
    %v1719 = vpack.c.b16 %v1263, %v1255
    %v1720 = vpack.c.b16 %v1264, %v1256
    %v1721 = vpack.c.b16 %v1265, %v1257
    %v1722 = vpack.c.b16 %v1266, %v1258
    %v1723 = vpack.c.b16 %v1267, %v1259
    %v1724 = vpack.c.b16 %v1276, %v1268
    %v1725 = vpack.c.b16 %v1277, %v1269
    %v1726 = vpack.c.b16 %v1278, %v1270
    %v1727 = vpack.c.b16 %v1279, %v1271
    %v1728 = vpack.c.b16 %v1280, %v1272
    %v1729 = vpack.c.b16 %v1281, %v1273
    %v1730 = vpack.c.b16 %v1282, %v1274
    %v1731 = vpack.c.b16 %v1283, %v1275
    %v1732 = vpack.c.b16 %v1292, %v1284
    %v1733 = vpack.c.b16 %v1293, %v1285
    %v1734 = vpack.c.b16 %v1294, %v1286
    %v1735 = vpack.c.b16 %v1295, %v1287
    %v1736 = vpack.c.b16 %v1296, %v1288
    %v1737 = vpack.c.b16 %v1297, %v1289
    %v1738 = vpack.c.b16 %v1298, %v1290
    %v1739 = vpack.c.b16 %v1299, %v1291
    %v1740 = vpack.c.b16 %v1308, %v1300
    %v1741 = vpack.c.b16 %v1309, %v1301
    %v1742 = vpack.c.b16 %v1310, %v1302
    %v1743 = vpack.c.b16 %v1311, %v1303
    %v1744 = vpack.c.b16 %v1312, %v1304
    %v1745 = vpack.c.b16 %v1313, %v1305
    %v1746 = vpack.c.b16 %v1314, %v1306
    %v1747 = vpack.c.b16 %v1315, %v1307
    %v1748 = vpack.c.b16 %v1324, %v1316
    %v1749 = vpack.c.b16 %v1325, %v1317
    %v1750 = vpack.c.b16 %v1326, %v1318
    %v1751 = vpack.c.b16 %v1327, %v1319
    %v1752 = vpack.c.b16 %v1328, %v1320
    %v1753 = vpack.c.b16 %v1329, %v1321
    %v1754 = vpack.c.b16 %v1330, %v1322
    %v1755 = vpack.c.b16 %v1331, %v1323
    %v1756 = vpack.c.b16 %v1340, %v1332
    %v1757 = vpack.c.b16 %v1341, %v1333
    %v1758 = vpack.c.b16 %v1342, %v1334
    %v1759 = vpack.c.b16 %v1343, %v1335
    %v1760 = vpack.c.b16 %v1344, %v1336
    %v1761 = vpack.c.b16 %v1345, %v1337
    %v1762 = vpack.c.b16 %v1346, %v1338
    %v1763 = vpack.c.b16 %v1347, %v1339
    %v1764 = vpack.c.b16 %v1356, %v1348
    %v1765 = vpack.c.b16 %v1357, %v1349
    %v1766 = vpack.c.b16 %v1358, %v1350
    %v1767 = vpack.c.b16 %v1359, %v1351
    %v1768 = vpack.c.b16 %v1360, %v1352
    %v1769 = vpack.c.b16 %v1361, %v1353
    %v1770 = vpack.c.b16 %v1362, %v1354
    %v1771 = vpack.c.b16 %v1363, %v1355
    %v1772 = vpack.c.b16 %v1372, %v1364
    %v1773 = vpack.c.b16 %v1373, %v1365
    %v1774 = vpack.c.b16 %v1374, %v1366
    %v1775 = vpack.c.b16 %v1375, %v1367
    %v1776 = vpack.c.b16 %v1376, %v1368
    %v1777 = vpack.c.b16 %v1377, %v1369
    %v1778 = vpack.c.b16 %v1378, %v1370
    %v1779 = vpack.c.b16 %v1379, %v1371
    %v1780 = vpack.c.b16 %v1388, %v1380
    %v1781 = vpack.c.b16 %v1389, %v1381
    %v1782 = vpack.c.b16 %v1390, %v1382
    %v1783 = vpack.c.b16 %v1391, %v1383
    %v1784 = vpack.c.b16 %v1392, %v1384
    %v1785 = vpack.c.b16 %v1393, %v1385
    %v1786 = vpack.c.b16 %v1394, %v1386
    %v1787 = vpack.c.b16 %v1395, %v1387
    %v1788 = vpack.c.b16 %v1404, %v1396
    %v1789 = vpack.c.b16 %v1405, %v1397
    %v1790 = vpack.c.b16 %v1406, %v1398
    %v1791 = vpack.c.b16 %v1407, %v1399
    %v1792 = vpack.c.b16 %v1408, %v1400
    %v1793 = vpack.c.b16 %v1409, %v1401
    %v1794 = vpack.c.b16 %v1410, %v1402
    %v1795 = vpack.c.b16 %v1411, %v1403
    %v1796 = vpack.c.b16 %v1420, %v1412
    %v1797 = vpack.c.b16 %v1421, %v1413
    %v1798 = vpack.c.b16 %v1422, %v1414
    %v1799 = vpack.c.b16 %v1423, %v1415
    %v1800 = vpack.c.b16 %v1424, %v1416
    %v1801 = vpack.c.b16 %v1425, %v1417
    %v1802 = vpack.c.b16 %v1426, %v1418
    %v1803 = vpack.c.b16 %v1427, %v1419
    %v1804 = vpack.c.b16 %v1436, %v1428
    %v1805 = vpack.c.b16 %v1437, %v1429
    %v1806 = vpack.c.b16 %v1438, %v1430
    %v1807 = vpack.c.b16 %v1439, %v1431
    %v1808 = vpack.c.b16 %v1440, %v1432
    %v1809 = vpack.c.b16 %v1441, %v1433
    %v1810 = vpack.c.b16 %v1442, %v1434
    %v1811 = vpack.c.b16 %v1443, %v1435
    %v1812 = vpack.c.b16 %v1452, %v1444
    %v1813 = vpack.c.b16 %v1453, %v1445
    %v1814 = vpack.c.b16 %v1454, %v1446
    %v1815 = vpack.c.b16 %v1455, %v1447
    %v1816 = vpack.c.b16 %v1456, %v1448
    %v1817 = vpack.c.b16 %v1457, %v1449
    %v1818 = vpack.c.b16 %v1458, %v1450
    %v1819 = vpack.c.b16 %v1459, %v1451
    %v1820 = vpack.c.b16 %v1468, %v1460
    %v1821 = vpack.c.b16 %v1469, %v1461
    %v1822 = vpack.c.b16 %v1470, %v1462
    %v1823 = vpack.c.b16 %v1471, %v1463
    %v1824 = vpack.c.b16 %v1472, %v1464
    %v1825 = vpack.c.b16 %v1473, %v1465
    %v1826 = vpack.c.b16 %v1474, %v1466
    %v1827 = vpack.c.b16 %v1475, %v1467
    %v1828 = vpack.c.b16 %v1484, %v1476
    %v1829 = vpack.c.b16 %v1485, %v1477
    %v1830 = vpack.c.b16 %v1486, %v1478
    %v1831 = vpack.c.b16 %v1487, %v1479
    %v1832 = vpack.c.b16 %v1488, %v1480
    %v1833 = vpack.c.b16 %v1489, %v1481
    %v1834 = vpack.c.b16 %v1490, %v1482
    %v1835 = vpack.c.b16 %v1491, %v1483
    %v1836 = vpack.c.b16 %v1500, %v1492
    %v1837 = vpack.c.b16 %v1501, %v1493
    %v1838 = vpack.c.b16 %v1502, %v1494
    %v1839 = vpack.c.b16 %v1503, %v1495
    %v1840 = vpack.c.b16 %v1504, %v1496
    %v1841 = vpack.c.b16 %v1505, %v1497
    %v1842 = vpack.c.b16 %v1506, %v1498
    %v1843 = vpack.c.b16 %v1507, %v1499
    %v1844 = vpack.c.b16 %v1516, %v1508
    %v1845 = vpack.c.b16 %v1517, %v1509
    %v1846 = vpack.c.b16 %v1518, %v1510
    %v1847 = vpack.c.b16 %v1519, %v1511
    %v1848 = vpack.c.b16 %v1520, %v1512
    %v1849 = vpack.c.b16 %v1521, %v1513
    %v1850 = vpack.c.b16 %v1522, %v1514
    %v1851 = vpack.c.b16 %v1523, %v1515
    %v1852 = vpack.c.b16 %v1532, %v1524
    %v1853 = vpack.c.b16 %v1533, %v1525
    %v1854 = vpack.c.b16 %v1534, %v1526
    %v1855 = vpack.c.b16 %v1535, %v1527
    %v1856 = vpack.c.b16 %v1536, %v1528
    %v1857 = vpack.c.b16 %v1537, %v1529
    %v1858 = vpack.c.b16 %v1538, %v1530
    %v1859 = vpack.c.b16 %v1539, %v1531
    %v1860 = vpack.c.b16 %v1548, %v1540
    %v1861 = vpack.c.b16 %v1549, %v1541
    %v1862 = vpack.c.b16 %v1550, %v1542
    %v1863 = vpack.c.b16 %v1551, %v1543
    %v1864 = vpack.c.b16 %v1552, %v1544
    %v1865 = vpack.c.b16 %v1553, %v1545
    %v1866 = vpack.c.b16 %v1554, %v1546
    %v1867 = vpack.c.b16 %v1555, %v1547
    %v1868 = vpack.c.b16 %v1564, %v1556
    %v1869 = vpack.c.b16 %v1565, %v1557
    %v1870 = vpack.c.b16 %v1566, %v1558
    %v1871 = vpack.c.b16 %v1567, %v1559
    %v1872 = vpack.c.b16 %v1568, %v1560
    %v1873 = vpack.c.b16 %v1569, %v1561
    %v1874 = vpack.c.b16 %v1570, %v1562
    %v1875 = vpack.c.b16 %v1571, %v1563
    %v1876 = vpack.c.b16 %v1580, %v1572
    %v1877 = vpack.c.b16 %v1581, %v1573
    %v1878 = vpack.c.b16 %v1582, %v1574
    %v1879 = vpack.c.b16 %v1583, %v1575
    %v1880 = vpack.c.b16 %v1584, %v1576
    %v1881 = vpack.c.b16 %v1585, %v1577
    %v1882 = vpack.c.b16 %v1586, %v1578
    %v1883 = vpack.c.b16 %v1587, %v1579
    %v1884 = vpack.c.b16 %v1596, %v1588
    %v1885 = vpack.c.b16 %v1597, %v1589
    %v1886 = vpack.c.b16 %v1598, %v1590
    %v1887 = vpack.c.b16 %v1599, %v1591
    %v1888 = vpack.c.b16 %v1600, %v1592
    %v1889 = vpack.c.b16 %v1601, %v1593
    %v1890 = vpack.c.b16 %v1602, %v1594
    %v1891 = vpack.c.b16 %v1603, %v1595
    %v1892 = vpack.c.b16 %v1612, %v1604
    %v1893 = vpack.c.b16 %v1613, %v1605
    %v1894 = vpack.c.b16 %v1614, %v1606
    %v1895 = vpack.c.b16 %v1615, %v1607
    %v1896 = vpack.c.b16 %v1616, %v1608
    %v1897 = vpack.c.b16 %v1617, %v1609
    %v1898 = vpack.c.b16 %v1618, %v1610
    %v1899 = vpack.c.b16 %v1619, %v1611
    %v1900 = vpack.c.b16 %v1628, %v1620
    %v1901 = vpack.c.b16 %v1629, %v1621
    %v1902 = vpack.c.b16 %v1630, %v1622
    %v1903 = vpack.c.b16 %v1631, %v1623
    %v1904 = vpack.c.b16 %v1632, %v1624
    %v1905 = vpack.c.b16 %v1633, %v1625
    %v1906 = vpack.c.b16 %v1634, %v1626
    %v1907 = vpack.c.b16 %v1635, %v1627
    %v1908 = vpack.c.b16 %v1644, %v1636
    %v1909 = vpack.c.b16 %v1645, %v1637
    %v1910 = vpack.c.b16 %v1646, %v1638
    %v1911 = vpack.c.b16 %v1647, %v1639
    %v1912 = vpack.c.b16 %v1648, %v1640
    %v1913 = vpack.c.b16 %v1649, %v1641
    %v1914 = vpack.c.b16 %v1650, %v1642
    %v1915 = vpack.c.b16 %v1651, %v1643
    %v1916 = vpack.c.b16 %v1660, %v1652
    %v1917 = vpack.c.b16 %v1661, %v1653
    %v1918 = vpack.c.b16 %v1662, %v1654
    %v1919 = vpack.c.b16 %v1663, %v1655
    %v1920 = vpack.c.b16 %v1664, %v1656
    %v1921 = vpack.c.b16 %v1665, %v1657
    %v1922 = vpack.c.b16 %v1666, %v1658
    %v1923 = vpack.c.b16 %v1667, %v1659
    %2180 = vmatprep.subr.bf16.mxu0 %v1725
    %2181 = vmatpush1.bf16.msra.mxu0 %v1724
    %2182 = vmatprep.subr.bf16.mxu0 %v1717
    %2183 = vmatpush1.bf16.msra.mxu0 %v1716
    %2184 = vmatprep.subr.bf16.mxu0 %v1709
    %2185 = vmatpush1.bf16.msra.mxu0 %v1708
    %2186 = vmatprep.subr.bf16.mxu0 %v1701
    %2187 = vmatpush1.bf16.msra.mxu0 %v1700
    %2188 = vmatprep.subr.bf16.mxu0 %v1693
    %2189 = vmatpush1.bf16.msra.mxu0 %v1692
    %2190 = vmatprep.subr.bf16.mxu0 %v1685
    %2191 = vmatpush1.bf16.msra.mxu0 %v1684
    %2192 = vmatprep.subr.bf16.mxu0 %v1677
    %2193 = vmatpush1.bf16.msra.mxu0 %v1676
    %2194 = vmatprep.subr.bf16.mxu0 %v1669
    %2195 = vmatpush1.bf16.msra.mxu0 %v1668
    %2196 = vmatprep.subr.bf16.mxu0 %v1789
    %2197 = vmatpush2.bf16.msra.mxu0 %v1788
    %2198 = vmatprep.subr.bf16.mxu0 %v1781
    %2199 = vmatpush2.bf16.msra.mxu0 %v1780
    %2200 = vmatprep.subr.bf16.mxu0 %v1773
    %2201 = vmatpush2.bf16.msra.mxu0 %v1772
    %2202 = vmatprep.subr.bf16.mxu0 %v1765
    %2203 = vmatpush2.bf16.msra.mxu0 %v1764
    %2204 = vmatprep.subr.bf16.mxu0 %v1757
    %2205 = vmatpush2.bf16.msra.mxu0 %v1756
    %2206 = vmatprep.subr.bf16.mxu0 %v1749
    %2207 = vmatpush2.bf16.msra.mxu0 %v1748
    %2208 = vmatprep.subr.bf16.mxu0 %v1741
    %2209 = vmatpush2.bf16.msra.mxu0 %v1740
    %2210 = vmatprep.subr.bf16.mxu0 %v1733
    %2211 = vmatpush2.bf16.msra.mxu0 %v1732
    %2212 = vmatprep.mubr.bf16.mxu0 %v609
    %2213 = vmatmul.mubr.bf16.gmra.mxu0 %v608
    %v2214 = vpop.f32.mrf.mxu0
    %v2215 = vadd.f32 %v871, %v2214
    %v2216 = vpop.f32.mrf.mxu0
    %v2217 = vadd.f32 %v875, %v2216
    %v2218 = vpop.f32.mrf.mxu0
    %v2219 = vpop.f32.mrf.mxu0
    %2220 = vdwg.mxu0
    %2221 = vmatprep.subr.bf16.mxu0 %v1853
    %2222 = vmatpush1.bf16.msra.mxu0 %v1852
    %2223 = vmatprep.subr.bf16.mxu0 %v1845
    %2224 = vmatpush1.bf16.msra.mxu0 %v1844
    %2225 = vmatprep.subr.bf16.mxu0 %v1837
    %2226 = vmatpush1.bf16.msra.mxu0 %v1836
    %2227 = vmatprep.subr.bf16.mxu0 %v1829
    %2228 = vmatpush1.bf16.msra.mxu0 %v1828
    %2229 = vmatprep.subr.bf16.mxu0 %v1821
    %2230 = vmatpush1.bf16.msra.mxu0 %v1820
    %2231 = vmatprep.subr.bf16.mxu0 %v1813
    %2232 = vmatpush1.bf16.msra.mxu0 %v1812
    %2233 = vmatprep.subr.bf16.mxu0 %v1805
    %2234 = vmatpush1.bf16.msra.mxu0 %v1804
    %2235 = vmatprep.subr.bf16.mxu0 %v1797
    %2236 = vmatpush1.bf16.msra.mxu0 %v1796
    %2237 = vmatprep.subr.bf16.mxu0 %v1917
    %2238 = vmatpush2.bf16.msra.mxu0 %v1916
    %2239 = vmatprep.subr.bf16.mxu0 %v1909
    %2240 = vmatpush2.bf16.msra.mxu0 %v1908
    %2241 = vmatprep.subr.bf16.mxu0 %v1901
    %2242 = vmatpush2.bf16.msra.mxu0 %v1900
    %2243 = vmatprep.subr.bf16.mxu0 %v1893
    %2244 = vmatpush2.bf16.msra.mxu0 %v1892
    %2245 = vmatprep.subr.bf16.mxu0 %v1885
    %2246 = vmatpush2.bf16.msra.mxu0 %v1884
    %2247 = vmatprep.subr.bf16.mxu0 %v1877
    %2248 = vmatpush2.bf16.msra.mxu0 %v1876
    %2249 = vmatprep.subr.bf16.mxu0 %v1869
    %2250 = vmatpush2.bf16.msra.mxu0 %v1868
    %2251 = vmatprep.subr.bf16.mxu0 %v1861
    %2252 = vmatpush2.bf16.msra.mxu0 %v1860
    %2253 = vmatprep.mubr.bf16.mxu0 %v611
    %2254 = vmatmul.mubr.bf16.gmra.mxu0 %v610
    %v2255 = vpop.f32.mrf.mxu0
    %v2256 = vadd.f32 %v2215, %v2255
    %v2257 = vpop.f32.mrf.mxu0
    %v2258 = vadd.f32 %v2217, %v2257
    %v2259 = vpop.f32.mrf.mxu0
    %v2260 = vpop.f32.mrf.mxu0
    %2261 = vdwg.mxu0
    %2262 = vmatprep.subr.bf16.mxu0 %v1727
    %2263 = vmatpush1.bf16.msra.mxu0 %v1726
    %2264 = vmatprep.subr.bf16.mxu0 %v1719
    %2265 = vmatpush1.bf16.msra.mxu0 %v1718
    %2266 = vmatprep.subr.bf16.mxu0 %v1711
    %2267 = vmatpush1.bf16.msra.mxu0 %v1710
    %2268 = vmatprep.subr.bf16.mxu0 %v1703
    %2269 = vmatpush1.bf16.msra.mxu0 %v1702
    %2270 = vmatprep.subr.bf16.mxu0 %v1695
    %2271 = vmatpush1.bf16.msra.mxu0 %v1694
    %2272 = vmatprep.subr.bf16.mxu0 %v1687
    %2273 = vmatpush1.bf16.msra.mxu0 %v1686
    %2274 = vmatprep.subr.bf16.mxu0 %v1679
    %2275 = vmatpush1.bf16.msra.mxu0 %v1678
    %2276 = vmatprep.subr.bf16.mxu0 %v1671
    %2277 = vmatpush1.bf16.msra.mxu0 %v1670
    %2278 = vmatprep.subr.bf16.mxu0 %v1791
    %2279 = vmatpush2.bf16.msra.mxu0 %v1790
    %2280 = vmatprep.subr.bf16.mxu0 %v1783
    %2281 = vmatpush2.bf16.msra.mxu0 %v1782
    %2282 = vmatprep.subr.bf16.mxu0 %v1775
    %2283 = vmatpush2.bf16.msra.mxu0 %v1774
    %2284 = vmatprep.subr.bf16.mxu0 %v1767
    %2285 = vmatpush2.bf16.msra.mxu0 %v1766
    %2286 = vmatprep.subr.bf16.mxu0 %v1759
    %2287 = vmatpush2.bf16.msra.mxu0 %v1758
    %2288 = vmatprep.subr.bf16.mxu0 %v1751
    %2289 = vmatpush2.bf16.msra.mxu0 %v1750
    %2290 = vmatprep.subr.bf16.mxu0 %v1743
    %2291 = vmatpush2.bf16.msra.mxu0 %v1742
    %2292 = vmatprep.subr.bf16.mxu0 %v1735
    %2293 = vmatpush2.bf16.msra.mxu0 %v1734
    %2294 = vmatprep.mubr.bf16.mxu0 %v609
    %2295 = vmatmul.mubr.bf16.gmra.mxu0 %v608
    %v2296 = vpop.f32.mrf.mxu0
    %v2297 = vadd.f32 %v879, %v2296
    %v2298 = vpop.f32.mrf.mxu0
    %v2299 = vadd.f32 %v883, %v2298
    %v2300 = vpop.f32.mrf.mxu0
    %v2301 = vpop.f32.mrf.mxu0
    %2302 = vdwg.mxu0
    %2303 = vmatprep.subr.bf16.mxu0 %v1855
    %2304 = vmatpush1.bf16.msra.mxu0 %v1854
    %2305 = vmatprep.subr.bf16.mxu0 %v1847
    %2306 = vmatpush1.bf16.msra.mxu0 %v1846
    %2307 = vmatprep.subr.bf16.mxu0 %v1839
    %2308 = vmatpush1.bf16.msra.mxu0 %v1838
    %2309 = vmatprep.subr.bf16.mxu0 %v1831
    %2310 = vmatpush1.bf16.msra.mxu0 %v1830
    %2311 = vmatprep.subr.bf16.mxu0 %v1823
    %2312 = vmatpush1.bf16.msra.mxu0 %v1822
    %2313 = vmatprep.subr.bf16.mxu0 %v1815
    %2314 = vmatpush1.bf16.msra.mxu0 %v1814
    %2315 = vmatprep.subr.bf16.mxu0 %v1807
    %2316 = vmatpush1.bf16.msra.mxu0 %v1806
    %2317 = vmatprep.subr.bf16.mxu0 %v1799
    %2318 = vmatpush1.bf16.msra.mxu0 %v1798
    %2319 = vmatprep.subr.bf16.mxu0 %v1919
    %2320 = vmatpush2.bf16.msra.mxu0 %v1918
    %2321 = vmatprep.subr.bf16.mxu0 %v1911
    %2322 = vmatpush2.bf16.msra.mxu0 %v1910
    %2323 = vmatprep.subr.bf16.mxu0 %v1903
    %2324 = vmatpush2.bf16.msra.mxu0 %v1902
    %2325 = vmatprep.subr.bf16.mxu0 %v1895
    %2326 = vmatpush2.bf16.msra.mxu0 %v1894
    %2327 = vmatprep.subr.bf16.mxu0 %v1887
    %2328 = vmatpush2.bf16.msra.mxu0 %v1886
    %2329 = vmatprep.subr.bf16.mxu0 %v1879
    %2330 = vmatpush2.bf16.msra.mxu0 %v1878
    %2331 = vmatprep.subr.bf16.mxu0 %v1871
    %2332 = vmatpush2.bf16.msra.mxu0 %v1870
    %2333 = vmatprep.subr.bf16.mxu0 %v1863
    %2334 = vmatpush2.bf16.msra.mxu0 %v1862
    %2335 = vmatprep.mubr.bf16.mxu0 %v611
    %2336 = vmatmul.mubr.bf16.gmra.mxu0 %v610
    %v2337 = vpop.f32.mrf.mxu0
    %v2338 = vadd.f32 %v2297, %v2337
    %v2339 = vpop.f32.mrf.mxu0
    %v2340 = vadd.f32 %v2299, %v2339
    %v2341 = vpop.f32.mrf.mxu0
    %v2342 = vpop.f32.mrf.mxu0
    %2343 = vdwg.mxu0
    %2344 = vmatprep.subr.bf16.mxu0 %v1729
    %2345 = vmatpush1.bf16.msra.mxu0 %v1728
    %2346 = vmatprep.subr.bf16.mxu0 %v1721
    %2347 = vmatpush1.bf16.msra.mxu0 %v1720
    %2348 = vmatprep.subr.bf16.mxu0 %v1713
    %2349 = vmatpush1.bf16.msra.mxu0 %v1712
    %2350 = vmatprep.subr.bf16.mxu0 %v1705
    %2351 = vmatpush1.bf16.msra.mxu0 %v1704
    %2352 = vmatprep.subr.bf16.mxu0 %v1697
    %2353 = vmatpush1.bf16.msra.mxu0 %v1696
    %2354 = vmatprep.subr.bf16.mxu0 %v1689
    %2355 = vmatpush1.bf16.msra.mxu0 %v1688
    %2356 = vmatprep.subr.bf16.mxu0 %v1681
    %2357 = vmatpush1.bf16.msra.mxu0 %v1680
    %2358 = vmatprep.subr.bf16.mxu0 %v1673
    %2359 = vmatpush1.bf16.msra.mxu0 %v1672
    %2360 = vmatprep.subr.bf16.mxu0 %v1793
    %2361 = vmatpush2.bf16.msra.mxu0 %v1792
    %2362 = vmatprep.subr.bf16.mxu0 %v1785
    %2363 = vmatpush2.bf16.msra.mxu0 %v1784
    %2364 = vmatprep.subr.bf16.mxu0 %v1777
    %2365 = vmatpush2.bf16.msra.mxu0 %v1776
    %2366 = vmatprep.subr.bf16.mxu0 %v1769
    %2367 = vmatpush2.bf16.msra.mxu0 %v1768
    %2368 = vmatprep.subr.bf16.mxu0 %v1761
    %2369 = vmatpush2.bf16.msra.mxu0 %v1760
    %2370 = vmatprep.subr.bf16.mxu0 %v1753
    %2371 = vmatpush2.bf16.msra.mxu0 %v1752
    %2372 = vmatprep.subr.bf16.mxu0 %v1745
    %2373 = vmatpush2.bf16.msra.mxu0 %v1744
    %2374 = vmatprep.subr.bf16.mxu0 %v1737
    %2375 = vmatpush2.bf16.msra.mxu0 %v1736
    %2376 = vmatprep.mubr.bf16.mxu0 %v609
    %2377 = vmatmul.mubr.bf16.gmra.mxu0 %v608
    %v2378 = vpop.f32.mrf.mxu0
    %v2379 = vadd.f32 %v887, %v2378
    %v2380 = vpop.f32.mrf.mxu0
    %v2381 = vadd.f32 %v891, %v2380
    %v2382 = vpop.f32.mrf.mxu0
    %v2383 = vpop.f32.mrf.mxu0
    %2384 = vdwg.mxu0
    %2385 = vmatprep.subr.bf16.mxu0 %v1857
    %2386 = vmatpush1.bf16.msra.mxu0 %v1856
    %2387 = vmatprep.subr.bf16.mxu0 %v1849
    %2388 = vmatpush1.bf16.msra.mxu0 %v1848
    %2389 = vmatprep.subr.bf16.mxu0 %v1841
    %2390 = vmatpush1.bf16.msra.mxu0 %v1840
    %2391 = vmatprep.subr.bf16.mxu0 %v1833
    %2392 = vmatpush1.bf16.msra.mxu0 %v1832
    %2393 = vmatprep.subr.bf16.mxu0 %v1825
    %2394 = vmatpush1.bf16.msra.mxu0 %v1824
    %2395 = vmatprep.subr.bf16.mxu0 %v1817
    %2396 = vmatpush1.bf16.msra.mxu0 %v1816
    %2397 = vmatprep.subr.bf16.mxu0 %v1809
    %2398 = vmatpush1.bf16.msra.mxu0 %v1808
    %2399 = vmatprep.subr.bf16.mxu0 %v1801
    %2400 = vmatpush1.bf16.msra.mxu0 %v1800
    %2401 = vmatprep.subr.bf16.mxu0 %v1921
    %2402 = vmatpush2.bf16.msra.mxu0 %v1920
    %2403 = vmatprep.subr.bf16.mxu0 %v1913
    %2404 = vmatpush2.bf16.msra.mxu0 %v1912
    %2405 = vmatprep.subr.bf16.mxu0 %v1905
    %2406 = vmatpush2.bf16.msra.mxu0 %v1904
    %2407 = vmatprep.subr.bf16.mxu0 %v1897
    %2408 = vmatpush2.bf16.msra.mxu0 %v1896
    %2409 = vmatprep.subr.bf16.mxu0 %v1889
    %2410 = vmatpush2.bf16.msra.mxu0 %v1888
    %2411 = vmatprep.subr.bf16.mxu0 %v1881
    %2412 = vmatpush2.bf16.msra.mxu0 %v1880
    %2413 = vmatprep.subr.bf16.mxu0 %v1873
    %2414 = vmatpush2.bf16.msra.mxu0 %v1872
    %2415 = vmatprep.subr.bf16.mxu0 %v1865
    %2416 = vmatpush2.bf16.msra.mxu0 %v1864
    %2417 = vmatprep.mubr.bf16.mxu0 %v611
    %2418 = vmatmul.mubr.bf16.gmra.mxu0 %v610
    %v2419 = vpop.f32.mrf.mxu0
    %v2420 = vadd.f32 %v2379, %v2419
    %v2421 = vpop.f32.mrf.mxu0
    %v2422 = vadd.f32 %v2381, %v2421
    %v2423 = vpop.f32.mrf.mxu0
    %v2424 = vpop.f32.mrf.mxu0
    %2425 = vdwg.mxu0
    %2426 = vmatprep.subr.bf16.mxu0 %v1731
    %2427 = vmatpush1.bf16.msra.mxu0 %v1730
    %2428 = vmatprep.subr.bf16.mxu0 %v1723
    %2429 = vmatpush1.bf16.msra.mxu0 %v1722
    %2430 = vmatprep.subr.bf16.mxu0 %v1715
    %2431 = vmatpush1.bf16.msra.mxu0 %v1714
    %2432 = vmatprep.subr.bf16.mxu0 %v1707
    %2433 = vmatpush1.bf16.msra.mxu0 %v1706
    %2434 = vmatprep.subr.bf16.mxu0 %v1699
    %2435 = vmatpush1.bf16.msra.mxu0 %v1698
    %2436 = vmatprep.subr.bf16.mxu0 %v1691
    %2437 = vmatpush1.bf16.msra.mxu0 %v1690
    %2438 = vmatprep.subr.bf16.mxu0 %v1683
    %2439 = vmatpush1.bf16.msra.mxu0 %v1682
    %2440 = vmatprep.subr.bf16.mxu0 %v1675
    %2441 = vmatpush1.bf16.msra.mxu0 %v1674
    %2442 = vmatprep.subr.bf16.mxu0 %v1795
    %2443 = vmatpush2.bf16.msra.mxu0 %v1794
    %2444 = vmatprep.subr.bf16.mxu0 %v1787
    %2445 = vmatpush2.bf16.msra.mxu0 %v1786
    %2446 = vmatprep.subr.bf16.mxu0 %v1779
    %2447 = vmatpush2.bf16.msra.mxu0 %v1778
    %2448 = vmatprep.subr.bf16.mxu0 %v1771
    %2449 = vmatpush2.bf16.msra.mxu0 %v1770
    %2450 = vmatprep.subr.bf16.mxu0 %v1763
    %2451 = vmatpush2.bf16.msra.mxu0 %v1762
    %2452 = vmatprep.subr.bf16.mxu0 %v1755
    %2453 = vmatpush2.bf16.msra.mxu0 %v1754
    %2454 = vmatprep.subr.bf16.mxu0 %v1747
    %2455 = vmatpush2.bf16.msra.mxu0 %v1746
    %2456 = vmatprep.subr.bf16.mxu0 %v1739
    %2457 = vmatpush2.bf16.msra.mxu0 %v1738
    %2458 = vmatprep.mubr.bf16.mxu0 %v609
    %2459 = vmatmul.mubr.bf16.gmra.mxu0 %v608
    %v2460 = vpop.f32.mrf.mxu0
    %v2461 = vadd.f32 %v895, %v2460
    %v2462 = vpop.f32.mrf.mxu0
    %v2463 = vadd.f32 %v899, %v2462
    %v2464 = vpop.f32.mrf.mxu0
    %v2465 = vpop.f32.mrf.mxu0
    %2466 = vdwg.mxu0
    %2467 = vmatprep.subr.bf16.mxu0 %v1859
    %2468 = vmatpush1.bf16.msra.mxu0 %v1858
    %2469 = vmatprep.subr.bf16.mxu0 %v1851
    %2470 = vmatpush1.bf16.msra.mxu0 %v1850
    %2471 = vmatprep.subr.bf16.mxu0 %v1843
    %2472 = vmatpush1.bf16.msra.mxu0 %v1842
    %2473 = vmatprep.subr.bf16.mxu0 %v1835
    %2474 = vmatpush1.bf16.msra.mxu0 %v1834
    %2475 = vmatprep.subr.bf16.mxu0 %v1827
    %2476 = vmatpush1.bf16.msra.mxu0 %v1826
    %2477 = vmatprep.subr.bf16.mxu0 %v1819
    %2478 = vmatpush1.bf16.msra.mxu0 %v1818
    %2479 = vmatprep.subr.bf16.mxu0 %v1811
    %2480 = vmatpush1.bf16.msra.mxu0 %v1810
    %2481 = vmatprep.subr.bf16.mxu0 %v1803
    %2482 = vmatpush1.bf16.msra.mxu0 %v1802
    %2483 = vmatprep.subr.bf16.mxu0 %v1923
    %2484 = vmatpush2.bf16.msra.mxu0 %v1922
    %2485 = vmatprep.subr.bf16.mxu0 %v1915
    %2486 = vmatpush2.bf16.msra.mxu0 %v1914
    %2487 = vmatprep.subr.bf16.mxu0 %v1907
    %2488 = vmatpush2.bf16.msra.mxu0 %v1906
    %2489 = vmatprep.subr.bf16.mxu0 %v1899
    %2490 = vmatpush2.bf16.msra.mxu0 %v1898
    %2491 = vmatprep.subr.bf16.mxu0 %v1891
    %2492 = vmatpush2.bf16.msra.mxu0 %v1890
    %2493 = vmatprep.subr.bf16.mxu0 %v1883
    %2494 = vmatpush2.bf16.msra.mxu0 %v1882
    %2495 = vmatprep.subr.bf16.mxu0 %v1875
    %2496 = vmatpush2.bf16.msra.mxu0 %v1874
    %2497 = vmatprep.subr.bf16.mxu0 %v1867
    %2498 = vmatpush2.bf16.msra.mxu0 %v1866
    %2499 = vmatprep.mubr.bf16.mxu0 %v611
    %2500 = vmatmul.mubr.bf16.gmra.mxu0 %v610
    %v2501 = vpop.f32.mrf.mxu0
    %v2502 = vadd.f32 %v2461, %v2501
    %v2503 = vpop.f32.mrf.mxu0
    %v2504 = vadd.f32 %v2463, %v2503
    %v2505 = vpop.f32.mrf.mxu0
    %v2506 = vpop.f32.mrf.mxu0
    %2507 = vdwg.mxu0
    %v2508 = vmax.f32 %v2256, 0.0
    %v2509 = vmax.f32 %v2258, 0.0
    %v2510 = vmax.f32 %v2338, 0.0
    %v2511 = vmax.f32 %v2340, 0.0
    %v2512 = vmax.f32 %v2420, 0.0
    %v2513 = vmax.f32 %v2422, 0.0
    %v2514 = vmax.f32 %v2502, 0.0
    %v2515 = vmax.f32 %v2504, 0.0
    %v2516 = vpack.c.bf16 %v2508, %v2508
    %v2517 = vpack.c.bf16 %v2509, %v2509
    %v2518 = vpack.c.bf16 %v2510, %v2510
    %v2519 = vpack.c.bf16 %v2511, %v2511
    %v2520 = vpack.c.bf16 %v2512, %v2512
    %v2521 = vpack.c.bf16 %v2513, %v2513
    %v2522 = vpack.c.bf16 %v2514, %v2514
    %v2523 = vpack.c.bf16 %v2515, %v2515
    %v2524 = vld [vmem:[%s5] sm:$0xf]
    %v2525 = vld [vmem:[%s5 + $0x4] sm:$0xf]
    %v2526 = vld [vmem:[%s5 + $0x8] sm:$0xf]
    %v2527 = vld [vmem:[%s5 + $0xc] sm:$0xf]
    %v2528 = vld [vmem:[%s5 + $0x10] sm:$0xf]
    %v2529 = vld [vmem:[%s5 + $0x14] sm:$0xf]
    %v2530 = vld [vmem:[%s5 + $0x18] sm:$0xf]
    %v2531 = vld [vmem:[%s5 + $0x1c] sm:$0xf]
    %v2532 = vld [vmem:[%s5 + $0x20] sm:$0xf]
    %v2533 = vld [vmem:[%s5 + $0x24] sm:$0xf]
    %v2534 = vld [vmem:[%s5 + $0x28] sm:$0xf]
    %v2535 = vld [vmem:[%s5 + $0x2c] sm:$0xf]
    %v2536 = vld [vmem:[%s5 + $0x30] sm:$0xf]
    %v2537 = vld [vmem:[%s5 + $0x34] sm:$0xf]
    %v2538 = vld [vmem:[%s5 + $0x38] sm:$0xf]
    %v2539 = vld [vmem:[%s5 + $0x3c] sm:$0xf]
    %v2540 = vld [vmem:[%s5 + $0x40] sm:$0xf]
    %v2541 = vld [vmem:[%s5 + $0x44] sm:$0xf]
    %v2542 = vld [vmem:[%s5 + $0x48] sm:$0xf]
    %v2543 = vld [vmem:[%s5 + $0x4c] sm:$0xf]
    %v2544 = vld [vmem:[%s5 + $0x50] sm:$0xf]
    %v2545 = vld [vmem:[%s5 + $0x54] sm:$0xf]
    %v2546 = vld [vmem:[%s5 + $0x58] sm:$0xf]
    %v2547 = vld [vmem:[%s5 + $0x5c] sm:$0xf]
    %v2548 = vld [vmem:[%s5 + $0x60] sm:$0xf]
    %v2549 = vld [vmem:[%s5 + $0x64] sm:$0xf]
    %v2550 = vld [vmem:[%s5 + $0x68] sm:$0xf]
    %v2551 = vld [vmem:[%s5 + $0x6c] sm:$0xf]
    %v2552 = vld [vmem:[%s5 + $0x70] sm:$0xf]
    %v2553 = vld [vmem:[%s5 + $0x74] sm:$0xf]
    %v2554 = vld [vmem:[%s5 + $0x78] sm:$0xf]
    %v2555 = vld [vmem:[%s5 + $0x7c] sm:$0xf]
    %v2556 = vld [vmem:[%s5 + $0x80] sm:$0xf]
    %v2557 = vld [vmem:[%s5 + $0x84] sm:$0xf]
    %v2558 = vld [vmem:[%s5 + $0x88] sm:$0xf]
    %v2559 = vld [vmem:[%s5 + $0x8c] sm:$0xf]
    %v2560 = vld [vmem:[%s5 + $0x90] sm:$0xf]
    %v2561 = vld [vmem:[%s5 + $0x94] sm:$0xf]
    %v2562 = vld [vmem:[%s5 + $0x98] sm:$0xf]
    %v2563 = vld [vmem:[%s5 + $0x9c] sm:$0xf]
    %v2564 = vld [vmem:[%s5 + $0xa0] sm:$0xf]
    %v2565 = vld [vmem:[%s5 + $0xa4] sm:$0xf]
    %v2566 = vld [vmem:[%s5 + $0xa8] sm:$0xf]
    %v2567 = vld [vmem:[%s5 + $0xac] sm:$0xf]
    %v2568 = vld [vmem:[%s5 + $0xb0] sm:$0xf]
    %v2569 = vld [vmem:[%s5 + $0xb4] sm:$0xf]
    %v2570 = vld [vmem:[%s5 + $0xb8] sm:$0xf]
    %v2571 = vld [vmem:[%s5 + $0xbc] sm:$0xf]
    %v2572 = vld [vmem:[%s5 + $0xc0] sm:$0xf]
    %v2573 = vld [vmem:[%s5 + $0xc4] sm:$0xf]
    %v2574 = vld [vmem:[%s5 + $0xc8] sm:$0xf]
    %v2575 = vld [vmem:[%s5 + $0xcc] sm:$0xf]
    %v2576 = vld [vmem:[%s5 + $0xd0] sm:$0xf]
    %v2577 = vld [vmem:[%s5 + $0xd4] sm:$0xf]
    %v2578 = vld [vmem:[%s5 + $0xd8] sm:$0xf]
    %v2579 = vld [vmem:[%s5 + $0xdc] sm:$0xf]
    %v2580 = vld [vmem:[%s5 + $0xe0] sm:$0xf]
    %v2581 = vld [vmem:[%s5 + $0xe4] sm:$0xf]
    %v2582 = vld [vmem:[%s5 + $0xe8] sm:$0xf]
    %v2583 = vld [vmem:[%s5 + $0xec] sm:$0xf]
    %v2584 = vld [vmem:[%s5 + $0xf0] sm:$0xf]
    %v2585 = vld [vmem:[%s5 + $0xf4] sm:$0xf]
    %v2586 = vld [vmem:[%s5 + $0xf8] sm:$0xf]
    %v2587 = vld [vmem:[%s5 + $0xfc] sm:$0xf]
    %v2588 = vld [vmem:[%s5 + $0x100] sm:$0xf]
    %v2589 = vld [vmem:[%s5 + $0x104] sm:$0xf]
    %v2590 = vld [vmem:[%s5 + $0x108] sm:$0xf]
    %v2591 = vld [vmem:[%s5 + $0x10c] sm:$0xf]
    %v2592 = vld [vmem:[%s5 + $0x110] sm:$0xf]
    %v2593 = vld [vmem:[%s5 + $0x114] sm:$0xf]
    %v2594 = vld [vmem:[%s5 + $0x118] sm:$0xf]
    %v2595 = vld [vmem:[%s5 + $0x11c] sm:$0xf]
    %v2596 = vld [vmem:[%s5 + $0x120] sm:$0xf]
    %v2597 = vld [vmem:[%s5 + $0x124] sm:$0xf]
    %v2598 = vld [vmem:[%s5 + $0x128] sm:$0xf]
    %v2599 = vld [vmem:[%s5 + $0x12c] sm:$0xf]
    %v2600 = vld [vmem:[%s5 + $0x130] sm:$0xf]
    %v2601 = vld [vmem:[%s5 + $0x134] sm:$0xf]
    %v2602 = vld [vmem:[%s5 + $0x138] sm:$0xf]
    %v2603 = vld [vmem:[%s5 + $0x13c] sm:$0xf]
    %v2604 = vld [vmem:[%s5 + $0x140] sm:$0xf]
    %v2605 = vld [vmem:[%s5 + $0x144] sm:$0xf]
    %v2606 = vld [vmem:[%s5 + $0x148] sm:$0xf]
    %v2607 = vld [vmem:[%s5 + $0x14c] sm:$0xf]
    %v2608 = vld [vmem:[%s5 + $0x150] sm:$0xf]
    %v2609 = vld [vmem:[%s5 + $0x154] sm:$0xf]
    %v2610 = vld [vmem:[%s5 + $0x158] sm:$0xf]
    %v2611 = vld [vmem:[%s5 + $0x15c] sm:$0xf]
    %v2612 = vld [vmem:[%s5 + $0x160] sm:$0xf]
    %v2613 = vld [vmem:[%s5 + $0x164] sm:$0xf]
    %v2614 = vld [vmem:[%s5 + $0x168] sm:$0xf]
    %v2615 = vld [vmem:[%s5 + $0x16c] sm:$0xf]
    %v2616 = vld [vmem:[%s5 + $0x170] sm:$0xf]
    %v2617 = vld [vmem:[%s5 + $0x174] sm:$0xf]
    %v2618 = vld [vmem:[%s5 + $0x178] sm:$0xf]
    %v2619 = vld [vmem:[%s5 + $0x17c] sm:$0xf]
    %v2620 = vld [vmem:[%s5 + $0x180] sm:$0xf]
    %v2621 = vld [vmem:[%s5 + $0x184] sm:$0xf]
    %v2622 = vld [vmem:[%s5 + $0x188] sm:$0xf]
    %v2623 = vld [vmem:[%s5 + $0x18c] sm:$0xf]
    %v2624 = vld [vmem:[%s5 + $0x190] sm:$0xf]
    %v2625 = vld [vmem:[%s5 + $0x194] sm:$0xf]
    %v2626 = vld [vmem:[%s5 + $0x198] sm:$0xf]
    %v2627 = vld [vmem:[%s5 + $0x19c] sm:$0xf]
    %v2628 = vld [vmem:[%s5 + $0x1a0] sm:$0xf]
    %v2629 = vld [vmem:[%s5 + $0x1a4] sm:$0xf]
    %v2630 = vld [vmem:[%s5 + $0x1a8] sm:$0xf]
    %v2631 = vld [vmem:[%s5 + $0x1ac] sm:$0xf]
    %v2632 = vld [vmem:[%s5 + $0x1b0] sm:$0xf]
    %v2633 = vld [vmem:[%s5 + $0x1b4] sm:$0xf]
    %v2634 = vld [vmem:[%s5 + $0x1b8] sm:$0xf]
    %v2635 = vld [vmem:[%s5 + $0x1bc] sm:$0xf]
    %v2636 = vld [vmem:[%s5 + $0x1c0] sm:$0xf]
    %v2637 = vld [vmem:[%s5 + $0x1c4] sm:$0xf]
    %v2638 = vld [vmem:[%s5 + $0x1c8] sm:$0xf]
    %v2639 = vld [vmem:[%s5 + $0x1cc] sm:$0xf]
    %v2640 = vld [vmem:[%s5 + $0x1d0] sm:$0xf]
    %v2641 = vld [vmem:[%s5 + $0x1d4] sm:$0xf]
    %v2642 = vld [vmem:[%s5 + $0x1d8] sm:$0xf]
    %v2643 = vld [vmem:[%s5 + $0x1dc] sm:$0xf]
    %v2644 = vld [vmem:[%s5 + $0x1e0] sm:$0xf]
    %v2645 = vld [vmem:[%s5 + $0x1e4] sm:$0xf]
    %v2646 = vld [vmem:[%s5 + $0x1e8] sm:$0xf]
    %v2647 = vld [vmem:[%s5 + $0x1ec] sm:$0xf]
    %v2648 = vld [vmem:[%s5 + $0x1f0] sm:$0xf]
    %v2649 = vld [vmem:[%s5 + $0x1f4] sm:$0xf]
    %v2650 = vld [vmem:[%s5 + $0x1f8] sm:$0xf]
    %v2651 = vld [vmem:[%s5 + $0x1fc] sm:$0xf]
    %v2652 = vlaneseq
    %v2653 = vshrl.u32 %v2652, 7
    %v2654 = vsub.s32 2, %v2653
    %v2655 = vrot.slane %v105, %v2654
    %v2784 = vunpack.c.l.b16 %v2524
    %v2785 = vunpack.c.l.b16 %v2525
    %v2786 = vunpack.c.l.b16 %v2526
    %v2787 = vunpack.c.l.b16 %v2527
    %v2788 = vunpack.c.l.b16 %v2528
    %v2789 = vunpack.c.l.b16 %v2529
    %v2790 = vunpack.c.l.b16 %v2530
    %v2791 = vunpack.c.l.b16 %v2531
    %v2792 = vunpack.c.l.b16 %v2532
    %v2793 = vunpack.c.l.b16 %v2533
    %v2794 = vunpack.c.l.b16 %v2534
    %v2795 = vunpack.c.l.b16 %v2535
    %v2796 = vunpack.c.l.b16 %v2536
    %v2797 = vunpack.c.l.b16 %v2537
    %v2798 = vunpack.c.l.b16 %v2538
    %v2799 = vunpack.c.l.b16 %v2539
    %v2800 = vunpack.c.l.b16 %v2540
    %v2801 = vunpack.c.l.b16 %v2541
    %v2802 = vunpack.c.l.b16 %v2542
    %v2803 = vunpack.c.l.b16 %v2543
    %v2804 = vunpack.c.l.b16 %v2544
    %v2805 = vunpack.c.l.b16 %v2545
    %v2806 = vunpack.c.l.b16 %v2546
    %v2807 = vunpack.c.l.b16 %v2547
    %v2808 = vunpack.c.l.b16 %v2548
    %v2809 = vunpack.c.l.b16 %v2549
    %v2810 = vunpack.c.l.b16 %v2550
    %v2811 = vunpack.c.l.b16 %v2551
    %v2812 = vunpack.c.l.b16 %v2552
    %v2813 = vunpack.c.l.b16 %v2553
    %v2814 = vunpack.c.l.b16 %v2554
    %v2815 = vunpack.c.l.b16 %v2555
    %v2816 = vunpack.c.l.b16 %v2556
    %v2817 = vunpack.c.l.b16 %v2557
    %v2818 = vunpack.c.l.b16 %v2558
    %v2819 = vunpack.c.l.b16 %v2559
    %v2820 = vunpack.c.l.b16 %v2560
    %v2821 = vunpack.c.l.b16 %v2561
    %v2822 = vunpack.c.l.b16 %v2562
    %v2823 = vunpack.c.l.b16 %v2563
    %v2824 = vunpack.c.l.b16 %v2564
    %v2825 = vunpack.c.l.b16 %v2565
    %v2826 = vunpack.c.l.b16 %v2566
    %v2827 = vunpack.c.l.b16 %v2567
    %v2828 = vunpack.c.l.b16 %v2568
    %v2829 = vunpack.c.l.b16 %v2569
    %v2830 = vunpack.c.l.b16 %v2570
    %v2831 = vunpack.c.l.b16 %v2571
    %v2832 = vunpack.c.l.b16 %v2572
    %v2833 = vunpack.c.l.b16 %v2573
    %v2834 = vunpack.c.l.b16 %v2574
    %v2835 = vunpack.c.l.b16 %v2575
    %v2836 = vunpack.c.l.b16 %v2576
    %v2837 = vunpack.c.l.b16 %v2577
    %v2838 = vunpack.c.l.b16 %v2578
    %v2839 = vunpack.c.l.b16 %v2579
    %v2840 = vunpack.c.l.b16 %v2580
    %v2841 = vunpack.c.l.b16 %v2581
    %v2842 = vunpack.c.l.b16 %v2582
    %v2843 = vunpack.c.l.b16 %v2583
    %v2844 = vunpack.c.l.b16 %v2584
    %v2845 = vunpack.c.l.b16 %v2585
    %v2846 = vunpack.c.l.b16 %v2586
    %v2847 = vunpack.c.l.b16 %v2587
    %v2848 = vunpack.c.l.b16 %v2588
    %v2849 = vunpack.c.l.b16 %v2589
    %v2850 = vunpack.c.l.b16 %v2590
    %v2851 = vunpack.c.l.b16 %v2591
    %v2852 = vunpack.c.l.b16 %v2592
    %v2853 = vunpack.c.l.b16 %v2593
    %v2854 = vunpack.c.l.b16 %v2594
    %v2855 = vunpack.c.l.b16 %v2595
    %v2856 = vunpack.c.l.b16 %v2596
    %v2857 = vunpack.c.l.b16 %v2597
    %v2858 = vunpack.c.l.b16 %v2598
    %v2859 = vunpack.c.l.b16 %v2599
    %v2860 = vunpack.c.l.b16 %v2600
    %v2861 = vunpack.c.l.b16 %v2601
    %v2862 = vunpack.c.l.b16 %v2602
    %v2863 = vunpack.c.l.b16 %v2603
    %v2864 = vunpack.c.l.b16 %v2604
    %v2865 = vunpack.c.l.b16 %v2605
    %v2866 = vunpack.c.l.b16 %v2606
    %v2867 = vunpack.c.l.b16 %v2607
    %v2868 = vunpack.c.l.b16 %v2608
    %v2869 = vunpack.c.l.b16 %v2609
    %v2870 = vunpack.c.l.b16 %v2610
    %v2871 = vunpack.c.l.b16 %v2611
    %v2872 = vunpack.c.l.b16 %v2612
    %v2873 = vunpack.c.l.b16 %v2613
    %v2874 = vunpack.c.l.b16 %v2614
    %v2875 = vunpack.c.l.b16 %v2615
    %v2876 = vunpack.c.l.b16 %v2616
    %v2877 = vunpack.c.l.b16 %v2617
    %v2878 = vunpack.c.l.b16 %v2618
    %v2879 = vunpack.c.l.b16 %v2619
    %v2880 = vunpack.c.l.b16 %v2620
    %v2881 = vunpack.c.l.b16 %v2621
    %v2882 = vunpack.c.l.b16 %v2622
    %v2883 = vunpack.c.l.b16 %v2623
    %v2884 = vunpack.c.l.b16 %v2624
    %v2885 = vunpack.c.l.b16 %v2625
    %v2886 = vunpack.c.l.b16 %v2626
    %v2887 = vunpack.c.l.b16 %v2627
    %v2888 = vunpack.c.l.b16 %v2628
    %v2889 = vunpack.c.l.b16 %v2629
    %v2890 = vunpack.c.l.b16 %v2630
    %v2891 = vunpack.c.l.b16 %v2631
    %v2892 = vunpack.c.l.b16 %v2632
    %v2893 = vunpack.c.l.b16 %v2633
    %v2894 = vunpack.c.l.b16 %v2634
    %v2895 = vunpack.c.l.b16 %v2635
    %v2896 = vunpack.c.l.b16 %v2636
    %v2897 = vunpack.c.l.b16 %v2637
    %v2898 = vunpack.c.l.b16 %v2638
    %v2899 = vunpack.c.l.b16 %v2639
    %v2900 = vunpack.c.l.b16 %v2640
    %v2901 = vunpack.c.l.b16 %v2641
    %v2902 = vunpack.c.l.b16 %v2642
    %v2903 = vunpack.c.l.b16 %v2643
    %v2904 = vunpack.c.l.b16 %v2644
    %v2905 = vunpack.c.l.b16 %v2645
    %v2906 = vunpack.c.l.b16 %v2646
    %v2907 = vunpack.c.l.b16 %v2647
    %v2908 = vunpack.c.l.b16 %v2648
    %v2909 = vunpack.c.l.b16 %v2649
    %v2910 = vunpack.c.l.b16 %v2650
    %v2911 = vunpack.c.l.b16 %v2651
    %v2912 = vpack.c.b16 %v2785, %v2784
    %v2913 = vpack.c.b16 %v2787, %v2786
    %v2914 = vpack.c.b16 %v2789, %v2788
    %v2915 = vpack.c.b16 %v2791, %v2790
    %v2916 = vpack.c.b16 %v2793, %v2792
    %v2917 = vpack.c.b16 %v2795, %v2794
    %v2918 = vpack.c.b16 %v2797, %v2796
    %v2919 = vpack.c.b16 %v2799, %v2798
    %v2920 = vpack.c.b16 %v2801, %v2800
    %v2921 = vpack.c.b16 %v2803, %v2802
    %v2922 = vpack.c.b16 %v2805, %v2804
    %v2923 = vpack.c.b16 %v2807, %v2806
    %v2924 = vpack.c.b16 %v2809, %v2808
    %v2925 = vpack.c.b16 %v2811, %v2810
    %v2926 = vpack.c.b16 %v2813, %v2812
    %v2927 = vpack.c.b16 %v2815, %v2814
    %v2928 = vpack.c.b16 %v2817, %v2816
    %v2929 = vpack.c.b16 %v2819, %v2818
    %v2930 = vpack.c.b16 %v2821, %v2820
    %v2931 = vpack.c.b16 %v2823, %v2822
    %v2932 = vpack.c.b16 %v2825, %v2824
    %v2933 = vpack.c.b16 %v2827, %v2826
    %v2934 = vpack.c.b16 %v2829, %v2828
    %v2935 = vpack.c.b16 %v2831, %v2830
    %v2936 = vpack.c.b16 %v2833, %v2832
    %v2937 = vpack.c.b16 %v2835, %v2834
    %v2938 = vpack.c.b16 %v2837, %v2836
    %v2939 = vpack.c.b16 %v2839, %v2838
    %v2940 = vpack.c.b16 %v2841, %v2840
    %v2941 = vpack.c.b16 %v2843, %v2842
    %v2942 = vpack.c.b16 %v2845, %v2844
    %v2943 = vpack.c.b16 %v2847, %v2846
    %v2944 = vpack.c.b16 %v2849, %v2848
    %v2945 = vpack.c.b16 %v2851, %v2850
    %v2946 = vpack.c.b16 %v2853, %v2852
    %v2947 = vpack.c.b16 %v2855, %v2854
    %v2948 = vpack.c.b16 %v2857, %v2856
    %v2949 = vpack.c.b16 %v2859, %v2858
    %v2950 = vpack.c.b16 %v2861, %v2860
    %v2951 = vpack.c.b16 %v2863, %v2862
    %v2952 = vpack.c.b16 %v2865, %v2864
    %v2953 = vpack.c.b16 %v2867, %v2866
    %v2954 = vpack.c.b16 %v2869, %v2868
    %v2955 = vpack.c.b16 %v2871, %v2870
    %v2956 = vpack.c.b16 %v2873, %v2872
    %v2957 = vpack.c.b16 %v2875, %v2874
    %v2958 = vpack.c.b16 %v2877, %v2876
    %v2959 = vpack.c.b16 %v2879, %v2878
    %v2960 = vpack.c.b16 %v2881, %v2880
    %v2961 = vpack.c.b16 %v2883, %v2882
    %v2962 = vpack.c.b16 %v2885, %v2884
    %v2963 = vpack.c.b16 %v2887, %v2886
    %v2964 = vpack.c.b16 %v2889, %v2888
    %v2965 = vpack.c.b16 %v2891, %v2890
    %v2966 = vpack.c.b16 %v2893, %v2892
    %v2967 = vpack.c.b16 %v2895, %v2894
    %v2968 = vpack.c.b16 %v2897, %v2896
    %v2969 = vpack.c.b16 %v2899, %v2898
    %v2970 = vpack.c.b16 %v2901, %v2900
    %v2971 = vpack.c.b16 %v2903, %v2902
    %v2972 = vpack.c.b16 %v2905, %v2904
    %v2973 = vpack.c.b16 %v2907, %v2906
    %v2974 = vpack.c.b16 %v2909, %v2908
    %v2975 = vpack.c.b16 %v2911, %v2910
    %3040 = vmatprep.subr.bf16.mxu0 0
    %3041 = vmatpush1.bf16.msra.mxu0 %v2919
    %3042 = vmatprep.subr.bf16.mxu0 0
    %3043 = vmatpush1.bf16.msra.mxu0 %v2918
    %3044 = vmatprep.subr.bf16.mxu0 0
    %3045 = vmatpush1.bf16.msra.mxu0 %v2917
    %3046 = vmatprep.subr.bf16.mxu0 0
    %3047 = vmatpush1.bf16.msra.mxu0 %v2916
    %3048 = vmatprep.subr.bf16.mxu0 0
    %3049 = vmatpush1.bf16.msra.mxu0 %v2915
    %3050 = vmatprep.subr.bf16.mxu0 0
    %3051 = vmatpush1.bf16.msra.mxu0 %v2914
    %3052 = vmatprep.subr.bf16.mxu0 0
    %3053 = vmatpush1.bf16.msra.mxu0 %v2913
    %3054 = vmatprep.subr.bf16.mxu0 0
    %3055 = vmatpush1.bf16.msra.mxu0 %v2912
    %3056 = vmatprep.subr.bf16.mxu0 0
    %3057 = vmatpush2.bf16.msra.mxu0 %v2927
    %3058 = vmatprep.subr.bf16.mxu0 0
    %3059 = vmatpush2.bf16.msra.mxu0 %v2926
    %3060 = vmatprep.subr.bf16.mxu0 0
    %3061 = vmatpush2.bf16.msra.mxu0 %v2925
    %3062 = vmatprep.subr.bf16.mxu0 0
    %3063 = vmatpush2.bf16.msra.mxu0 %v2924
    %3064 = vmatprep.subr.bf16.mxu0 0
    %3065 = vmatpush2.bf16.msra.mxu0 %v2923
    %3066 = vmatprep.subr.bf16.mxu0 0
    %3067 = vmatpush2.bf16.msra.mxu0 %v2922
    %3068 = vmatprep.subr.bf16.mxu0 0
    %3069 = vmatpush2.bf16.msra.mxu0 %v2921
    %3070 = vmatprep.subr.bf16.mxu0 0
    %3071 = vmatpush2.bf16.msra.mxu0 %v2920
    %3072 = vmatprep.mubr.bf16.mxu0 %v2517
    %3073 = vmatmul.mubr.bf16.gmra.mxu0 %v2516
    %v3074 = vpop.f32.mrf.mxu0
    %v3075 = vadd.f32 %v2655, %v3074
    %v3076 = vpop.f32.mrf.mxu0
    %v3077 = vpop.f32.mrf.mxu0
    %v3078 = vpop.f32.mrf.mxu0
    %3079 = vdwg.mxu0
    %3080 = vmatprep.subr.bf16.mxu0 0
    %3081 = vmatpush1.bf16.msra.mxu0 %v2935
    %3082 = vmatprep.subr.bf16.mxu0 0
    %3083 = vmatpush1.bf16.msra.mxu0 %v2934
    %3084 = vmatprep.subr.bf16.mxu0 0
    %3085 = vmatpush1.bf16.msra.mxu0 %v2933
    %3086 = vmatprep.subr.bf16.mxu0 0
    %3087 = vmatpush1.bf16.msra.mxu0 %v2932
    %3088 = vmatprep.subr.bf16.mxu0 0
    %3089 = vmatpush1.bf16.msra.mxu0 %v2931
    %3090 = vmatprep.subr.bf16.mxu0 0
    %3091 = vmatpush1.bf16.msra.mxu0 %v2930
    %3092 = vmatprep.subr.bf16.mxu0 0
    %3093 = vmatpush1.bf16.msra.mxu0 %v2929
    %3094 = vmatprep.subr.bf16.mxu0 0
    %3095 = vmatpush1.bf16.msra.mxu0 %v2928
    %3096 = vmatprep.subr.bf16.mxu0 0
    %3097 = vmatpush2.bf16.msra.mxu0 %v2943
    %3098 = vmatprep.subr.bf16.mxu0 0
    %3099 = vmatpush2.bf16.msra.mxu0 %v2942
    %3100 = vmatprep.subr.bf16.mxu0 0
    %3101 = vmatpush2.bf16.msra.mxu0 %v2941
    %3102 = vmatprep.subr.bf16.mxu0 0
    %3103 = vmatpush2.bf16.msra.mxu0 %v2940
    %3104 = vmatprep.subr.bf16.mxu0 0
    %3105 = vmatpush2.bf16.msra.mxu0 %v2939
    %3106 = vmatprep.subr.bf16.mxu0 0
    %3107 = vmatpush2.bf16.msra.mxu0 %v2938
    %3108 = vmatprep.subr.bf16.mxu0 0
    %3109 = vmatpush2.bf16.msra.mxu0 %v2937
    %3110 = vmatprep.subr.bf16.mxu0 0
    %3111 = vmatpush2.bf16.msra.mxu0 %v2936
    %3112 = vmatprep.mubr.bf16.mxu0 %v2519
    %3113 = vmatmul.mubr.bf16.gmra.mxu0 %v2518
    %v3114 = vpop.f32.mrf.mxu0
    %v3115 = vadd.f32 %v3075, %v3114
    %v3116 = vpop.f32.mrf.mxu0
    %v3117 = vpop.f32.mrf.mxu0
    %v3118 = vpop.f32.mrf.mxu0
    %3119 = vdwg.mxu0
    %3120 = vmatprep.subr.bf16.mxu0 0
    %3121 = vmatpush1.bf16.msra.mxu0 %v2951
    %3122 = vmatprep.subr.bf16.mxu0 0
    %3123 = vmatpush1.bf16.msra.mxu0 %v2950
    %3124 = vmatprep.subr.bf16.mxu0 0
    %3125 = vmatpush1.bf16.msra.mxu0 %v2949
    %3126 = vmatprep.subr.bf16.mxu0 0
    %3127 = vmatpush1.bf16.msra.mxu0 %v2948
    %3128 = vmatprep.subr.bf16.mxu0 0
    %3129 = vmatpush1.bf16.msra.mxu0 %v2947
    %3130 = vmatprep.subr.bf16.mxu0 0
    %3131 = vmatpush1.bf16.msra.mxu0 %v2946
    %3132 = vmatprep.subr.bf16.mxu0 0
    %3133 = vmatpush1.bf16.msra.mxu0 %v2945
    %3134 = vmatprep.subr.bf16.mxu0 0
    %3135 = vmatpush1.bf16.msra.mxu0 %v2944
    %3136 = vmatprep.subr.bf16.mxu0 0
    %3137 = vmatpush2.bf16.msra.mxu0 %v2959
    %3138 = vmatprep.subr.bf16.mxu0 0
    %3139 = vmatpush2.bf16.msra.mxu0 %v2958
    %3140 = vmatprep.subr.bf16.mxu0 0
    %3141 = vmatpush2.bf16.msra.mxu0 %v2957
    %3142 = vmatprep.subr.bf16.mxu0 0
    %3143 = vmatpush2.bf16.msra.mxu0 %v2956
    %3144 = vmatprep.subr.bf16.mxu0 0
    %3145 = vmatpush2.bf16.msra.mxu0 %v2955
    %3146 = vmatprep.subr.bf16.mxu0 0
    %3147 = vmatpush2.bf16.msra.mxu0 %v2954
    %3148 = vmatprep.subr.bf16.mxu0 0
    %3149 = vmatpush2.bf16.msra.mxu0 %v2953
    %3150 = vmatprep.subr.bf16.mxu0 0
    %3151 = vmatpush2.bf16.msra.mxu0 %v2952
    %3152 = vmatprep.mubr.bf16.mxu0 %v2521
    %3153 = vmatmul.mubr.bf16.gmra.mxu0 %v2520
    %v3154 = vpop.f32.mrf.mxu0
    %v3155 = vadd.f32 %v3115, %v3154
    %v3156 = vpop.f32.mrf.mxu0
    %v3157 = vpop.f32.mrf.mxu0
    %v3158 = vpop.f32.mrf.mxu0
    %3159 = vdwg.mxu0
    %3160 = vmatprep.subr.bf16.mxu0 0
    %3161 = vmatpush1.bf16.msra.mxu0 %v2967
    %3162 = vmatprep.subr.bf16.mxu0 0
    %3163 = vmatpush1.bf16.msra.mxu0 %v2966
    %3164 = vmatprep.subr.bf16.mxu0 0
    %3165 = vmatpush1.bf16.msra.mxu0 %v2965
    %3166 = vmatprep.subr.bf16.mxu0 0
    %3167 = vmatpush1.bf16.msra.mxu0 %v2964
    %3168 = vmatprep.subr.bf16.mxu0 0
    %3169 = vmatpush1.bf16.msra.mxu0 %v2963
    %3170 = vmatprep.subr.bf16.mxu0 0
    %3171 = vmatpush1.bf16.msra.mxu0 %v2962
    %3172 = vmatprep.subr.bf16.mxu0 0
    %3173 = vmatpush1.bf16.msra.mxu0 %v2961
    %3174 = vmatprep.subr.bf16.mxu0 0
    %3175 = vmatpush1.bf16.msra.mxu0 %v2960
    %3176 = vmatprep.subr.bf16.mxu0 0
    %3177 = vmatpush2.bf16.msra.mxu0 %v2975
    %3178 = vmatprep.subr.bf16.mxu0 0
    %3179 = vmatpush2.bf16.msra.mxu0 %v2974
    %3180 = vmatprep.subr.bf16.mxu0 0
    %3181 = vmatpush2.bf16.msra.mxu0 %v2973
    %3182 = vmatprep.subr.bf16.mxu0 0
    %3183 = vmatpush2.bf16.msra.mxu0 %v2972
    %3184 = vmatprep.subr.bf16.mxu0 0
    %3185 = vmatpush2.bf16.msra.mxu0 %v2971
    %3186 = vmatprep.subr.bf16.mxu0 0
    %3187 = vmatpush2.bf16.msra.mxu0 %v2970
    %3188 = vmatprep.subr.bf16.mxu0 0
    %3189 = vmatpush2.bf16.msra.mxu0 %v2969
    %3190 = vmatprep.subr.bf16.mxu0 0
    %3191 = vmatpush2.bf16.msra.mxu0 %v2968
    %3192 = vmatprep.mubr.bf16.mxu0 %v2523
    %3193 = vmatmul.mubr.bf16.gmra.mxu0 %v2522
    %v3194 = vpop.f32.mrf.mxu0
    %v3195 = vadd.f32 %v3155, %v3194
    %v3196 = vpop.f32.mrf.mxu0
    %v3197 = vpop.f32.mrf.mxu0
    %v3198 = vpop.f32.mrf.mxu0
    %3199 = vdwg.mxu0
    %3200 = vst [vmem:[%s14] sm:$0xf] %v3195
    %v3201 = vpack.c.bf16 %v260, %v260
    %v3202 = vld [vmem:[%s1 + $0x40] sm:$0xf]
    %v3203 = vld [vmem:[%s1 + $0x44] sm:$0xf]
    %v3204 = vld [vmem:[%s1 + $0x48] sm:$0xf]
    %v3205 = vld [vmem:[%s1 + $0x4c] sm:$0xf]
    %v3206 = vlaneseq
    %v3207 = vshrl.u32 %v3206, 7
    %v3208 = vsub.s32 0, %v3207
    %v3209 = vrot.slane %v104, %v3208
    %v3214 = vunpack.c.l.b16 %v3202
    %v3215 = vunpack.c.l.b16 %v3203
    %v3216 = vunpack.c.l.b16 %v3204
    %v3217 = vunpack.c.l.b16 %v3205
    %v3218 = vpack.c.b16 %v3215, %v3214
    %v3219 = vpack.c.b16 %v3217, %v3216
    %v3223 = vsel %vm135, %v3201, 0
    %3225 = vmatprep.subr.bf16.mxu0 0
    %3226 = vmatpush1.bf16.msra.mxu0 0
    %3227 = vmatprep.subr.bf16.mxu0 0
    %3228 = vmatpush1.bf16.msra.mxu0 0
    %3229 = vmatprep.subr.bf16.mxu0 0
    %3230 = vmatpush1.bf16.msra.mxu0 0
    %3231 = vmatprep.subr.bf16.mxu0 0
    %3232 = vmatpush1.bf16.msra.mxu0 0
    %3233 = vmatprep.subr.bf16.mxu0 0
    %3234 = vmatpush1.bf16.msra.mxu0 0
    %3235 = vmatprep.subr.bf16.mxu0 0
    %3236 = vmatpush1.bf16.msra.mxu0 0
    %3237 = vmatprep.subr.bf16.mxu0 0
    %3238 = vmatpush1.bf16.msra.mxu0 %v3219
    %3239 = vmatprep.subr.bf16.mxu0 0
    %3240 = vmatpush1.bf16.msra.mxu0 %v3218
    %3241 = vmatprep.subr.bf16.mxu0 0
    %3242 = vmatpush2.bf16.msra.mxu0 0
    %3243 = vmatprep.subr.bf16.mxu0 0
    %3244 = vmatpush2.bf16.msra.mxu0 0
    %3245 = vmatprep.subr.bf16.mxu0 0
    %3246 = vmatpush2.bf16.msra.mxu0 0
    %3247 = vmatprep.subr.bf16.mxu0 0
    %3248 = vmatpush2.bf16.msra.mxu0 0
    %3249 = vmatprep.subr.bf16.mxu0 0
    %3250 = vmatpush2.bf16.msra.mxu0 0
    %3251 = vmatprep.subr.bf16.mxu0 0
    %3252 = vmatpush2.bf16.msra.mxu0 0
    %3253 = vmatprep.subr.bf16.mxu0 0
    %3254 = vmatpush2.bf16.msra.mxu0 0
    %3255 = vmatprep.subr.bf16.mxu0 0
    %3256 = vmatpush2.bf16.msra.mxu0 0
    %3257 = vmatprep.mubr.bf16.mxu0 0
    %3258 = vmatmul.mubr.bf16.gmra.mxu0 %v3223
    %v3259 = vpop.f32.mrf.mxu0
    %v3260 = vadd.f32 %v3209, %v3259
    %v3261 = vpop.f32.mrf.mxu0
    %v3262 = vpop.f32.mrf.mxu0
    %v3263 = vpop.f32.mrf.mxu0
    %3264 = vdwg.mxu0
    %3265 = vst.msk [vmem:[#allocation3] sm:$0x3] %vm325, %v3260
    %v3266 = vld [vmem:[%s1 + $0x50] sm:$0xf]
    %v3267 = vld [vmem:[%s1 + $0x54] sm:$0xf]
    %v3268 = vld [vmem:[%s1 + $0x58] sm:$0xf]
    %v3269 = vld [vmem:[%s1 + $0x5c] sm:$0xf]
    %v3270 = vlaneseq
    %v3271 = vshrl.u32 %v3270, 7
    %v3272 = vsub.s32 1, %v3271
    %v3273 = vrot.slane %v104, %v3272
    %v3278 = vunpack.c.l.b16 %v3266
    %v3279 = vunpack.c.l.b16 %v3267
    %v3280 = vunpack.c.l.b16 %v3268
    %v3281 = vunpack.c.l.b16 %v3269
    %v3282 = vpack.c.b16 %v3279, %v3278
    %v3283 = vpack.c.b16 %v3281, %v3280
    %3286 = vmatprep.subr.bf16.mxu0 0
    %3287 = vmatpush1.bf16.msra.mxu0 0
    %3288 = vmatprep.subr.bf16.mxu0 0
    %3289 = vmatpush1.bf16.msra.mxu0 0
    %3290 = vmatprep.subr.bf16.mxu0 0
    %3291 = vmatpush1.bf16.msra.mxu0 0
    %3292 = vmatprep.subr.bf16.mxu0 0
    %3293 = vmatpush1.bf16.msra.mxu0 0
    %3294 = vmatprep.subr.bf16.mxu0 0
    %3295 = vmatpush1.bf16.msra.mxu0 0
    %3296 = vmatprep.subr.bf16.mxu0 0
    %3297 = vmatpush1.bf16.msra.mxu0 0
    %3298 = vmatprep.subr.bf16.mxu0 0
    %3299 = vmatpush1.bf16.msra.mxu0 %v3283
    %3300 = vmatprep.subr.bf16.mxu0 0
    %3301 = vmatpush1.bf16.msra.mxu0 %v3282
    %3302 = vmatprep.subr.bf16.mxu0 0
    %3303 = vmatpush2.bf16.msra.mxu0 0
    %3304 = vmatprep.subr.bf16.mxu0 0
    %3305 = vmatpush2.bf16.msra.mxu0 0
    %3306 = vmatprep.subr.bf16.mxu0 0
    %3307 = vmatpush2.bf16.msra.mxu0 0
    %3308 = vmatprep.subr.bf16.mxu0 0
    %3309 = vmatpush2.bf16.msra.mxu0 0
    %3310 = vmatprep.subr.bf16.mxu0 0
    %3311 = vmatpush2.bf16.msra.mxu0 0
    %3312 = vmatprep.subr.bf16.mxu0 0
    %3313 = vmatpush2.bf16.msra.mxu0 0
    %3314 = vmatprep.subr.bf16.mxu0 0
    %3315 = vmatpush2.bf16.msra.mxu0 0
    %3316 = vmatprep.subr.bf16.mxu0 0
    %3317 = vmatpush2.bf16.msra.mxu0 0
    %3318 = vmatprep.mubr.bf16.mxu0 0
    %3319 = vmatmul.mubr.bf16.gmra.mxu0 %v3223
    %v3320 = vpop.f32.mrf.mxu0
    %v3321 = vadd.f32 %v3273, %v3320
    %v3322 = vpop.f32.mrf.mxu0
    %v3323 = vpop.f32.mrf.mxu0
    %v3324 = vpop.f32.mrf.mxu0
    %3325 = vdwg.mxu0
    %3326 = vst.msk [vmem:[#allocation3 + $0x2] sm:$0x3] %vm325, %v3321
    %v3327 = vld [vmem:[%s9] sm:$0xff]
    %v3328 = vld [vmem:[%s9 + $0x8] sm:$0xf]
    %v3329 = vld [vmem:[#allocation3] sm:$0xf]
    %vm3330 = vcmask 31744
    %v3332 = vsel %vm3330, %v3327, 0
    %v3335 = vsel %vm3330, %v3328, 0
    %vm3337 = vcmask 1043456
    %v3339 = vsel %vm3337, %v3329, 0
    %3341 = vmatprep.subr.mxu0 0.0
    %3342 = vmatpush1.msra.mxu0 0.0
    %3343 = vmatprep.subr.mxu0 0.0
    %3344 = vmatpush1.msra.mxu0 0.0
    %3345 = vmatprep.subr.mxu0 0.0
    %3346 = vmatpush1.msra.mxu0 0.0
    %3347 = vmatprep.subr.mxu0 0.0
    %3348 = vmatpush1.msra.mxu0 0.0
    %3349 = vmatprep.subr.mxu0 0.0
    %3350 = vmatpush1.msra.mxu0 0.0
    %3351 = vmatprep.subr.mxu0 0.0
    %3352 = vmatpush1.msra.mxu0 0.0
    %3353 = vmatprep.subr.mxu0 0.0
    %3354 = vmatpush1.msra.mxu0 0.0
    %3355 = vmatprep.subr.mxu0 0.0
    %3356 = vmatpush1.msra.mxu0 0.0
    %3357 = vmatprep.subr.mxu0 0.0
    %3358 = vmatpush1.msra.mxu0 0.0
    %3359 = vmatprep.subr.mxu0 0.0
    %3360 = vmatpush1.msra.mxu0 0.0
    %3361 = vmatprep.subr.mxu0 0.0
    %3362 = vmatpush1.msra.mxu0 0.0
    %3363 = vmatprep.subr.mxu0 0.0
    %3364 = vmatpush1.msra.mxu0 0.0
    %3365 = vmatprep.subr.mxu0 0.0
    %3366 = vmatpush1.msra.mxu0 0.0
    %3367 = vmatprep.subr.mxu0 0.0
    %3368 = vmatpush1.msra.mxu0 0.0
    %3369 = vmatprep.subr.mxu0 0.0
    %3370 = vmatpush1.msra.mxu0 0.0
    %3371 = vmatprep.subr.mxu0 0.0
    %3372 = vmatpush1.msra.mxu0 %v3339
    %3373 = vmatprep.subr.mxu0 0.0
    %3374 = vmatpush2.msra.mxu0 0.0
    %3375 = vmatprep.subr.mxu0 0.0
    %3376 = vmatpush2.msra.mxu0 0.0
    %3377 = vmatprep.subr.mxu0 0.0
    %3378 = vmatpush2.msra.mxu0 0.0
    %3379 = vmatprep.subr.mxu0 0.0
    %3380 = vmatpush2.msra.mxu0 0.0
    %3381 = vmatprep.subr.mxu0 0.0
    %3382 = vmatpush2.msra.mxu0 0.0
    %3383 = vmatprep.subr.mxu0 0.0
    %3384 = vmatpush2.msra.mxu0 0.0
    %3385 = vmatprep.subr.mxu0 0.0
    %3386 = vmatpush2.msra.mxu0 0.0
    %3387 = vmatprep.subr.mxu0 0.0
    %3388 = vmatpush2.msra.mxu0 0.0
    %3389 = vmatprep.subr.mxu0 0.0
    %3390 = vmatpush2.msra.mxu0 0.0
    %3391 = vmatprep.subr.mxu0 0.0
    %3392 = vmatpush2.msra.mxu0 0.0
    %3393 = vmatprep.subr.mxu0 0.0
    %3394 = vmatpush2.msra.mxu0 0.0
    %3395 = vmatprep.subr.mxu0 0.0
    %3396 = vmatpush2.msra.mxu0 0.0
    %3397 = vmatprep.subr.mxu0 0.0
    %3398 = vmatpush2.msra.mxu0 0.0
    %3399 = vmatprep.subr.mxu0 0.0
    %3400 = vmatpush2.msra.mxu0 0.0
    %3401 = vmatprep.subr.mxu0 0.0
    %3402 = vmatpush2.msra.mxu0 0.0
    %3403 = vmatprep.subr.mxu0 0.0
    %3404 = vmatpush2.msra.mxu0 0.0
    %3405 = vmatprep.mubr.f32.mxu0 0.0
    %3406 = vmatmul.mubr.f32.gmra.mxu0 %v3332
    %v3407 = vpop.f32.mrf.mxu0
    %v3408 = vadd.f32 0.0, %v3407
    %v3409 = vpop.f32.mrf.mxu0
    %3410 = vmatprep.mubr.f32.mxu0 0.0
    %3411 = vmatmul.mubr.f32.gmra.mxu0 %v3335
    %v3412 = vpop.f32.mrf.mxu0
    %v3413 = vadd.f32 0.0, %v3412
    %v3414 = vpop.f32.mrf.mxu0
    %3415 = vdwg.mxu0
    %v3416 = vld [vmem:[%s10] sm:$0xff]
    %v3417 = vld [vmem:[%s10 + $0x8] sm:$0xff]
    %v3418 = vld [vmem:[%s10 + $0x10] sm:$0xff]
    %v3419 = vpack.c.bf16 %v3417, %v3416
    %v3420 = vpack.c.bf16 %v3418, %v3418
    %v3421 = vld [vmem:[%s1 + $0x70] sm:$0xf]
    %v3422 = vld [vmem:[%s1 + $0x74] sm:$0xf]
    %v3423 = vld [vmem:[%s1 + $0x78] sm:$0xf]
    %v3424 = vld [vmem:[%s1 + $0x7c] sm:$0xf]
    %v3425 = vlaneseq
    %v3426 = vshrl.u32 %v3425, 7
    %v3427 = vsub.s32 3, %v3426
    %v3428 = vrot.slane %v104, %v3427
    %v3433 = vunpack.c.l.b16 %v3421
    %v3434 = vunpack.c.l.b16 %v3422
    %v3435 = vunpack.c.l.b16 %v3423
    %v3436 = vunpack.c.l.b16 %v3424
    %v3437 = vpack.c.b16 %v3434, %v3433
    %v3438 = vpack.c.b16 %v3436, %v3435
    %v3442 = vsel %vm135, %v3419, 0
    %v3445 = vsel %vm135, %v3420, 0
    %3447 = vmatprep.subr.bf16.mxu0 0
    %3448 = vmatpush1.bf16.msra.mxu0 0
    %3449 = vmatprep.subr.bf16.mxu0 0
    %3450 = vmatpush1.bf16.msra.mxu0 0
    %3451 = vmatprep.subr.bf16.mxu0 0
    %3452 = vmatpush1.bf16.msra.mxu0 0
    %3453 = vmatprep.subr.bf16.mxu0 0
    %3454 = vmatpush1.bf16.msra.mxu0 0
    %3455 = vmatprep.subr.bf16.mxu0 0
    %3456 = vmatpush1.bf16.msra.mxu0 0
    %3457 = vmatprep.subr.bf16.mxu0 0
    %3458 = vmatpush1.bf16.msra.mxu0 0
    %3459 = vmatprep.subr.bf16.mxu0 0
    %3460 = vmatpush1.bf16.msra.mxu0 %v3438
    %3461 = vmatprep.subr.bf16.mxu0 0
    %3462 = vmatpush1.bf16.msra.mxu0 %v3437
    %3463 = vmatprep.subr.bf16.mxu0 0
    %3464 = vmatpush2.bf16.msra.mxu0 0
    %3465 = vmatprep.subr.bf16.mxu0 0
    %3466 = vmatpush2.bf16.msra.mxu0 0
    %3467 = vmatprep.subr.bf16.mxu0 0
    %3468 = vmatpush2.bf16.msra.mxu0 0
    %3469 = vmatprep.subr.bf16.mxu0 0
    %3470 = vmatpush2.bf16.msra.mxu0 0
    %3471 = vmatprep.subr.bf16.mxu0 0
    %3472 = vmatpush2.bf16.msra.mxu0 0
    %3473 = vmatprep.subr.bf16.mxu0 0
    %3474 = vmatpush2.bf16.msra.mxu0 0
    %3475 = vmatprep.subr.bf16.mxu0 0
    %3476 = vmatpush2.bf16.msra.mxu0 0
    %3477 = vmatprep.subr.bf16.mxu0 0
    %3478 = vmatpush2.bf16.msra.mxu0 0
    %3479 = vmatprep.mubr.bf16.mxu0 0
    %3480 = vmatmul.mubr.bf16.gmra.mxu0 %v3442
    %v3481 = vpop.f32.mrf.mxu0
    %v3482 = vadd.f32 %v3428, %v3481
    %v3483 = vpop.f32.mrf.mxu0
    %v3484 = vpop.f32.mrf.mxu0
    %v3485 = vadd.f32 %v3428, %v3484
    %v3486 = vpop.f32.mrf.mxu0
    %3487 = vmatprep.mubr.bf16.mxu0 0
    %3488 = vmatmul.mubr.bf16.gmra.mxu0 %v3445
    %v3489 = vpop.f32.mrf.mxu0
    %v3490 = vadd.f32 %v3428, %v3489
    %v3491 = vpop.f32.mrf.mxu0
    %v3492 = vpop.f32.mrf.mxu0
    %v3493 = vpop.f32.mrf.mxu0
    %3494 = vdwg.mxu0
    %v3495 = vld [vmem:[%s11] sm:$0xff]
    %v3496 = vld [vmem:[%s11 + $0x8] sm:$0xff]
    %v3497 = vld [vmem:[%s11 + $0x10] sm:$0xff]
    %vm3498 = vcmask 97280
    %v3500 = vsel %vm3498, %v3495, 0
    %v3503 = vsel %vm3498, %v3496, 0
    %v3506 = vsel %vm3498, %v3497, 0
    %v3509 = vsel %vm3337, %v3413, 0
    %3511 = vmatprep.subr.mxu0 0.0
    %3512 = vmatpush1.msra.mxu0 0.0
    %3513 = vmatprep.subr.mxu0 0.0
    %3514 = vmatpush1.msra.mxu0 0.0
    %3515 = vmatprep.subr.mxu0 0.0
    %3516 = vmatpush1.msra.mxu0 0.0
    %3517 = vmatprep.subr.mxu0 0.0
    %3518 = vmatpush1.msra.mxu0 0.0
    %3519 = vmatprep.subr.mxu0 0.0
    %3520 = vmatpush1.msra.mxu0 0.0
    %3521 = vmatprep.subr.mxu0 0.0
    %3522 = vmatpush1.msra.mxu0 0.0
    %3523 = vmatprep.subr.mxu0 0.0
    %3524 = vmatpush1.msra.mxu0 0.0
    %3525 = vmatprep.subr.mxu0 0.0
    %3526 = vmatpush1.msra.mxu0 0.0
    %3527 = vmatprep.subr.mxu0 0.0
    %3528 = vmatpush1.msra.mxu0 0.0
    %3529 = vmatprep.subr.mxu0 0.0
    %3530 = vmatpush1.msra.mxu0 0.0
    %3531 = vmatprep.subr.mxu0 0.0
    %3532 = vmatpush1.msra.mxu0 0.0
    %3533 = vmatprep.subr.mxu0 0.0
    %3534 = vmatpush1.msra.mxu0 0.0
    %3535 = vmatprep.subr.mxu0 0.0
    %3536 = vmatpush1.msra.mxu0 0.0
    %3537 = vmatprep.subr.mxu0 0.0
    %3538 = vmatpush1.msra.mxu0 0.0
    %3539 = vmatprep.subr.mxu0 0.0
    %3540 = vmatpush1.msra.mxu0 %v3509
    %3541 = vmatprep.subr.mxu0 0.0
    %3542 = vmatpush1.msra.mxu0 %v3408
    %3543 = vmatprep.subr.mxu0 0.0
    %3544 = vmatpush2.msra.mxu0 0.0
    %3545 = vmatprep.subr.mxu0 0.0
    %3546 = vmatpush2.msra.mxu0 0.0
    %3547 = vmatprep.subr.mxu0 0.0
    %3548 = vmatpush2.msra.mxu0 0.0
    %3549 = vmatprep.subr.mxu0 0.0
    %3550 = vmatpush2.msra.mxu0 0.0
    %3551 = vmatprep.subr.mxu0 0.0
    %3552 = vmatpush2.msra.mxu0 0.0
    %3553 = vmatprep.subr.mxu0 0.0
    %3554 = vmatpush2.msra.mxu0 0.0
    %3555 = vmatprep.subr.mxu0 0.0
    %3556 = vmatpush2.msra.mxu0 0.0
    %3557 = vmatprep.subr.mxu0 0.0
    %3558 = vmatpush2.msra.mxu0 0.0
    %3559 = vmatprep.subr.mxu0 0.0
    %3560 = vmatpush2.msra.mxu0 0.0
    %3561 = vmatprep.subr.mxu0 0.0
    %3562 = vmatpush2.msra.mxu0 0.0
    %3563 = vmatprep.subr.mxu0 0.0
    %3564 = vmatpush2.msra.mxu0 0.0
    %3565 = vmatprep.subr.mxu0 0.0
    %3566 = vmatpush2.msra.mxu0 0.0
    %3567 = vmatprep.subr.mxu0 0.0
    %3568 = vmatpush2.msra.mxu0 0.0
    %3569 = vmatprep.subr.mxu0 0.0
    %3570 = vmatpush2.msra.mxu0 0.0
    %3571 = vmatprep.subr.mxu0 0.0
    %3572 = vmatpush2.msra.mxu0 0.0
    %3573 = vmatprep.subr.mxu0 0.0
    %3574 = vmatpush2.msra.mxu0 0.0
    %3575 = vmatprep.mubr.f32.mxu0 0.0
    %3576 = vmatmul.mubr.f32.gmra.mxu0 %v3500
    %v3577 = vpop.f32.mrf.mxu0
    %v3578 = vadd.f32 0.0, %v3577
    %v3579 = vpop.f32.mrf.mxu0
    %3580 = vmatprep.mubr.f32.mxu0 0.0
    %3581 = vmatmul.mubr.f32.gmra.mxu0 %v3503
    %v3582 = vpop.f32.mrf.mxu0
    %v3583 = vadd.f32 0.0, %v3582
    %v3584 = vpop.f32.mrf.mxu0
    %3585 = vmatprep.mubr.f32.mxu0 0.0
    %3586 = vmatmul.mubr.f32.gmra.mxu0 %v3506
    %v3587 = vpop.f32.mrf.mxu0
    %v3588 = vadd.f32 0.0, %v3587
    %v3589 = vpop.f32.mrf.mxu0
    %3590 = vdwg.mxu0
    %v3591 = vmul.f32 %v3578, %v3482
    %v3592 = vmul.f32 %v3583, %v3485
    %v3593 = vmul.f32 %v3588, %v3490
    %v3594 = vmax.f32 %v3591, 0.0
    %v3595 = vmax.f32 %v3592, 0.0
    %v3596 = vmax.f32 %v3593, 0.0
    %v3597 = vpack.c.bf16 %v3595, %v3594
    %v3598 = vpack.c.bf16 %v3596, %v3596
    %v3599 = vpack.c.bf16 %v3413, %v3408
    %v3600 = vld [vmem:[%s1 + $0x80] sm:$0xf]
    %v3601 = vld [vmem:[%s1 + $0x84] sm:$0xf]
    %v3602 = vld [vmem:[%s1 + $0x88] sm:$0xf]
    %v3603 = vld [vmem:[%s1 + $0x8c] sm:$0xf]
    %v3604 = vlaneseq
    %v3605 = vshrl.u32 %v3604, 7
    %v3606 = vsub.s32 4, %v3605
    %v3607 = vrot.slane %v104, %v3606
    %v3612 = vunpack.c.l.b16 %v3600
    %v3613 = vunpack.c.l.b16 %v3601
    %v3614 = vunpack.c.l.b16 %v3602
    %v3615 = vunpack.c.l.b16 %v3603
    %v3616 = vpack.c.b16 %v3613, %v3612
    %v3617 = vpack.c.b16 %v3615, %v3614
    %v3621 = vsel %vm135, %v3599, 0
    %3623 = vmatprep.subr.bf16.mxu0 0
    %3624 = vmatpush1.bf16.msra.mxu0 0
    %3625 = vmatprep.subr.bf16.mxu0 0
    %3626 = vmatpush1.bf16.msra.mxu0 0
    %3627 = vmatprep.subr.bf16.mxu0 0
    %3628 = vmatpush1.bf16.msra.mxu0 0
    %3629 = vmatprep.subr.bf16.mxu0 0
    %3630 = vmatpush1.bf16.msra.mxu0 0
    %3631 = vmatprep.subr.bf16.mxu0 0
    %3632 = vmatpush1.bf16.msra.mxu0 0
    %3633 = vmatprep.subr.bf16.mxu0 0
    %3634 = vmatpush1.bf16.msra.mxu0 0
    %3635 = vmatprep.subr.bf16.mxu0 0
    %3636 = vmatpush1.bf16.msra.mxu0 %v3617
    %3637 = vmatprep.subr.bf16.mxu0 0
    %3638 = vmatpush1.bf16.msra.mxu0 %v3616
    %3639 = vmatprep.subr.bf16.mxu0 0
    %3640 = vmatpush2.bf16.msra.mxu0 0
    %3641 = vmatprep.subr.bf16.mxu0 0
    %3642 = vmatpush2.bf16.msra.mxu0 0
    %3643 = vmatprep.subr.bf16.mxu0 0
    %3644 = vmatpush2.bf16.msra.mxu0 0
    %3645 = vmatprep.subr.bf16.mxu0 0
    %3646 = vmatpush2.bf16.msra.mxu0 0
    %3647 = vmatprep.subr.bf16.mxu0 0
    %3648 = vmatpush2.bf16.msra.mxu0 0
    %3649 = vmatprep.subr.bf16.mxu0 0
    %3650 = vmatpush2.bf16.msra.mxu0 0
    %3651 = vmatprep.subr.bf16.mxu0 0
    %3652 = vmatpush2.bf16.msra.mxu0 0
    %3653 = vmatprep.subr.bf16.mxu0 0
    %3654 = vmatpush2.bf16.msra.mxu0 0
    %3655 = vmatprep.mubr.bf16.mxu0 0
    %3656 = vmatmul.mubr.bf16.gmra.mxu0 %v3621
    %v3657 = vpop.f32.mrf.mxu0
    %v3658 = vadd.f32 %v3607, %v3657
    %v3659 = vpop.f32.mrf.mxu0
    %v3660 = vpop.f32.mrf.mxu0
    %v3661 = vadd.f32 %v3607, %v3660
    %v3662 = vpop.f32.mrf.mxu0
    %3663 = vdwg.mxu0
    %v3664 = vld [vmem:[%s1 + $0xa0] sm:$0xf]
    %v3665 = vld [vmem:[%s1 + $0xa4] sm:$0xf]
    %v3666 = vld [vmem:[%s1 + $0xa8] sm:$0xf]
    %v3667 = vld [vmem:[%s1 + $0xac] sm:$0xf]
    %v3672 = vunpack.c.l.b16 %v3664
    %v3673 = vunpack.c.l.b16 %v3665
    %v3674 = vunpack.c.l.b16 %v3666
    %v3675 = vunpack.c.l.b16 %v3667
    %v3676 = vpack.c.b16 %v3673, %v3672
    %v3677 = vpack.c.b16 %v3675, %v3674
    %v3681 = vsel %vm135, %v3597, 0
    %v3684 = vsel %vm135, %v3598, 0
    %3686 = vmatprep.subr.bf16.mxu0 0
    %3687 = vmatpush1.bf16.msra.mxu0 0
    %3688 = vmatprep.subr.bf16.mxu0 0
    %3689 = vmatpush1.bf16.msra.mxu0 0
    %3690 = vmatprep.subr.bf16.mxu0 0
    %3691 = vmatpush1.bf16.msra.mxu0 0
    %3692 = vmatprep.subr.bf16.mxu0 0
    %3693 = vmatpush1.bf16.msra.mxu0 0
    %3694 = vmatprep.subr.bf16.mxu0 0
    %3695 = vmatpush1.bf16.msra.mxu0 0
    %3696 = vmatprep.subr.bf16.mxu0 0
    %3697 = vmatpush1.bf16.msra.mxu0 0
    %3698 = vmatprep.subr.bf16.mxu0 0
    %3699 = vmatpush1.bf16.msra.mxu0 %v3677
    %3700 = vmatprep.subr.bf16.mxu0 0
    %3701 = vmatpush1.bf16.msra.mxu0 %v3676
    %3702 = vmatprep.subr.bf16.mxu0 0
    %3703 = vmatpush2.bf16.msra.mxu0 0
    %3704 = vmatprep.subr.bf16.mxu0 0
    %3705 = vmatpush2.bf16.msra.mxu0 0
    %3706 = vmatprep.subr.bf16.mxu0 0
    %3707 = vmatpush2.bf16.msra.mxu0 0
    %3708 = vmatprep.subr.bf16.mxu0 0
    %3709 = vmatpush2.bf16.msra.mxu0 0
    %3710 = vmatprep.subr.bf16.mxu0 0
    %3711 = vmatpush2.bf16.msra.mxu0 0
    %3712 = vmatprep.subr.bf16.mxu0 0
    %3713 = vmatpush2.bf16.msra.mxu0 0
    %3714 = vmatprep.subr.bf16.mxu0 0
    %3715 = vmatpush2.bf16.msra.mxu0 0
    %3716 = vmatprep.subr.bf16.mxu0 0
    %3717 = vmatpush2.bf16.msra.mxu0 0
    %3718 = vmatprep.mubr.bf16.mxu0 0
    %3719 = vmatmul.mubr.bf16.gmra.mxu0 %v3681
    %v3720 = vpop.f32.mrf.mxu0
    %v3721 = vadd.f32 0.0, %v3720
    %v3722 = vpop.f32.mrf.mxu0
    %v3723 = vpop.f32.mrf.mxu0
    %v3724 = vadd.f32 0.0, %v3723
    %v3725 = vpop.f32.mrf.mxu0
    %3726 = vmatprep.mubr.bf16.mxu0 0
    %3727 = vmatmul.mubr.bf16.gmra.mxu0 %v3684
    %v3728 = vpop.f32.mrf.mxu0
    %v3729 = vadd.f32 0.0, %v3728
    %v3730 = vpop.f32.mrf.mxu0
    %v3731 = vpop.f32.mrf.mxu0
    %v3732 = vpop.f32.mrf.mxu0
    %3733 = vdwg.mxu0
    %3734 = vst.msk [vmem:[#allocation4] sm:$0xff] %vm135, %v3721
    %3735 = vst.msk [vmem:[#allocation4 + $0x8] sm:$0xff] %vm135, %v3724
    %3736 = vst.msk [vmem:[#allocation4 + $0x10] sm:$0xff] %vm135, %v3729
    %v3737 = vld [vmem:[%s1 + $0xb0] sm:$0xf]
    %v3738 = vld [vmem:[%s1 + $0xb4] sm:$0xf]
    %v3739 = vld [vmem:[%s1 + $0xb8] sm:$0xf]
    %v3740 = vld [vmem:[%s1 + $0xbc] sm:$0xf]
    %v3745 = vunpack.c.l.b16 %v3737
    %v3746 = vunpack.c.l.b16 %v3738
    %v3747 = vunpack.c.l.b16 %v3739
    %v3748 = vunpack.c.l.b16 %v3740
    %v3749 = vpack.c.b16 %v3746, %v3745
    %v3750 = vpack.c.b16 %v3748, %v3747
    %3753 = vmatprep.subr.bf16.mxu0 0
    %3754 = vmatpush1.bf16.msra.mxu0 0
    %3755 = vmatprep.subr.bf16.mxu0 0
    %3756 = vmatpush1.bf16.msra.mxu0 0
    %3757 = vmatprep.subr.bf16.mxu0 0
    %3758 = vmatpush1.bf16.msra.mxu0 0
    %3759 = vmatprep.subr.bf16.mxu0 0
    %3760 = vmatpush1.bf16.msra.mxu0 0
    %3761 = vmatprep.subr.bf16.mxu0 0
    %3762 = vmatpush1.bf16.msra.mxu0 0
    %3763 = vmatprep.subr.bf16.mxu0 0
    %3764 = vmatpush1.bf16.msra.mxu0 0
    %3765 = vmatprep.subr.bf16.mxu0 0
    %3766 = vmatpush1.bf16.msra.mxu0 %v3750
    %3767 = vmatprep.subr.bf16.mxu0 0
    %3768 = vmatpush1.bf16.msra.mxu0 %v3749
    %3769 = vmatprep.subr.bf16.mxu0 0
    %3770 = vmatpush2.bf16.msra.mxu0 0
    %3771 = vmatprep.subr.bf16.mxu0 0
    %3772 = vmatpush2.bf16.msra.mxu0 0
    %3773 = vmatprep.subr.bf16.mxu0 0
    %3774 = vmatpush2.bf16.msra.mxu0 0
    %3775 = vmatprep.subr.bf16.mxu0 0
    %3776 = vmatpush2.bf16.msra.mxu0 0
    %3777 = vmatprep.subr.bf16.mxu0 0
    %3778 = vmatpush2.bf16.msra.mxu0 0
    %3779 = vmatprep.subr.bf16.mxu0 0
    %3780 = vmatpush2.bf16.msra.mxu0 0
    %3781 = vmatprep.subr.bf16.mxu0 0
    %3782 = vmatpush2.bf16.msra.mxu0 0
    %3783 = vmatprep.subr.bf16.mxu0 0
    %3784 = vmatpush2.bf16.msra.mxu0 0
    %3785 = vmatprep.mubr.bf16.mxu0 0
    %3786 = vmatmul.mubr.bf16.gmra.mxu0 %v3681
    %v3787 = vpop.f32.mrf.mxu0
    %v3788 = vadd.f32 0.0, %v3787
    %v3789 = vpop.f32.mrf.mxu0
    %v3790 = vpop.f32.mrf.mxu0
    %v3791 = vadd.f32 0.0, %v3790
    %v3792 = vpop.f32.mrf.mxu0
    %3793 = vmatprep.mubr.bf16.mxu0 0
    %3794 = vmatmul.mubr.bf16.gmra.mxu0 %v3684
    %v3795 = vpop.f32.mrf.mxu0
    %v3796 = vadd.f32 0.0, %v3795
    %v3797 = vpop.f32.mrf.mxu0
    %v3798 = vpop.f32.mrf.mxu0
    %v3799 = vpop.f32.mrf.mxu0
    %3800 = vdwg.mxu0
    %3801 = vst.msk [vmem:[#allocation4 + $0x18] sm:$0xff] %vm135, %v3788
    %3802 = vst.msk [vmem:[#allocation4 + $0x20] sm:$0xff] %vm135, %v3791
    %3803 = vst.msk [vmem:[#allocation4 + $0x28] sm:$0xff] %vm135, %v3796
    %v3804 = vld [vmem:[%s1 + $0xc0] sm:$0xf]
    %v3805 = vld [vmem:[%s1 + $0xc4] sm:$0xf]
    %v3806 = vld [vmem:[%s1 + $0xc8] sm:$0xf]
    %v3807 = vld [vmem:[%s1 + $0xcc] sm:$0xf]
    %v3812 = vunpack.c.l.b16 %v3804
    %v3813 = vunpack.c.l.b16 %v3805
    %v3814 = vunpack.c.l.b16 %v3806
    %v3815 = vunpack.c.l.b16 %v3807
    %v3816 = vpack.c.b16 %v3813, %v3812
    %v3817 = vpack.c.b16 %v3815, %v3814
    %3820 = vmatprep.subr.bf16.mxu0 0
    %3821 = vmatpush1.bf16.msra.mxu0 0
    %3822 = vmatprep.subr.bf16.mxu0 0
    %3823 = vmatpush1.bf16.msra.mxu0 0
    %3824 = vmatprep.subr.bf16.mxu0 0
    %3825 = vmatpush1.bf16.msra.mxu0 0
    %3826 = vmatprep.subr.bf16.mxu0 0
    %3827 = vmatpush1.bf16.msra.mxu0 0
    %3828 = vmatprep.subr.bf16.mxu0 0
    %3829 = vmatpush1.bf16.msra.mxu0 0
    %3830 = vmatprep.subr.bf16.mxu0 0
    %3831 = vmatpush1.bf16.msra.mxu0 0
    %3832 = vmatprep.subr.bf16.mxu0 0
    %3833 = vmatpush1.bf16.msra.mxu0 %v3817
    %3834 = vmatprep.subr.bf16.mxu0 0
    %3835 = vmatpush1.bf16.msra.mxu0 %v3816
    %3836 = vmatprep.subr.bf16.mxu0 0
    %3837 = vmatpush2.bf16.msra.mxu0 0
    %3838 = vmatprep.subr.bf16.mxu0 0
    %3839 = vmatpush2.bf16.msra.mxu0 0
    %3840 = vmatprep.subr.bf16.mxu0 0
    %3841 = vmatpush2.bf16.msra.mxu0 0
    %3842 = vmatprep.subr.bf16.mxu0 0
    %3843 = vmatpush2.bf16.msra.mxu0 0
    %3844 = vmatprep.subr.bf16.mxu0 0
    %3845 = vmatpush2.bf16.msra.mxu0 0
    %3846 = vmatprep.subr.bf16.mxu0 0
    %3847 = vmatpush2.bf16.msra.mxu0 0
    %3848 = vmatprep.subr.bf16.mxu0 0
    %3849 = vmatpush2.bf16.msra.mxu0 0
    %3850 = vmatprep.subr.bf16.mxu0 0
    %3851 = vmatpush2.bf16.msra.mxu0 0
    %3852 = vmatprep.mubr.bf16.mxu0 0
    %3853 = vmatmul.mubr.bf16.gmra.mxu0 %v3681
    %v3854 = vpop.f32.mrf.mxu0
    %v3855 = vadd.f32 0.0, %v3854
    %v3856 = vpop.f32.mrf.mxu0
    %v3857 = vpop.f32.mrf.mxu0
    %v3858 = vadd.f32 0.0, %v3857
    %v3859 = vpop.f32.mrf.mxu0
    %3860 = vmatprep.mubr.bf16.mxu0 0
    %3861 = vmatmul.mubr.bf16.gmra.mxu0 %v3684
    %v3862 = vpop.f32.mrf.mxu0
    %v3863 = vadd.f32 0.0, %v3862
    %v3864 = vpop.f32.mrf.mxu0
    %v3865 = vpop.f32.mrf.mxu0
    %v3866 = vpop.f32.mrf.mxu0
    %3867 = vdwg.mxu0
    %3868 = vst.msk [vmem:[#allocation4 + $0x30] sm:$0xff] %vm135, %v3855
    %3869 = vst.msk [vmem:[#allocation4 + $0x38] sm:$0xff] %vm135, %v3858
    %3870 = vst.msk [vmem:[#allocation4 + $0x40] sm:$0xff] %vm135, %v3863
    %v3871 = vld [vmem:[%s12] sm:$0xff]
    %v3872 = vld [vmem:[%s12 + $0x8] sm:$0xf]
    %v3873 = vld [vmem:[#allocation4] sm:$0xff]
    %v3874 = vld [vmem:[#allocation4 + $0x8] sm:$0xff]
    %v3875 = vld [vmem:[#allocation4 + $0x10] sm:$0xff]
    %v3876 = vld [vmem:[#allocation4 + $0x18] sm:$0xff]
    %v3877 = vld [vmem:[#allocation4 + $0x20] sm:$0xff]
    %v3878 = vld [vmem:[#allocation4 + $0x28] sm:$0xff]
    %v3879 = vld [vmem:[#allocation4 + $0x30] sm:$0xff]
    %v3880 = vld [vmem:[#allocation4 + $0x38] sm:$0xff]
    %v3881 = vld [vmem:[#allocation4 + $0x40] sm:$0xff]
    %vm3882 = vcmask 588800
    %v3884 = vsel %vm3882, %v3871, 0
    %v3887 = vsel %vm3882, %v3872, 0
    %3889 = vmatprep.subr.mxu0 0.0
    %3890 = vmatpush1.msra.mxu0 0.0
    %3891 = vmatprep.subr.mxu0 0.0
    %3892 = vmatpush1.msra.mxu0 0.0
    %3893 = vmatprep.subr.mxu0 0.0
    %3894 = vmatpush1.msra.mxu0 0.0
    %3895 = vmatprep.subr.mxu0 0.0
    %3896 = vmatpush1.msra.mxu0 0.0
    %3897 = vmatprep.subr.mxu0 0.0
    %3898 = vmatpush1.msra.mxu0 0.0
    %3899 = vmatprep.subr.mxu0 0.0
    %3900 = vmatpush1.msra.mxu0 0.0
    %3901 = vmatprep.subr.mxu0 0.0
    %3902 = vmatpush1.msra.mxu0 0.0
    %3903 = vmatprep.subr.mxu0 0.0
    %3904 = vmatpush1.msra.mxu0 %v3881
    %3905 = vmatprep.subr.mxu0 0.0
    %3906 = vmatpush1.msra.mxu0 %v3880
    %3907 = vmatprep.subr.mxu0 0.0
    %3908 = vmatpush1.msra.mxu0 %v3879
    %3909 = vmatprep.subr.mxu0 0.0
    %3910 = vmatpush1.msra.mxu0 %v3878
    %3911 = vmatprep.subr.mxu0 0.0
    %3912 = vmatpush1.msra.mxu0 %v3877
    %3913 = vmatprep.subr.mxu0 0.0
    %3914 = vmatpush1.msra.mxu0 %v3876
    %3915 = vmatprep.subr.mxu0 0.0
    %3916 = vmatpush1.msra.mxu0 %v3875
    %3917 = vmatprep.subr.mxu0 0.0
    %3918 = vmatpush1.msra.mxu0 %v3874
    %3919 = vmatprep.subr.mxu0 0.0
    %3920 = vmatpush1.msra.mxu0 %v3873
    %3921 = vmatprep.subr.mxu0 0.0
    %3922 = vmatpush2.msra.mxu0 0.0
    %3923 = vmatprep.subr.mxu0 0.0
    %3924 = vmatpush2.msra.mxu0 0.0
    %3925 = vmatprep.subr.mxu0 0.0
    %3926 = vmatpush2.msra.mxu0 0.0
    %3927 = vmatprep.subr.mxu0 0.0
    %3928 = vmatpush2.msra.mxu0 0.0
    %3929 = vmatprep.subr.mxu0 0.0
    %3930 = vmatpush2.msra.mxu0 0.0
    %3931 = vmatprep.subr.mxu0 0.0
    %3932 = vmatpush2.msra.mxu0 0.0
    %3933 = vmatprep.subr.mxu0 0.0
    %3934 = vmatpush2.msra.mxu0 0.0
    %3935 = vmatprep.subr.mxu0 0.0
    %3936 = vmatpush2.msra.mxu0 0.0
    %3937 = vmatprep.subr.mxu0 0.0
    %3938 = vmatpush2.msra.mxu0 0.0
    %3939 = vmatprep.subr.mxu0 0.0
    %3940 = vmatpush2.msra.mxu0 0.0
    %3941 = vmatprep.subr.mxu0 0.0
    %3942 = vmatpush2.msra.mxu0 0.0
    %3943 = vmatprep.subr.mxu0 0.0
    %3944 = vmatpush2.msra.mxu0 0.0
    %3945 = vmatprep.subr.mxu0 0.0
    %3946 = vmatpush2.msra.mxu0 0.0
    %3947 = vmatprep.subr.mxu0 0.0
    %3948 = vmatpush2.msra.mxu0 0.0
    %3949 = vmatprep.subr.mxu0 0.0
    %3950 = vmatpush2.msra.mxu0 0.0
    %3951 = vmatprep.subr.mxu0 0.0
    %3952 = vmatpush2.msra.mxu0 0.0
    %3953 = vmatprep.mubr.f32.mxu0 0.0
    %3954 = vmatmul.mubr.f32.gmra.mxu0 %v3884
    %v3955 = vpop.f32.mrf.mxu0
    %v3956 = vadd.f32 0.0, %v3955
    %v3957 = vpop.f32.mrf.mxu0
    %3958 = vmatprep.mubr.f32.mxu0 0.0
    %3959 = vmatmul.mubr.f32.gmra.mxu0 %v3887
    %v3960 = vpop.f32.mrf.mxu0
    %v3961 = vadd.f32 0.0, %v3960
    %v3962 = vpop.f32.mrf.mxu0
    %3963 = vdwg.mxu0
    %v3964 = vadd.f32 %v3658, %v3956
    %v3965 = vadd.f32 %v3661, %v3961
    %v3966 = vmax.f32 %v3964, 0.0
    %v3967 = vmax.f32 %v3965, 0.0
    %v3968 = vadd.f32 %v3408, %v3966
    %v3969 = vadd.f32 %v3413, %v3967
    %v3970 = vld [vmem:[%s11] sm:$0xff]
    %v3971 = vld [vmem:[%s11 + $0x8] sm:$0xff]
    %v3972 = vld [vmem:[%s11 + $0x10] sm:$0xff]
    %v3974 = vsel %vm3498, %v3970, 0
    %v3977 = vsel %vm3498, %v3971, 0
    %v3980 = vsel %vm3498, %v3972, 0
    %v3983 = vsel %vm3337, %v3969, 0
    %3985 = vmatprep.subr.mxu0 0.0
    %3986 = vmatpush1.msra.mxu0 0.0
    %3987 = vmatprep.subr.mxu0 0.0
    %3988 = vmatpush1.msra.mxu0 0.0
    %3989 = vmatprep.subr.mxu0 0.0
    %3990 = vmatpush1.msra.mxu0 0.0
    %3991 = vmatprep.subr.mxu0 0.0
    %3992 = vmatpush1.msra.mxu0 0.0
    %3993 = vmatprep.subr.mxu0 0.0
    %3994 = vmatpush1.msra.mxu0 0.0
    %3995 = vmatprep.subr.mxu0 0.0
    %3996 = vmatpush1.msra.mxu0 0.0
    %3997 = vmatprep.subr.mxu0 0.0
    %3998 = vmatpush1.msra.mxu0 0.0
    %3999 = vmatprep.subr.mxu0 0.0
    %4000 = vmatpush1.msra.mxu0 0.0
    %4001 = vmatprep.subr.mxu0 0.0
    %4002 = vmatpush1.msra.mxu0 0.0
    %4003 = vmatprep.subr.mxu0 0.0
    %4004 = vmatpush1.msra.mxu0 0.0
    %4005 = vmatprep.subr.mxu0 0.0
    %4006 = vmatpush1.msra.mxu0 0.0
    %4007 = vmatprep.subr.mxu0 0.0
    %4008 = vmatpush1.msra.mxu0 0.0
    %4009 = vmatprep.subr.mxu0 0.0
    %4010 = vmatpush1.msra.mxu0 0.0
    %4011 = vmatprep.subr.mxu0 0.0
    %4012 = vmatpush1.msra.mxu0 0.0
    %4013 = vmatprep.subr.mxu0 0.0
    %4014 = vmatpush1.msra.mxu0 %v3983
    %4015 = vmatprep.subr.mxu0 0.0
    %4016 = vmatpush1.msra.mxu0 %v3968
    %4017 = vmatprep.subr.mxu0 0.0
    %4018 = vmatpush2.msra.mxu0 0.0
    %4019 = vmatprep.subr.mxu0 0.0
    %4020 = vmatpush2.msra.mxu0 0.0
    %4021 = vmatprep.subr.mxu0 0.0
    %4022 = vmatpush2.msra.mxu0 0.0
    %4023 = vmatprep.subr.mxu0 0.0
    %4024 = vmatpush2.msra.mxu0 0.0
    %4025 = vmatprep.subr.mxu0 0.0
    %4026 = vmatpush2.msra.mxu0 0.0
    %4027 = vmatprep.subr.mxu0 0.0
    %4028 = vmatpush2.msra.mxu0 0.0
    %4029 = vmatprep.subr.mxu0 0.0
    %4030 = vmatpush2.msra.mxu0 0.0
    %4031 = vmatprep.subr.mxu0 0.0
    %4032 = vmatpush2.msra.mxu0 0.0
    %4033 = vmatprep.subr.mxu0 0.0
    %4034 = vmatpush2.msra.mxu0 0.0
    %4035 = vmatprep.subr.mxu0 0.0
    %4036 = vmatpush2.msra.mxu0 0.0
    %4037 = vmatprep.subr.mxu0 0.0
    %4038 = vmatpush2.msra.mxu0 0.0
    %4039 = vmatprep.subr.mxu0 0.0
    %4040 = vmatpush2.msra.mxu0 0.0
    %4041 = vmatprep.subr.mxu0 0.0
    %4042 = vmatpush2.msra.mxu0 0.0
    %4043 = vmatprep.subr.mxu0 0.0
    %4044 = vmatpush2.msra.mxu0 0.0
    %4045 = vmatprep.subr.mxu0 0.0
    %4046 = vmatpush2.msra.mxu0 0.0
    %4047 = vmatprep.subr.mxu0 0.0
    %4048 = vmatpush2.msra.mxu0 0.0
    %4049 = vmatprep.mubr.f32.mxu0 0.0
    %4050 = vmatmul.mubr.f32.gmra.mxu0 %v3974
    %v4051 = vpop.f32.mrf.mxu0
    %v4052 = vadd.f32 0.0, %v4051
    %v4053 = vpop.f32.mrf.mxu0
    %4054 = vmatprep.mubr.f32.mxu0 0.0
    %4055 = vmatmul.mubr.f32.gmra.mxu0 %v3977
    %v4056 = vpop.f32.mrf.mxu0
    %v4057 = vadd.f32 0.0, %v4056
    %v4058 = vpop.f32.mrf.mxu0
    %4059 = vmatprep.mubr.f32.mxu0 0.0
    %4060 = vmatmul.mubr.f32.gmra.mxu0 %v3980
    %v4061 = vpop.f32.mrf.mxu0
    %v4062 = vadd.f32 0.0, %v4061
    %v4063 = vpop.f32.mrf.mxu0
    %4064 = vdwg.mxu0
    %v4065 = vmul.f32 %v4052, %v3482
    %v4066 = vmul.f32 %v4057, %v3485
    %v4067 = vmul.f32 %v4062, %v3490
    %v4068 = vmax.f32 %v4065, 0.0
    %v4069 = vmax.f32 %v4066, 0.0
    %v4070 = vmax.f32 %v4067, 0.0
    %v4071 = vpack.c.bf16 %v4069, %v4068
    %v4072 = vpack.c.bf16 %v4070, %v4070
    %v4073 = vpack.c.bf16 %v3969, %v3968
    %v4074 = vld [vmem:[%s1 + $0x90] sm:$0xf]
    %v4075 = vld [vmem:[%s1 + $0x94] sm:$0xf]
    %v4076 = vld [vmem:[%s1 + $0x98] sm:$0xf]
    %v4077 = vld [vmem:[%s1 + $0x9c] sm:$0xf]
    %v4078 = vlaneseq
    %v4079 = vshrl.u32 %v4078, 7
    %v4080 = vsub.s32 5, %v4079
    %v4081 = vrot.slane %v104, %v4080
    %v4086 = vunpack.c.l.b16 %v4074
    %v4087 = vunpack.c.l.b16 %v4075
    %v4088 = vunpack.c.l.b16 %v4076
    %v4089 = vunpack.c.l.b16 %v4077
    %v4090 = vpack.c.b16 %v4087, %v4086
    %v4091 = vpack.c.b16 %v4089, %v4088
    %v4095 = vsel %vm135, %v4073, 0
    %4097 = vmatprep.subr.bf16.mxu0 0
    %4098 = vmatpush1.bf16.msra.mxu0 0
    %4099 = vmatprep.subr.bf16.mxu0 0
    %4100 = vmatpush1.bf16.msra.mxu0 0
    %4101 = vmatprep.subr.bf16.mxu0 0
    %4102 = vmatpush1.bf16.msra.mxu0 0
    %4103 = vmatprep.subr.bf16.mxu0 0
    %4104 = vmatpush1.bf16.msra.mxu0 0
    %4105 = vmatprep.subr.bf16.mxu0 0
    %4106 = vmatpush1.bf16.msra.mxu0 0
    %4107 = vmatprep.subr.bf16.mxu0 0
    %4108 = vmatpush1.bf16.msra.mxu0 0
    %4109 = vmatprep.subr.bf16.mxu0 0
    %4110 = vmatpush1.bf16.msra.mxu0 %v4091
    %4111 = vmatprep.subr.bf16.mxu0 0
    %4112 = vmatpush1.bf16.msra.mxu0 %v4090
    %4113 = vmatprep.subr.bf16.mxu0 0
    %4114 = vmatpush2.bf16.msra.mxu0 0
    %4115 = vmatprep.subr.bf16.mxu0 0
    %4116 = vmatpush2.bf16.msra.mxu0 0
    %4117 = vmatprep.subr.bf16.mxu0 0
    %4118 = vmatpush2.bf16.msra.mxu0 0
    %4119 = vmatprep.subr.bf16.mxu0 0
    %4120 = vmatpush2.bf16.msra.mxu0 0
    %4121 = vmatprep.subr.bf16.mxu0 0
    %4122 = vmatpush2.bf16.msra.mxu0 0
    %4123 = vmatprep.subr.bf16.mxu0 0
    %4124 = vmatpush2.bf16.msra.mxu0 0
    %4125 = vmatprep.subr.bf16.mxu0 0
    %4126 = vmatpush2.bf16.msra.mxu0 0
    %4127 = vmatprep.subr.bf16.mxu0 0
    %4128 = vmatpush2.bf16.msra.mxu0 0
    %4129 = vmatprep.mubr.bf16.mxu0 0
    %4130 = vmatmul.mubr.bf16.gmra.mxu0 %v4095
    %v4131 = vpop.f32.mrf.mxu0
    %v4132 = vadd.f32 %v4081, %v4131
    %v4133 = vpop.f32.mrf.mxu0
    %v4134 = vpop.f32.mrf.mxu0
    %v4135 = vadd.f32 %v4081, %v4134
    %v4136 = vpop.f32.mrf.mxu0
    %4137 = vdwg.mxu0
    %v4138 = vld [vmem:[%s1 + $0xd0] sm:$0xf]
    %v4139 = vld [vmem:[%s1 + $0xd4] sm:$0xf]
    %v4140 = vld [vmem:[%s1 + $0xd8] sm:$0xf]
    %v4141 = vld [vmem:[%s1 + $0xdc] sm:$0xf]
    %v4146 = vunpack.c.l.b16 %v4138
    %v4147 = vunpack.c.l.b16 %v4139
    %v4148 = vunpack.c.l.b16 %v4140
    %v4149 = vunpack.c.l.b16 %v4141
    %v4150 = vpack.c.b16 %v4147, %v4146
    %v4151 = vpack.c.b16 %v4149, %v4148
    %v4155 = vsel %vm135, %v4071, 0
    %v4158 = vsel %vm135, %v4072, 0
    %4160 = vmatprep.subr.bf16.mxu0 0
    %4161 = vmatpush1.bf16.msra.mxu0 0
    %4162 = vmatprep.subr.bf16.mxu0 0
    %4163 = vmatpush1.bf16.msra.mxu0 0
    %4164 = vmatprep.subr.bf16.mxu0 0
    %4165 = vmatpush1.bf16.msra.mxu0 0
    %4166 = vmatprep.subr.bf16.mxu0 0
    %4167 = vmatpush1.bf16.msra.mxu0 0
    %4168 = vmatprep.subr.bf16.mxu0 0
    %4169 = vmatpush1.bf16.msra.mxu0 0
    %4170 = vmatprep.subr.bf16.mxu0 0
    %4171 = vmatpush1.bf16.msra.mxu0 0
    %4172 = vmatprep.subr.bf16.mxu0 0
    %4173 = vmatpush1.bf16.msra.mxu0 %v4151
    %4174 = vmatprep.subr.bf16.mxu0 0
    %4175 = vmatpush1.bf16.msra.mxu0 %v4150
    %4176 = vmatprep.subr.bf16.mxu0 0
    %4177 = vmatpush2.bf16.msra.mxu0 0
    %4178 = vmatprep.subr.bf16.mxu0 0
    %4179 = vmatpush2.bf16.msra.mxu0 0
    %4180 = vmatprep.subr.bf16.mxu0 0
    %4181 = vmatpush2.bf16.msra.mxu0 0
    %4182 = vmatprep.subr.bf16.mxu0 0
    %4183 = vmatpush2.bf16.msra.mxu0 0
    %4184 = vmatprep.subr.bf16.mxu0 0
    %4185 = vmatpush2.bf16.msra.mxu0 0
    %4186 = vmatprep.subr.bf16.mxu0 0
    %4187 = vmatpush2.bf16.msra.mxu0 0
    %4188 = vmatprep.subr.bf16.mxu0 0
    %4189 = vmatpush2.bf16.msra.mxu0 0
    %4190 = vmatprep.subr.bf16.mxu0 0
    %4191 = vmatpush2.bf16.msra.mxu0 0
    %4192 = vmatprep.mubr.bf16.mxu0 0
    %4193 = vmatmul.mubr.bf16.gmra.mxu0 %v4155
    %v4194 = vpop.f32.mrf.mxu0
    %v4195 = vadd.f32 0.0, %v4194
    %v4196 = vpop.f32.mrf.mxu0
    %v4197 = vpop.f32.mrf.mxu0
    %v4198 = vadd.f32 0.0, %v4197
    %v4199 = vpop.f32.mrf.mxu0
    %4200 = vmatprep.mubr.bf16.mxu0 0
    %4201 = vmatmul.mubr.bf16.gmra.mxu0 %v4158
    %v4202 = vpop.f32.mrf.mxu0
    %v4203 = vadd.f32 0.0, %v4202
    %v4204 = vpop.f32.mrf.mxu0
    %v4205 = vpop.f32.mrf.mxu0
    %v4206 = vpop.f32.mrf.mxu0
    %4207 = vdwg.mxu0
    %4208 = vst.msk [vmem:[#allocation4] sm:$0xff] %vm135, %v4195
    %4209 = vst.msk [vmem:[#allocation4 + $0x8] sm:$0xff] %vm135, %v4198
    %4210 = vst.msk [vmem:[#allocation4 + $0x10] sm:$0xff] %vm135, %v4203
    %v4211 = vld [vmem:[%s1 + $0xe0] sm:$0xf]
    %v4212 = vld [vmem:[%s1 + $0xe4] sm:$0xf]
    %v4213 = vld [vmem:[%s1 + $0xe8] sm:$0xf]
    %v4214 = vld [vmem:[%s1 + $0xec] sm:$0xf]
    %v4219 = vunpack.c.l.b16 %v4211
    %v4220 = vunpack.c.l.b16 %v4212
    %v4221 = vunpack.c.l.b16 %v4213
    %v4222 = vunpack.c.l.b16 %v4214
    %v4223 = vpack.c.b16 %v4220, %v4219
    %v4224 = vpack.c.b16 %v4222, %v4221
    %4227 = vmatprep.subr.bf16.mxu0 0
    %4228 = vmatpush1.bf16.msra.mxu0 0
    %4229 = vmatprep.subr.bf16.mxu0 0
    %4230 = vmatpush1.bf16.msra.mxu0 0
    %4231 = vmatprep.subr.bf16.mxu0 0
    %4232 = vmatpush1.bf16.msra.mxu0 0
    %4233 = vmatprep.subr.bf16.mxu0 0
    %4234 = vmatpush1.bf16.msra.mxu0 0
    %4235 = vmatprep.subr.bf16.mxu0 0
    %4236 = vmatpush1.bf16.msra.mxu0 0
    %4237 = vmatprep.subr.bf16.mxu0 0
    %4238 = vmatpush1.bf16.msra.mxu0 0
    %4239 = vmatprep.subr.bf16.mxu0 0
    %4240 = vmatpush1.bf16.msra.mxu0 %v4224
    %4241 = vmatprep.subr.bf16.mxu0 0
    %4242 = vmatpush1.bf16.msra.mxu0 %v4223
    %4243 = vmatprep.subr.bf16.mxu0 0
    %4244 = vmatpush2.bf16.msra.mxu0 0
    %4245 = vmatprep.subr.bf16.mxu0 0
    %4246 = vmatpush2.bf16.msra.mxu0 0
    %4247 = vmatprep.subr.bf16.mxu0 0
    %4248 = vmatpush2.bf16.msra.mxu0 0
    %4249 = vmatprep.subr.bf16.mxu0 0
    %4250 = vmatpush2.bf16.msra.mxu0 0
    %4251 = vmatprep.subr.bf16.mxu0 0
    %4252 = vmatpush2.bf16.msra.mxu0 0
    %4253 = vmatprep.subr.bf16.mxu0 0
    %4254 = vmatpush2.bf16.msra.mxu0 0
    %4255 = vmatprep.subr.bf16.mxu0 0
    %4256 = vmatpush2.bf16.msra.mxu0 0
    %4257 = vmatprep.subr.bf16.mxu0 0
    %4258 = vmatpush2.bf16.msra.mxu0 0
    %4259 = vmatprep.mubr.bf16.mxu0 0
    %4260 = vmatmul.mubr.bf16.gmra.mxu0 %v4155
    %v4261 = vpop.f32.mrf.mxu0
    %v4262 = vadd.f32 0.0, %v4261
    %v4263 = vpop.f32.mrf.mxu0
    %v4264 = vpop.f32.mrf.mxu0
    %v4265 = vadd.f32 0.0, %v4264
    %v4266 = vpop.f32.mrf.mxu0
    %4267 = vmatprep.mubr.bf16.mxu0 0
    %4268 = vmatmul.mubr.bf16.gmra.mxu0 %v4158
    %v4269 = vpop.f32.mrf.mxu0
    %v4270 = vadd.f32 0.0, %v4269
    %v4271 = vpop.f32.mrf.mxu0
    %v4272 = vpop.f32.mrf.mxu0
    %v4273 = vpop.f32.mrf.mxu0
    %4274 = vdwg.mxu0
    %4275 = vst.msk [vmem:[#allocation4 + $0x18] sm:$0xff] %vm135, %v4262
    %4276 = vst.msk [vmem:[#allocation4 + $0x20] sm:$0xff] %vm135, %v4265
    %4277 = vst.msk [vmem:[#allocation4 + $0x28] sm:$0xff] %vm135, %v4270
    %v4278 = vld [vmem:[%s1 + $0xf0] sm:$0xf]
    %v4279 = vld [vmem:[%s1 + $0xf4] sm:$0xf]
    %v4280 = vld [vmem:[%s1 + $0xf8] sm:$0xf]
    %v4281 = vld [vmem:[%s1 + $0xfc] sm:$0xf]
    %v4286 = vunpack.c.l.b16 %v4278
    %v4287 = vunpack.c.l.b16 %v4279
    %v4288 = vunpack.c.l.b16 %v4280
    %v4289 = vunpack.c.l.b16 %v4281
    %v4290 = vpack.c.b16 %v4287, %v4286
    %v4291 = vpack.c.b16 %v4289, %v4288
    %4294 = vmatprep.subr.bf16.mxu0 0
    %4295 = vmatpush1.bf16.msra.mxu0 0
    %4296 = vmatprep.subr.bf16.mxu0 0
    %4297 = vmatpush1.bf16.msra.mxu0 0
    %4298 = vmatprep.subr.bf16.mxu0 0
    %4299 = vmatpush1.bf16.msra.mxu0 0
    %4300 = vmatprep.subr.bf16.mxu0 0
    %4301 = vmatpush1.bf16.msra.mxu0 0
    %4302 = vmatprep.subr.bf16.mxu0 0
    %4303 = vmatpush1.bf16.msra.mxu0 0
    %4304 = vmatprep.subr.bf16.mxu0 0
    %4305 = vmatpush1.bf16.msra.mxu0 0
    %4306 = vmatprep.subr.bf16.mxu0 0
    %4307 = vmatpush1.bf16.msra.mxu0 %v4291
    %4308 = vmatprep.subr.bf16.mxu0 0
    %4309 = vmatpush1.bf16.msra.mxu0 %v4290
    %4310 = vmatprep.subr.bf16.mxu0 0
    %4311 = vmatpush2.bf16.msra.mxu0 0
    %4312 = vmatprep.subr.bf16.mxu0 0
    %4313 = vmatpush2.bf16.msra.mxu0 0
    %4314 = vmatprep.subr.bf16.mxu0 0
    %4315 = vmatpush2.bf16.msra.mxu0 0
    %4316 = vmatprep.subr.bf16.mxu0 0
    %4317 = vmatpush2.bf16.msra.mxu0 0
    %4318 = vmatprep.subr.bf16.mxu0 0
    %4319 = vmatpush2.bf16.msra.mxu0 0
    %4320 = vmatprep.subr.bf16.mxu0 0
    %4321 = vmatpush2.bf16.msra.mxu0 0
    %4322 = vmatprep.subr.bf16.mxu0 0
    %4323 = vmatpush2.bf16.msra.mxu0 0
    %4324 = vmatprep.subr.bf16.mxu0 0
    %4325 = vmatpush2.bf16.msra.mxu0 0
    %4326 = vmatprep.mubr.bf16.mxu0 0
    %4327 = vmatmul.mubr.bf16.gmra.mxu0 %v4155
    %v4328 = vpop.f32.mrf.mxu0
    %v4329 = vadd.f32 0.0, %v4328
    %v4330 = vpop.f32.mrf.mxu0
    %v4331 = vpop.f32.mrf.mxu0
    %v4332 = vadd.f32 0.0, %v4331
    %v4333 = vpop.f32.mrf.mxu0
    %4334 = vmatprep.mubr.bf16.mxu0 0
    %4335 = vmatmul.mubr.bf16.gmra.mxu0 %v4158
    %v4336 = vpop.f32.mrf.mxu0
    %v4337 = vadd.f32 0.0, %v4336
    %v4338 = vpop.f32.mrf.mxu0
    %v4339 = vpop.f32.mrf.mxu0
    %v4340 = vpop.f32.mrf.mxu0
    %4341 = vdwg.mxu0
    %4342 = vst.msk [vmem:[#allocation4 + $0x30] sm:$0xff] %vm135, %v4329
    %4343 = vst.msk [vmem:[#allocation4 + $0x38] sm:$0xff] %vm135, %v4332
    %4344 = vst.msk [vmem:[#allocation4 + $0x40] sm:$0xff] %vm135, %v4337
    %v4345 = vld [vmem:[%s12] sm:$0xff]
    %v4346 = vld [vmem:[%s12 + $0x8] sm:$0xf]
    %v4347 = vld [vmem:[#allocation4] sm:$0xff]
    %v4348 = vld [vmem:[#allocation4 + $0x8] sm:$0xff]
    %v4349 = vld [vmem:[#allocation4 + $0x10] sm:$0xff]
    %v4350 = vld [vmem:[#allocation4 + $0x18] sm:$0xff]
    %v4351 = vld [vmem:[#allocation4 + $0x20] sm:$0xff]
    %v4352 = vld [vmem:[#allocation4 + $0x28] sm:$0xff]
    %v4353 = vld [vmem:[#allocation4 + $0x30] sm:$0xff]
    %v4354 = vld [vmem:[#allocation4 + $0x38] sm:$0xff]
    %v4355 = vld [vmem:[#allocation4 + $0x40] sm:$0xff]
    %v4357 = vsel %vm3882, %v4345, 0
    %v4360 = vsel %vm3882, %v4346, 0
    %4362 = vmatprep.subr.mxu0 0.0
    %4363 = vmatpush1.msra.mxu0 0.0
    %4364 = vmatprep.subr.mxu0 0.0
    %4365 = vmatpush1.msra.mxu0 0.0
    %4366 = vmatprep.subr.mxu0 0.0
    %4367 = vmatpush1.msra.mxu0 0.0
    %4368 = vmatprep.subr.mxu0 0.0
    %4369 = vmatpush1.msra.mxu0 0.0
    %4370 = vmatprep.subr.mxu0 0.0
    %4371 = vmatpush1.msra.mxu0 0.0
    %4372 = vmatprep.subr.mxu0 0.0
    %4373 = vmatpush1.msra.mxu0 0.0
    %4374 = vmatprep.subr.mxu0 0.0
    %4375 = vmatpush1.msra.mxu0 0.0
    %4376 = vmatprep.subr.mxu0 0.0
    %4377 = vmatpush1.msra.mxu0 %v4355
    %4378 = vmatprep.subr.mxu0 0.0
    %4379 = vmatpush1.msra.mxu0 %v4354
    %4380 = vmatprep.subr.mxu0 0.0
    %4381 = vmatpush1.msra.mxu0 %v4353
    %4382 = vmatprep.subr.mxu0 0.0
    %4383 = vmatpush1.msra.mxu0 %v4352
    %4384 = vmatprep.subr.mxu0 0.0
    %4385 = vmatpush1.msra.mxu0 %v4351
    %4386 = vmatprep.subr.mxu0 0.0
    %4387 = vmatpush1.msra.mxu0 %v4350
    %4388 = vmatprep.subr.mxu0 0.0
    %4389 = vmatpush1.msra.mxu0 %v4349
    %4390 = vmatprep.subr.mxu0 0.0
    %4391 = vmatpush1.msra.mxu0 %v4348
    %4392 = vmatprep.subr.mxu0 0.0
    %4393 = vmatpush1.msra.mxu0 %v4347
    %4394 = vmatprep.subr.mxu0 0.0
    %4395 = vmatpush2.msra.mxu0 0.0
    %4396 = vmatprep.subr.mxu0 0.0
    %4397 = vmatpush2.msra.mxu0 0.0
    %4398 = vmatprep.subr.mxu0 0.0
    %4399 = vmatpush2.msra.mxu0 0.0
    %4400 = vmatprep.subr.mxu0 0.0
    %4401 = vmatpush2.msra.mxu0 0.0
    %4402 = vmatprep.subr.mxu0 0.0
    %4403 = vmatpush2.msra.mxu0 0.0
    %4404 = vmatprep.subr.mxu0 0.0
    %4405 = vmatpush2.msra.mxu0 0.0
    %4406 = vmatprep.subr.mxu0 0.0
    %4407 = vmatpush2.msra.mxu0 0.0
    %4408 = vmatprep.subr.mxu0 0.0
    %4409 = vmatpush2.msra.mxu0 0.0
    %4410 = vmatprep.subr.mxu0 0.0
    %4411 = vmatpush2.msra.mxu0 0.0
    %4412 = vmatprep.subr.mxu0 0.0
    %4413 = vmatpush2.msra.mxu0 0.0
    %4414 = vmatprep.subr.mxu0 0.0
    %4415 = vmatpush2.msra.mxu0 0.0
    %4416 = vmatprep.subr.mxu0 0.0
    %4417 = vmatpush2.msra.mxu0 0.0
    %4418 = vmatprep.subr.mxu0 0.0
    %4419 = vmatpush2.msra.mxu0 0.0
    %4420 = vmatprep.subr.mxu0 0.0
    %4421 = vmatpush2.msra.mxu0 0.0
    %4422 = vmatprep.subr.mxu0 0.0
    %4423 = vmatpush2.msra.mxu0 0.0
    %4424 = vmatprep.subr.mxu0 0.0
    %4425 = vmatpush2.msra.mxu0 0.0
    %4426 = vmatprep.mubr.f32.mxu0 0.0
    %4427 = vmatmul.mubr.f32.gmra.mxu0 %v4357
    %v4428 = vpop.f32.mrf.mxu0
    %v4429 = vadd.f32 0.0, %v4428
    %v4430 = vpop.f32.mrf.mxu0
    %4431 = vmatprep.mubr.f32.mxu0 0.0
    %4432 = vmatmul.mubr.f32.gmra.mxu0 %v4360
    %v4433 = vpop.f32.mrf.mxu0
    %v4434 = vadd.f32 0.0, %v4433
    %v4435 = vpop.f32.mrf.mxu0
    %4436 = vdwg.mxu0
    %v4437 = vadd.f32 %v4132, %v4429
    %v4438 = vadd.f32 %v4135, %v4434
    %v4439 = vmax.f32 %v4437, 0.0
    %v4440 = vmax.f32 %v4438, 0.0
    %v4441 = vadd.f32 %v3968, %v4439
    %v4442 = vadd.f32 %v3969, %v4440
    %v4443 = vpack.c.bf16 %v4442, %v4441
    %v4444 = vld [vmem:[%s6] sm:$0xf]
    %v4445 = vld [vmem:[%s6 + $0x4] sm:$0xf]
    %v4446 = vld [vmem:[%s6 + $0x8] sm:$0xf]
    %v4447 = vld [vmem:[%s6 + $0xc] sm:$0xf]
    %v4448 = vlaneseq
    %v4449 = vshrl.u32 %v4448, 7
    %v4450 = vsub.s32 3, %v4449
    %v4451 = vrot.slane %v105, %v4450
    %v4456 = vunpack.c.l.b16 %v4444
    %v4457 = vunpack.c.l.b16 %v4445
    %v4458 = vunpack.c.l.b16 %v4446
    %v4459 = vunpack.c.l.b16 %v4447
    %v4460 = vpack.c.b16 %v4457, %v4456
    %v4461 = vpack.c.b16 %v4459, %v4458
    %v4465 = vsel %vm135, %v4443, 0
    %4467 = vmatprep.subr.bf16.mxu0 0
    %4468 = vmatpush1.bf16.msra.mxu0 0
    %4469 = vmatprep.subr.bf16.mxu0 0
    %4470 = vmatpush1.bf16.msra.mxu0 0
    %4471 = vmatprep.subr.bf16.mxu0 0
    %4472 = vmatpush1.bf16.msra.mxu0 0
    %4473 = vmatprep.subr.bf16.mxu0 0
    %4474 = vmatpush1.bf16.msra.mxu0 0
    %4475 = vmatprep.subr.bf16.mxu0 0
    %4476 = vmatpush1.bf16.msra.mxu0 0
    %4477 = vmatprep.subr.bf16.mxu0 0
    %4478 = vmatpush1.bf16.msra.mxu0 0
    %4479 = vmatprep.subr.bf16.mxu0 0
    %4480 = vmatpush1.bf16.msra.mxu0 %v4461
    %4481 = vmatprep.subr.bf16.mxu0 0
    %4482 = vmatpush1.bf16.msra.mxu0 %v4460
    %4483 = vmatprep.subr.bf16.mxu0 0
    %4484 = vmatpush2.bf16.msra.mxu0 0
    %4485 = vmatprep.subr.bf16.mxu0 0
    %4486 = vmatpush2.bf16.msra.mxu0 0
    %4487 = vmatprep.subr.bf16.mxu0 0
    %4488 = vmatpush2.bf16.msra.mxu0 0
    %4489 = vmatprep.subr.bf16.mxu0 0
    %4490 = vmatpush2.bf16.msra.mxu0 0
    %4491 = vmatprep.subr.bf16.mxu0 0
    %4492 = vmatpush2.bf16.msra.mxu0 0
    %4493 = vmatprep.subr.bf16.mxu0 0
    %4494 = vmatpush2.bf16.msra.mxu0 0
    %4495 = vmatprep.subr.bf16.mxu0 0
    %4496 = vmatpush2.bf16.msra.mxu0 0
    %4497 = vmatprep.subr.bf16.mxu0 0
    %4498 = vmatpush2.bf16.msra.mxu0 0
    %4499 = vmatprep.mubr.bf16.mxu0 0
    %4500 = vmatmul.mubr.bf16.gmra.mxu0 %v4465
    %v4501 = vpop.f32.mrf.mxu0
    %v4502 = vadd.f32 %v4451, %v4501
    %v4503 = vpop.f32.mrf.mxu0
    %v4504 = vpop.f32.mrf.mxu0
    %v4505 = vadd.f32 %v4451, %v4504
    %v4506 = vpop.f32.mrf.mxu0
    %4507 = vdwg.mxu0
    %v4508 = vpack.c.bf16 %v4505, %v4502
    %v4509 = vld [vmem:[#allocation9] sm:$0xf]
    %v4510 = vld [vmem:[#allocation9 + $0x4] sm:$0xf]
    %v4511 = vld [vmem:[#allocation9 + $0x8] sm:$0xf]
    %v4512 = vld [vmem:[#allocation9 + $0xc] sm:$0xf]
    %v4513 = vld [vmem:[#allocation9 + $0x10] sm:$0xf]
    %v4514 = vld [vmem:[#allocation9 + $0x14] sm:$0xf]
    %v4515 = vld [vmem:[#allocation9 + $0x18] sm:$0xf]
    %v4516 = vld [vmem:[#allocation9 + $0x1c] sm:$0xf]
    %v4517 = vld [vmem:[#allocation9 + $0x20] sm:$0xf]
    %v4518 = vld [vmem:[#allocation9 + $0x24] sm:$0xf]
    %v4519 = vld [vmem:[#allocation9 + $0x28] sm:$0xf]
    %v4520 = vld [vmem:[#allocation9 + $0x2c] sm:$0xf]
    %v4521 = vld [vmem:[#allocation9 + $0x30] sm:$0xf]
    %v4522 = vld [vmem:[#allocation9 + $0x34] sm:$0xf]
    %v4523 = vld [vmem:[#allocation9 + $0x38] sm:$0xf]
    %v4524 = vld [vmem:[#allocation9 + $0x3c] sm:$0xf]
    %v4525 = vlaneseq
    %v4526 = vshrl.u32 %v4525, 7
    %v4527 = vsub.s32 4, %v4526
    %v4528 = vrot.slane %v105, %v4527
    %v4545 = vunpack.c.l.b16 %v4509
    %v4546 = vunpack.c.l.b16 %v4510
    %v4547 = vunpack.c.l.b16 %v4511
    %v4548 = vunpack.c.l.b16 %v4512
    %v4549 = vunpack.c.l.b16 %v4513
    %v4550 = vunpack.c.l.b16 %v4514
    %v4551 = vunpack.c.l.b16 %v4515
    %v4552 = vunpack.c.l.b16 %v4516
    %v4553 = vunpack.c.l.b16 %v4517
    %v4554 = vunpack.c.l.b16 %v4518
    %v4555 = vunpack.c.l.b16 %v4519
    %v4556 = vunpack.c.l.b16 %v4520
    %v4557 = vunpack.c.l.b16 %v4521
    %v4558 = vunpack.c.l.b16 %v4522
    %v4559 = vunpack.c.l.b16 %v4523
    %v4560 = vunpack.c.l.b16 %v4524
    %v4561 = vpack.c.b16 %v4546, %v4545
    %v4562 = vpack.c.b16 %v4548, %v4547
    %v4563 = vpack.c.b16 %v4550, %v4549
    %v4564 = vpack.c.b16 %v4552, %v4551
    %v4565 = vpack.c.b16 %v4554, %v4553
    %v4566 = vpack.c.b16 %v4556, %v4555
    %v4567 = vpack.c.b16 %v4558, %v4557
    %v4568 = vpack.c.b16 %v4560, %v4559
    %4577 = vmatprep.subr.bf16.mxu0 0
    %4578 = vmatpush1.bf16.msra.mxu0 %v4568
    %4579 = vmatprep.subr.bf16.mxu0 0
    %4580 = vmatpush1.bf16.msra.mxu0 %v4567
    %4581 = vmatprep.subr.bf16.mxu0 0
    %4582 = vmatpush1.bf16.msra.mxu0 %v4566
    %4583 = vmatprep.subr.bf16.mxu0 0
    %4584 = vmatpush1.bf16.msra.mxu0 %v4565
    %4585 = vmatprep.subr.bf16.mxu0 0
    %4586 = vmatpush1.bf16.msra.mxu0 %v4564
    %4587 = vmatprep.subr.bf16.mxu0 0
    %4588 = vmatpush1.bf16.msra.mxu0 %v4563
    %4589 = vmatprep.subr.bf16.mxu0 0
    %4590 = vmatpush1.bf16.msra.mxu0 %v4562
    %4591 = vmatprep.subr.bf16.mxu0 0
    %4592 = vmatpush1.bf16.msra.mxu0 %v4561
    %4593 = vmatprep.subr.bf16.mxu0 0
    %4594 = vmatpush2.bf16.msra.mxu0 0
    %4595 = vmatprep.subr.bf16.mxu0 0
    %4596 = vmatpush2.bf16.msra.mxu0 0
    %4597 = vmatprep.subr.bf16.mxu0 0
    %4598 = vmatpush2.bf16.msra.mxu0 0
    %4599 = vmatprep.subr.bf16.mxu0 0
    %4600 = vmatpush2.bf16.msra.mxu0 0
    %4601 = vmatprep.subr.bf16.mxu0 0
    %4602 = vmatpush2.bf16.msra.mxu0 0
    %4603 = vmatprep.subr.bf16.mxu0 0
    %4604 = vmatpush2.bf16.msra.mxu0 0
    %4605 = vmatprep.subr.bf16.mxu0 0
    %4606 = vmatpush2.bf16.msra.mxu0 0
    %4607 = vmatprep.subr.bf16.mxu0 0
    %4608 = vmatpush2.bf16.msra.mxu0 0
    %4609 = vmatprep.mubr.bf16.mxu0 0
    %4610 = vmatmul.mubr.bf16.gmra.mxu0 %v4508
    %v4611 = vpop.f32.mrf.mxu0
    %v4612 = vadd.f32 %v4528, %v4611
    %v4613 = vpop.f32.mrf.mxu0
    %v4614 = vpop.f32.mrf.mxu0
    %v4615 = vadd.f32 %v4528, %v4614
    %v4616 = vpop.f32.mrf.mxu0
    %4617 = vdwg.mxu0
    %v4618 = vld [vmem:[#allocation9 + $0x40] sm:$0xf]
    %v4619 = vld [vmem:[#allocation9 + $0x44] sm:$0xf]
    %v4620 = vld [vmem:[#allocation9 + $0x48] sm:$0xf]
    %v4621 = vld [vmem:[#allocation9 + $0x4c] sm:$0xf]
    %v4622 = vld [vmem:[#allocation9 + $0x50] sm:$0xf]
    %v4623 = vld [vmem:[#allocation9 + $0x54] sm:$0xf]
    %v4624 = vld [vmem:[#allocation9 + $0x58] sm:$0xf]
    %v4625 = vld [vmem:[#allocation9 + $0x5c] sm:$0xf]
    %v4626 = vld [vmem:[#allocation9 + $0x60] sm:$0xf]
    %v4627 = vld [vmem:[#allocation9 + $0x64] sm:$0xf]
    %v4628 = vld [vmem:[#allocation9 + $0x68] sm:$0xf]
    %v4629 = vld [vmem:[#allocation9 + $0x6c] sm:$0xf]
    %v4630 = vld [vmem:[#allocation9 + $0x70] sm:$0xf]
    %v4631 = vld [vmem:[#allocation9 + $0x74] sm:$0xf]
    %v4632 = vld [vmem:[#allocation9 + $0x78] sm:$0xf]
    %v4633 = vld [vmem:[#allocation9 + $0x7c] sm:$0xf]
    %v4634 = vlaneseq
    %v4635 = vshrl.u32 %v4634, 7
    %v4636 = vsub.s32 5, %v4635
    %v4637 = vrot.slane %v105, %v4636
    %v4654 = vunpack.c.l.b16 %v4618
    %v4655 = vunpack.c.l.b16 %v4619
    %v4656 = vunpack.c.l.b16 %v4620
    %v4657 = vunpack.c.l.b16 %v4621
    %v4658 = vunpack.c.l.b16 %v4622
    %v4659 = vunpack.c.l.b16 %v4623
    %v4660 = vunpack.c.l.b16 %v4624
    %v4661 = vunpack.c.l.b16 %v4625
    %v4662 = vunpack.c.l.b16 %v4626
    %v4663 = vunpack.c.l.b16 %v4627
    %v4664 = vunpack.c.l.b16 %v4628
    %v4665 = vunpack.c.l.b16 %v4629
    %v4666 = vunpack.c.l.b16 %v4630
    %v4667 = vunpack.c.l.b16 %v4631
    %v4668 = vunpack.c.l.b16 %v4632
    %v4669 = vunpack.c.l.b16 %v4633
    %v4670 = vpack.c.b16 %v4655, %v4654
    %v4671 = vpack.c.b16 %v4657, %v4656
    %v4672 = vpack.c.b16 %v4659, %v4658
    %v4673 = vpack.c.b16 %v4661, %v4660
    %v4674 = vpack.c.b16 %v4663, %v4662
    %v4675 = vpack.c.b16 %v4665, %v4664
    %v4676 = vpack.c.b16 %v4667, %v4666
    %v4677 = vpack.c.b16 %v4669, %v4668
    %4686 = vmatprep.subr.bf16.mxu0 0
    %4687 = vmatpush1.bf16.msra.mxu0 %v4677
    %4688 = vmatprep.subr.bf16.mxu0 0
    %4689 = vmatpush1.bf16.msra.mxu0 %v4676
    %4690 = vmatprep.subr.bf16.mxu0 0
    %4691 = vmatpush1.bf16.msra.mxu0 %v4675
    %4692 = vmatprep.subr.bf16.mxu0 0
    %4693 = vmatpush1.bf16.msra.mxu0 %v4674
    %4694 = vmatprep.subr.bf16.mxu0 0
    %4695 = vmatpush1.bf16.msra.mxu0 %v4673
    %4696 = vmatprep.subr.bf16.mxu0 0
    %4697 = vmatpush1.bf16.msra.mxu0 %v4672
    %4698 = vmatprep.subr.bf16.mxu0 0
    %4699 = vmatpush1.bf16.msra.mxu0 %v4671
    %4700 = vmatprep.subr.bf16.mxu0 0
    %4701 = vmatpush1.bf16.msra.mxu0 %v4670
    %4702 = vmatprep.subr.bf16.mxu0 0
    %4703 = vmatpush2.bf16.msra.mxu0 0
    %4704 = vmatprep.subr.bf16.mxu0 0
    %4705 = vmatpush2.bf16.msra.mxu0 0
    %4706 = vmatprep.subr.bf16.mxu0 0
    %4707 = vmatpush2.bf16.msra.mxu0 0
    %4708 = vmatprep.subr.bf16.mxu0 0
    %4709 = vmatpush2.bf16.msra.mxu0 0
    %4710 = vmatprep.subr.bf16.mxu0 0
    %4711 = vmatpush2.bf16.msra.mxu0 0
    %4712 = vmatprep.subr.bf16.mxu0 0
    %4713 = vmatpush2.bf16.msra.mxu0 0
    %4714 = vmatprep.subr.bf16.mxu0 0
    %4715 = vmatpush2.bf16.msra.mxu0 0
    %4716 = vmatprep.subr.bf16.mxu0 0
    %4717 = vmatpush2.bf16.msra.mxu0 0
    %4718 = vmatprep.mubr.bf16.mxu0 0
    %4719 = vmatmul.mubr.bf16.gmra.mxu0 %v4508
    %v4720 = vpop.f32.mrf.mxu0
    %v4721 = vadd.f32 %v4637, %v4720
    %v4722 = vpop.f32.mrf.mxu0
    %v4723 = vpop.f32.mrf.mxu0
    %v4724 = vadd.f32 %v4637, %v4723
    %v4725 = vpop.f32.mrf.mxu0
    %4726 = vdwg.mxu0
    %v4727 = vld [vmem:[%s13] sm:$0xff]
    %v4728 = vld [vmem:[%s13 + $0x8] sm:$0xf]
    %4730 = vset.pattern.permute.xlu0 0
    %4731 = vperm.xlu0 %4730, %v4727
    %v4732 = vpop.permute.xlu0 %4731
    %4735 = vset.pattern.permute.xlu0 0
    %4736 = vperm.xlu0 %4735, %v4728
    %v4737 = vpop.permute.xlu0 %4736
    %v4739 = vmul.f32 %v4732, %v4612
    %v4740 = vmul.f32 %v4737, %v4615
    %v4741 = vsub.f32 1.0, %v4727
    %v4742 = vsub.f32 1.0, %v4728
    %4744 = vset.pattern.permute.xlu0 0
    %4745 = vperm.xlu0 %4744, %v4741
    %v4746 = vpop.permute.xlu0 %4745
    %4749 = vset.pattern.permute.xlu0 0
    %4750 = vperm.xlu0 %4749, %v4742
    %v4751 = vpop.permute.xlu0 %4750
    %v4753 = vmul.f32 %v4746, %v4721
    %v4754 = vmul.f32 %v4751, %v4724
    %v4755 = vadd.f32 %v4739, %v4753
    %v4756 = vadd.f32 %v4740, %v4754
    %4757 = vst [vmem:[%s15] sm:$0xff] %v4755
    %4758 = vst [vmem:[%s15 + $0x8] sm:$0xf] %v4756
    // Predicated region
    $region74: #{decoder_forward.1} parent=1 // pred_check
      _
    $region75: #{decoder_forward.1} parent=1 // pred_check_branch
      %4760 = sbr.rel (0) target = $region77
    $region76: #{decoder_forward.1} parent=1 // pred_region
      _
    $region77: #{decoder_forward.1} parent=1 // pred_fallthru
      _
    // Predicated region
    $region78: #{decoder_forward.1} parent=1 // pred_check
      _
    $region79: #{decoder_forward.1} parent=1 // pred_check_branch
      %4762 = sbr.rel (0) target = $region81
    $region80: #{decoder_forward.1} parent=1 // pred_region
      _
    $region81: #{decoder_forward.1} parent=1 // pred_fallthru
      _
    // Predicated region
    $region82: #{decoder_forward.1} parent=1 // pred_check
      _
    $region83: #{decoder_forward.1} parent=1 // pred_check_branch
      %4764 = sbr.rel (0) target = $region85
    $region84: #{decoder_forward.1} parent=1 // pred_region
      _
    $region85: #{decoder_forward.1} parent=1 // pred_fallthru
      _
    // Predicated region
    $region86: #{decoder_forward.1} parent=1 // pred_check
      _
    $region87: #{decoder_forward.1} parent=1 // pred_check_branch
      %4766 = sbr.rel (0) target = $region89
    $region88: #{decoder_forward.1} parent=1 // pred_region
      _
    $region89: #{decoder_forward.1} parent=1 // pred_fallthru
      _
    %4767 = vsyncpa [#allocation6], 1
    %4768 = vsyncpa [#allocation8], 1
    %4769 = vsyncpa [#allocation11], 1

</llo_original>
